<compile_context>
chip_gen: v5e
topology: v5e:2x2
jax: 0.10.0
libtpu: 0.0.40
codegen_flags: <defaults>
</compile_context>

<pallas_src>
import numpy as np
import jax
import jax.numpy as jnp
from jax.experimental import pallas as pl
from jax.experimental.pallas import tpu as pltpu


# ----------------------------------------------------------------------------
# Parameter-only glue math: sparsemax projection onto the simplex
# ----------------------------------------------------------------------------
def sparsemax(z, axis=-1):
    z = jnp.moveaxis(z, axis, -1)
    K = z.shape[-1]
    z_sorted = jnp.flip(jnp.sort(z, axis=-1), axis=-1)          # descending
    z_cumsum = jnp.cumsum(z_sorted, axis=-1)
    k = jnp.arange(1, K + 1, dtype=z.dtype)
    support = (1.0 + k * z_sorted) > z_cumsum
    k_sup = jnp.sum(support.astype(jnp.int32), axis=-1, keepdims=True)
    tau_sum = jnp.take_along_axis(z_cumsum, k_sup - 1, axis=-1)
    tau = (tau_sum - 1.0) / k_sup.astype(z.dtype)
    out = jnp.maximum(z - tau, 0.0)
    return jnp.moveaxis(out, -1, axis)


# ----------------------------------------------------------------------------
# Static plan of which activation rows feed each layer (handles max_features)
# ----------------------------------------------------------------------------
def dense_block_row_plan(J0, N, L, max_features):
    """Segments: 0 = original x (J0 rows), 1+l = layer-l output h_l (N rows).
    Returns (per_layer_pieces, final_pieces); a piece is (segment, row0, row1)
    and mirrors exactly the torch forward's head+tail concat bookkeeping."""
    rows = [(0, 0, J0)]
    per_layer = []
    for l in range(L):
        if max_features is not None:
            total = sum(r1 - r0 for _, r0, r1 in rows)
            tail = min(max_features, total) - J0
            if tail > 0:
                head, need = [], J0
                for seg, r0, r1 in rows:
                    take = min(need, r1 - r0)
                    if take > 0:
                        head.append((seg, r0, r0 + take))
                        need -= take
                    if need == 0:
                        break
                back, need = [], tail
                for seg, r0, r1 in reversed(rows):
                    take = min(need, r1 - r0)
                    if take > 0:
                        back.append((seg, r1 - take, r1))
                        need -= take
                    if need == 0:
                        break
                rows = head + list(reversed(back))
        per_layer.append(tuple(rows))
        rows = rows + [(1 + l, 0, N)]
    return tuple(per_layer), tuple(rows)


# ----------------------------------------------------------------------------
# Tiling / VMEM budgeting
# ----------------------------------------------------------------------------
def choose_tile_bd(BD, D, max_lanes=2048, min_lanes=1024, min_grid=2):
    """Batch-lane tile width: a multiple of 128 and of D that divides B*D.
    Prefer >= min_lanes (wide, lane-dense stores; fewer grid steps) while still
    leaving >= min_grid steps so both v7x TensorCores get work; otherwise take
    the widest legal tile."""
    cands = [t for t in range(128, min(BD, max_lanes) + 1, 128)
             if BD % t == 0 and t % D == 0]
    if not cands:
        # TODO(synk): lane width not a multiple of 128 -> masked partial stores.
        return BD
    pref = [t for t in cands if t >= min_lanes and BD // t >= min_grid]
    return max(pref) if pref else max(cands)


def _vmem_limit_bytes(meta):
    f32 = 4
    J0, D, L, T, N, C = (meta[k] for k in ("J0", "D", "L", "T", "N", "C"))
    tbd = meta["tile_bd"]

    def pad2(r, c):  # (8,128)-padded f32 2-D footprint in bytes
        return -(-r // 8) * 8 * -(-c // 128) * 128 * f32

    est = 2 * pad2(J0, tbd)                    # x tile, double-buffered
    est += 2 * L * pad2(N, tbd)                # output tile, double-buffered
    for pieces in meta["pieces"]:
        est += 2 * sum(T * pad2(N, r1 - r0) for _, r0, r1 in pieces)       # fs
        est += 2 * (T * pad2(N, tbd) + T * pad2(N, 1) + N * pad2(C, tbd))  # es/thr/resp
    est += 4 * T * pad2(C, 1)                  # bin-code constants (a, b)
    # live intermediates: rw/bm, response value, per-depth rows, carried segments
    est += 3 * N * pad2(C, tbd) + 6 * pad2(N, tbd) + pad2(J0 + L * N, tbd)
    # 2x headroom for compiler scratch; stay well under a v7x core's 64 MiB.
    return int(min(max(2 * est, 16 * 1024 * 1024), 48 * 1024 * 1024))


# ----------------------------------------------------------------------------
# One-time parameter preparation (hoisted out of the forward)
# ----------------------------------------------------------------------------
def prepare_dense_block(layer_params, B, J0, D, max_features=None,
                        max_lanes=2048, min_lanes=1024, min_grid=2):
    """Exact algebraic precompute of kernel-ready parameters, run once per
    weight update.  Folds: sparsemax of both selector logits, sum over j of the
    embedding selectors (valid: the ref contraction 'bntd,ntjd->bntd' sums es
    over j independently of the feature contraction), exp(-log_temperature)
    into selectors/thresholds, response summed over tree_dim, bin codes to
    (a, b) with bin_match = a + b*sparsemoid(tl), and lane tiling to the chosen
    batch tile."""
    L = len(layer_params)
    N, T = layer_params[0]["thr"].shape
    C = layer_params[0]["codes"].shape[1]
    for p in layer_params:
        assert p["thr"].shape == (N, T) and p["codes"].shape[1] == C

    BD = B * D
    tile_bd = choose_tile_bd(BD, D, max_lanes, min_lanes, min_grid)
    tile_b = tile_bd // D
    pieces, final_rows = dense_block_row_plan(J0, N, L, max_features)

    codes0 = layer_params[0]["codes"][..., 0][..., None].astype(jnp.float32)  # [T, C, 1]
    acode = codes0
    bcode = 1.0 - 2.0 * codes0

    arrays = [acode, bcode]
    for l, p in enumerate(layer_params):
        fs = sparsemax(p["fsl"], axis=-1)                          # [N, T, J_eff]
        invt = jnp.exp(-p["logt"])                                 # [N, T]
        es_sum = jnp.sum(sparsemax(p["esl"], axis=-1), axis=2)     # [N, T, D]
        es_tnd = jnp.transpose(es_sum * invt[..., None], (1, 0, 2))        # [T, N, D]
        es_tiled = jnp.tile(es_tnd, (1, 1, tile_b))                # [T, N, tile_bd]
        thr_tn1 = jnp.transpose(p["thr"] * invt, (1, 0))[..., None]        # [T, N, 1]
        resp_ncd = jnp.transpose(jnp.sum(p["resp"], axis=1), (0, 2, 1))    # [N, C, D]
        resp_tiled = jnp.tile(resp_ncd, (1, 1, tile_b))            # [N, C, tile_bd]

        fs_tnj = jnp.transpose(fs, (1, 0, 2)).astype(jnp.float32)  # [T, N, J_eff]
        col = 0
        for _, r0, r1 in pieces[l]:                                # split per segment
            arrays.append(fs_tnj[:, :, col:col + (r1 - r0)])
            col += r1 - r0
        assert col == fs_tnj.shape[-1], "layer input plan mismatch vs. fs width"
        arrays += [es_tiled, thr_tn1, resp_tiled]

    meta = dict(L=L, T=T, N=N, C=C, J0=J0, D=D, B=B,
                tile_bd=tile_bd, pieces=pieces, final_rows=final_rows)
    return tuple(arrays), meta


# ----------------------------------------------------------------------------
# Fused DenseBlock kernel (all layers, one batch-lane tile per grid step)
# ----------------------------------------------------------------------------
def _make_dense_block_kernel(meta):
    L, T, N, C, J0 = meta["L"], meta["T"], meta["N"], meta["C"], meta["J0"]
    pieces_per_layer = meta["pieces"]
    seg_rows = [J0] + [N] * L

    def kernel(*refs):
        it = iter(refs)
        x_ref = next(it)                      # [J0, BD]   f32  (lanes = batch*embed)
        acode_ref = next(it)                  # [T, C, 1]  f32  bin code
        bcode_ref = next(it)                  # [T, C, 1]  f32  1 - 2*code
        layers = []
        for pieces in pieces_per_layer:
            fs_refs = [next(it) for _ in pieces]   # each [T, N, width] f32
            es_ref = next(it)                 # [T, N, BD] f32  sum_j(es)*exp(-logt)
            thr_ref = next(it)                # [T, N, 1]  f32  thr*exp(-logt)
            resp_ref = next(it)               # [N, C, BD] f32  sum_tree_dim(resp)
            layers.append((pieces, fs_refs, es_ref, thr_ref, resp_ref))
        out_ref = next(it)                    # [L, N, BD] f32

        acode = acode_ref[...]
        bcode = bcode_ref[...]
        # Activation segments stay on-chip across layers (no HBM round trip,
        # no concatenation): segment 0 = x, segment 1+l = layer l's output.
        segments = [x_ref[...]]

        for l, (pieces, fs_refs, es_ref, thr_ref, resp_ref) in enumerate(layers):
            resp = resp_ref[...]                                   # [N, C, BD]
            rw = None
            for t in range(T):
                # Feature selection for depth level t: sum of per-segment MXU
                # dots (per-segment splitting avoids any in-kernel concat).
                sf_t = None
                for (seg, r0, r1), fs_ref in zip(pieces, fs_refs):
                    rhs = segments[seg]
                    if r0 != 0 or r1 != seg_rows[seg]:
                        rhs = rhs[r0:r1, :]   # static slice (max_features trim)
                    part = jnp.dot(fs_ref[t], rhs,
                                   preferred_element_type=jnp.float32)
                    sf_t = part if sf_t is None else sf_t + part   # [N, BD]
                # Thresholding (temperature already folded into es/thr) and
                # sparsemoid; per-depth slices keep the live f32 set small.
                tl_t = sf_t * es_ref[t] - thr_ref[t]               # [N, BD]
                bp_t = jnp.clip(0.5 * tl_t + 0.5, 0.0, 1.0)        # sparsemoid
                # Fused bin match: bm = code0 + (1 - 2*code0)*sparsemoid(tl);
                # response folded into the first depth product.
                bm_t = acode[t][None] + bcode[t][None] * bp_t[:, None, :]  # [N, C, BD]
                rw = resp * bm_t if rw is None else rw * bm_t
            h = jnp.sum(rw, axis=1)                                # [N, BD]
            out_ref[l] = h                                         # lane-dense store
            segments.append(h)

    return kernel


def build_dense_block_forward(meta):
    L, T, N, C = meta["L"], meta["T"], meta["N"], meta["C"]
    J0, D, B = meta["J0"], meta["D"], meta["B"]
    tile_bd = meta["tile_bd"]
    BD = B * D
    pieces_per_layer = meta["pieces"]
    final_rows = meta["final_rows"]

    in_specs = [
        pl.BlockSpec((J0, tile_bd), lambda g: (0, g)),        # x: tiled over lanes
        pl.BlockSpec((T, C, 1), lambda g: (0, 0, 0)),         # bin code a
        pl.BlockSpec((T, C, 1), lambda g: (0, 0, 0)),         # bin code b
    ]
    # TODO(synk): the constant-index param specs below could be single-buffered
    # (pipeline_mode=pl.Buffered(1)) to halve their VMEM at production dims;
    # left at the default here (<1 MiB total) for compile safety.
    for pieces in pieces_per_layer:
        for _, r0, r1 in pieces:
            in_specs.append(pl.BlockSpec((T, N, r1 - r0), lambda g: (0, 0, 0)))
        in_specs.append(pl.BlockSpec((T, N, tile_bd), lambda g: (0, 0, 0)))
        in_specs.append(pl.BlockSpec((T, N, 1), lambda g: (0, 0, 0)))
        in_specs.append(pl.BlockSpec((N, C, tile_bd), lambda g: (0, 0, 0)))

    call = pl.pallas_call(
        _make_dense_block_kernel(meta),
        out_shape=jax.ShapeDtypeStruct((L, N, BD), jnp.float32),
        grid=(BD // tile_bd,),
        in_specs=in_specs,
        out_specs=pl.BlockSpec((L, N, tile_bd), lambda g: (0, 0, g)),
        compiler_params=pltpu.CompilerParams(
            dimension_semantics=("parallel",),
            vmem_limit_bytes=_vmem_limit_bytes(meta)),
    )

    @jax.jit
    def forward(x, prep_arrays):
        assert x.shape == (B, J0, D)
        x_flat = jnp.transpose(x, (1, 0, 2)).reshape(J0, BD)       # [J0, B*D] f32
        h_all = call(x_flat, *prep_arrays)                         # [L, N, B*D] f32
        h_b = jnp.transpose(h_all.reshape(L, N, B, D), (2, 0, 1, 3))  # [B, L, N, D]
        segs = [x] + [h_b[:, l] for l in range(L)]
        # Single O(L) assembly of the final feature order (handles the
        # max_features trimming history recorded in final_rows).
        return jnp.concatenate([segs[s][:, r0:r1] for s, r0, r1 in final_rows],
                               axis=1)

    return forward


# ----------------------------------------------------------------------------
# Pure-JAX reference (direct transcription of the PyTorch forward, all f32)
# ----------------------------------------------------------------------------
def odste_ref(x, p):
    hi = jax.lax.Precision.HIGHEST
    fs = sparsemax(p["fsl"], axis=-1)
    es = sparsemax(p["esl"], axis=-1)
    sf = jnp.einsum("bjd,ntj->bntd", x, fs, precision=hi)
    se = jnp.einsum("bntd,ntjd->bntd", sf, es, precision=hi)
    tl = (se - p["thr"][None, :, :, None]) * jnp.exp(-p["logt"])[None, :, :, None]
    tl2 = jnp.stack([-tl, tl], axis=-1)
    bins = jnp.clip(0.5 * tl2 + 0.5, 0.0, 1.0)                     # sparsemoid
    bm = jnp.einsum("bntds,tcs->bntdc", bins, p["codes"], precision=hi)
    rw = jnp.prod(bm, axis=2)
    return jnp.einsum("bnds,ncds->bnd", rw, p["resp"], precision=hi)


def dense_block_forward_ref(x, layer_params, max_features=None):
    initial_features = x.shape[1]
    for p in layer_params:
        if max_features is not None:
            tail = min(max_features, x.shape[1]) - initial_features
            if tail > 0:
                x = jnp.concatenate(
                    [x[:, :initial_features, :], x[:, -tail:, :]], axis=1)
        h = odste_ref(x, p)
        x = jnp.concatenate([x, h], axis=1)
    return x


# ----------------------------------------------------------------------------
# Deterministic parameter construction (shapes from ODSTE.__init__)
# ----------------------------------------------------------------------------
def make_odste_params(key, in_features, embed_dim, num_trees, depth, tree_dim):
    ks = jax.random.split(key, 5)
    resp = jax.random.normal(ks[0], (num_trees, tree_dim, embed_dim, 2 ** depth),
                             jnp.float32)                          # nn.init.normal_
    fsl = jax.random.uniform(ks[1], (num_trees, depth, in_features),
                             jnp.float32)                          # nn.init.uniform_
    esl = jax.random.normal(ks[2], (num_trees, depth, in_features, embed_dim),
                            jnp.float32)                           # torch.randn
    thr = jax.random.normal(ks[3], (num_trees, depth), jnp.float32)
    logt = jax.random.normal(ks[4], (num_trees, depth), jnp.float32)

    indices = jnp.arange(2 ** depth)
    offsets = 2 ** jnp.arange(depth)
    bin_codes = ((indices[None, :] // offsets[:, None]) % 2).astype(jnp.float32)
    codes = jnp.stack([bin_codes, 1.0 - bin_codes], axis=-1)       # [T, 2^T, 2]
    return dict(resp=resp, fsl=fsl, esl=esl, thr=thr, logt=logt, codes=codes)


if __name__ == "__main__":
    # DenseBlock(input_dim=6, embed_dim=8, layer_dim=4, num_layers=2,
    #            tree_dim=1, max_features=None, depth=3).
    # Batch chosen so the lane grid is (2,) with 1024-lane tiles: wide,
    # lane-dense stores and one grid step per v7x TensorCore.
    B, J, D = 256, 6, 8
    layer_dim, num_layers, depth, tree_dim = 4, 2, 3, 1
    max_features = None

    key = jax.random.PRNGKey(0)
    keys = jax.random.split(key, num_layers + 1)
    x = jax.random.normal(keys[0], (B, J, D), jnp.float32)

    layer_params = []
    in_f = J
    for l in range(num_layers):
        layer_params.append(
            make_odste_params(keys[l + 1], in_f, D, layer_dim, depth, tree_dim))
        in_f = min(in_f + layer_dim * tree_dim,
                   max_features if max_features is not None else 10 ** 9)

    # Parameter prep is hoisted out of the forward: run once per weight update.
    prep_arrays, meta = prepare_dense_block(
        layer_params, B=B, J0=J, D=D, max_features=max_features)
    forward = build_dense_block_forward(meta)

    out_pallas = jax.block_until_ready(forward(x, prep_arrays))
    out_ref = jax.block_until_ready(
        dense_block_forward_ref(x, layer_params, max_features=max_features))

    assert out_pallas.shape == (B, J + num_layers * layer_dim * tree_dim, D)
    # Tolerance absorbs f32-matmul pass differences between the Mosaic MXU dot
    # and XLA's HIGHEST-precision einsum; typical observed error is ~1e-6.
    np.testing.assert_allclose(np.asarray(out_pallas), np.asarray(out_ref),
                               rtol=1e-2, atol=1e-2)
    print("KERNEL_OK")
</pallas_src>

<mosaic_0001>
module attributes {stable_mosaic.version = 11 : i64} {
  func.func @kernel(%arg0: i32, %arg1: memref<6x1024xf32, #tpu.memory_space<vmem>>, %arg2: memref<3x8x1xf32, #tpu.memory_space<vmem>>, %arg3: memref<3x8x1xf32, #tpu.memory_space<vmem>>, %arg4: memref<3x4x6xf32, #tpu.memory_space<vmem>>, %arg5: memref<3x4x1024xf32, #tpu.memory_space<vmem>>, %arg6: memref<3x4x1xf32, #tpu.memory_space<vmem>>, %arg7: memref<4x8x1024xf32, #tpu.memory_space<vmem>>, %arg8: memref<3x4x6xf32, #tpu.memory_space<vmem>>, %arg9: memref<3x4x4xf32, #tpu.memory_space<vmem>>, %arg10: memref<3x4x1024xf32, #tpu.memory_space<vmem>>, %arg11: memref<3x4x1xf32, #tpu.memory_space<vmem>>, %arg12: memref<4x8x1024xf32, #tpu.memory_space<vmem>>, %arg13: memref<2x4x1024xf32, #tpu.memory_space<vmem>>) attributes {dimension_semantics = [#tpu.dimension_semantics<parallel>], iteration_bounds = array<i64: 2>, scalar_prefetch = 0 : i64, scratch_operands = 0 : i64, tpu.core_type = #tpu.core_type<tc>, window_params = [{transform_indices = @transform_0, window_bounds = array<i64: 6, 1024>}, {pipeline_mode = #tpu.pipeline_mode<synchronous>, transform_indices = @transform_1, window_bounds = array<i64: 3, 8, 1>}, {pipeline_mode = #tpu.pipeline_mode<synchronous>, transform_indices = @transform_2, window_bounds = array<i64: 3, 8, 1>}, {pipeline_mode = #tpu.pipeline_mode<synchronous>, transform_indices = @transform_3, window_bounds = array<i64: 3, 4, 6>}, {pipeline_mode = #tpu.pipeline_mode<synchronous>, transform_indices = @transform_4, window_bounds = array<i64: 3, 4, 1024>}, {pipeline_mode = #tpu.pipeline_mode<synchronous>, transform_indices = @transform_5, window_bounds = array<i64: 3, 4, 1>}, {pipeline_mode = #tpu.pipeline_mode<synchronous>, transform_indices = @transform_6, window_bounds = array<i64: 4, 8, 1024>}, {pipeline_mode = #tpu.pipeline_mode<synchronous>, transform_indices = @transform_7, window_bounds = array<i64: 3, 4, 6>}, {pipeline_mode = #tpu.pipeline_mode<synchronous>, transform_indices = @transform_8, window_bounds = array<i64: 3, 4, 4>}, {pipeline_mode = #tpu.pipeline_mode<synchronous>, transform_indices = @transform_9, window_bounds = array<i64: 3, 4, 1024>}, {pipeline_mode = #tpu.pipeline_mode<synchronous>, transform_indices = @transform_10, window_bounds = array<i64: 3, 4, 1>}, {pipeline_mode = #tpu.pipeline_mode<synchronous>, transform_indices = @transform_11, window_bounds = array<i64: 4, 8, 1024>}, {transform_indices = @transform_12, window_bounds = array<i64: 2, 4, 1024>}]} {
    %c0 = arith.constant 0 : index
    %c0_0 = arith.constant 0 : index
    %c0_1 = arith.constant 0 : index
    %0 = vector.load %arg2[%c0, %c0_0, %c0_1] : memref<3x8x1xf32, #tpu.memory_space<vmem>>, vector<3x8x1xf32>
    %c0_2 = arith.constant 0 : index
    %c0_3 = arith.constant 0 : index
    %c0_4 = arith.constant 0 : index
    %1 = vector.load %arg3[%c0_2, %c0_3, %c0_4] : memref<3x8x1xf32, #tpu.memory_space<vmem>>, vector<3x8x1xf32>
    %c0_5 = arith.constant 0 : index
    %c0_6 = arith.constant 0 : index
    %2 = vector.load %arg1[%c0_5, %c0_6] : memref<6x1024xf32, #tpu.memory_space<vmem>>, vector<6x1024xf32>
    %c0_7 = arith.constant 0 : index
    %c0_8 = arith.constant 0 : index
    %c0_9 = arith.constant 0 : index
    %3 = vector.load %arg7[%c0_7, %c0_8, %c0_9] : memref<4x8x1024xf32, #tpu.memory_space<vmem>>, vector<4x8x1024xf32>
    %c0_10 = arith.constant 0 : index
    %c0_11 = arith.constant 0 : index
    %c0_12 = arith.constant 0 : index
    %4 = vector.load %arg4[%c0_10, %c0_11, %c0_12] : memref<3x4x6xf32, #tpu.memory_space<vmem>>, vector<1x4x6xf32>
    %5 = vector.shape_cast %4 : vector<1x4x6xf32> to vector<4x6xf32>
    %cst = arith.constant dense<0.000000e+00> : vector<4x1024xf32>
    %6 = tpu.matmul %5, %2, %cst {dimension_numbers = #tpu.dot_dimension_numbers<[1], [0], [0], [1], [0, 0, 1, 1], [], []>} : vector<4x6xf32>, vector<6x1024xf32>, vector<4x1024xf32> -> vector<4x1024xf32>
    %c0_13 = arith.constant 0 : index
    %c0_14 = arith.constant 0 : index
    %c0_15 = arith.constant 0 : index
    %7 = vector.load %arg5[%c0_13, %c0_14, %c0_15] : memref<3x4x1024xf32, #tpu.memory_space<vmem>>, vector<1x4x1024xf32>
    %8 = vector.shape_cast %7 : vector<1x4x1024xf32> to vector<4x1024xf32>
    %9 = arith.mulf %6, %8 : vector<4x1024xf32>
    %c0_16 = arith.constant 0 : index
    %c0_17 = arith.constant 0 : index
    %c0_18 = arith.constant 0 : index
    %10 = vector.load %arg6[%c0_16, %c0_17, %c0_18] : memref<3x4x1xf32, #tpu.memory_space<vmem>>, vector<1x4x1xf32>
    %11 = vector.shape_cast %10 : vector<1x4x1xf32> to vector<4x1xf32>
    %12 = vector.broadcast %11 : vector<4x1xf32> to vector<4x1024xf32>
    %13 = arith.subf %9, %12 : vector<4x1024xf32>
    %cst_19 = arith.constant 5.000000e-01 : f32
    %14 = vector.broadcast %cst_19 : f32 to vector<4x1024xf32>
    %15 = arith.mulf %14, %13 : vector<4x1024xf32>
    %cst_20 = arith.constant 5.000000e-01 : f32
    %16 = vector.broadcast %cst_20 : f32 to vector<4x1024xf32>
    %17 = arith.addf %15, %16 : vector<4x1024xf32>
    %cst_21 = arith.constant 0.000000e+00 : f32
    %cst_22 = arith.constant 1.000000e+00 : f32
    %18 = vector.broadcast %cst_21 : f32 to vector<4x1024xf32>
    %19 = arith.maximumf %18, %17 : vector<4x1024xf32>
    %20 = vector.broadcast %cst_22 : f32 to vector<4x1024xf32>
    %21 = arith.minimumf %20, %19 : vector<4x1024xf32>
    %22 = vector.extract_strided_slice %0 {offsets = [0, 0, 0], sizes = [1, 8, 1], strides = [1, 1, 1]} : vector<3x8x1xf32> to vector<1x8x1xf32>
    %23 = vector.shape_cast %22 : vector<1x8x1xf32> to vector<8x1xf32>
    %24 = vector.shape_cast %23 : vector<8x1xf32> to vector<1x8x1xf32>
    %25 = vector.extract_strided_slice %1 {offsets = [0, 0, 0], sizes = [1, 8, 1], strides = [1, 1, 1]} : vector<3x8x1xf32> to vector<1x8x1xf32>
    %26 = vector.shape_cast %25 : vector<1x8x1xf32> to vector<8x1xf32>
    %27 = vector.shape_cast %26 : vector<8x1xf32> to vector<1x8x1xf32>
    %28 = vector.shape_cast %21 : vector<4x1024xf32> to vector<4x1x1024xf32>
    %29 = vector.broadcast %27 : vector<1x8x1xf32> to vector<4x8x1024xf32>
    %30 = vector.broadcast %28 : vector<4x1x1024xf32> to vector<4x8x1024xf32>
    %31 = arith.mulf %29, %30 : vector<4x8x1024xf32>
    %32 = vector.broadcast %24 : vector<1x8x1xf32> to vector<4x8x1024xf32>
    %33 = arith.addf %32, %31 : vector<4x8x1024xf32>
    %34 = arith.mulf %3, %33 : vector<4x8x1024xf32>
    %c1 = arith.constant 1 : index
    %c0_23 = arith.constant 0 : index
    %c0_24 = arith.constant 0 : index
    %35 = vector.load %arg4[%c1, %c0_23, %c0_24] : memref<3x4x6xf32, #tpu.memory_space<vmem>>, vector<1x4x6xf32>
    %36 = vector.shape_cast %35 : vector<1x4x6xf32> to vector<4x6xf32>
    %cst_25 = arith.constant dense<0.000000e+00> : vector<4x1024xf32>
    %37 = tpu.matmul %36, %2, %cst_25 {dimension_numbers = #tpu.dot_dimension_numbers<[1], [0], [0], [1], [0, 0, 1, 1], [], []>} : vector<4x6xf32>, vector<6x1024xf32>, vector<4x1024xf32> -> vector<4x1024xf32>
    %c1_26 = arith.constant 1 : index
    %c0_27 = arith.constant 0 : index
    %c0_28 = arith.constant 0 : index
    %38 = vector.load %arg5[%c1_26, %c0_27, %c0_28] : memref<3x4x1024xf32, #tpu.memory_space<vmem>>, vector<1x4x1024xf32>
    %39 = vector.shape_cast %38 : vector<1x4x1024xf32> to vector<4x1024xf32>
    %40 = arith.mulf %37, %39 : vector<4x1024xf32>
    %c1_29 = arith.constant 1 : index
    %c0_30 = arith.constant 0 : index
    %c0_31 = arith.constant 0 : index
    %41 = vector.load %arg6[%c1_29, %c0_30, %c0_31] : memref<3x4x1xf32, #tpu.memory_space<vmem>>, vector<1x4x1xf32>
    %42 = vector.shape_cast %41 : vector<1x4x1xf32> to vector<4x1xf32>
    %43 = vector.broadcast %42 : vector<4x1xf32> to vector<4x1024xf32>
    %44 = arith.subf %40, %43 : vector<4x1024xf32>
    %cst_32 = arith.constant 5.000000e-01 : f32
    %45 = vector.broadcast %cst_32 : f32 to vector<4x1024xf32>
    %46 = arith.mulf %45, %44 : vector<4x1024xf32>
    %cst_33 = arith.constant 5.000000e-01 : f32
    %47 = vector.broadcast %cst_33 : f32 to vector<4x1024xf32>
    %48 = arith.addf %46, %47 : vector<4x1024xf32>
    %cst_34 = arith.constant 0.000000e+00 : f32
    %cst_35 = arith.constant 1.000000e+00 : f32
    %49 = vector.broadcast %cst_34 : f32 to vector<4x1024xf32>
    %50 = arith.maximumf %49, %48 : vector<4x1024xf32>
    %51 = vector.broadcast %cst_35 : f32 to vector<4x1024xf32>
    %52 = arith.minimumf %51, %50 : vector<4x1024xf32>
    %53 = vector.extract_strided_slice %0 {offsets = [1, 0, 0], sizes = [1, 8, 1], strides = [1, 1, 1]} : vector<3x8x1xf32> to vector<1x8x1xf32>
    %54 = vector.shape_cast %53 : vector<1x8x1xf32> to vector<8x1xf32>
    %55 = vector.shape_cast %54 : vector<8x1xf32> to vector<1x8x1xf32>
    %56 = vector.extract_strided_slice %1 {offsets = [1, 0, 0], sizes = [1, 8, 1], strides = [1, 1, 1]} : vector<3x8x1xf32> to vector<1x8x1xf32>
    %57 = vector.shape_cast %56 : vector<1x8x1xf32> to vector<8x1xf32>
    %58 = vector.shape_cast %57 : vector<8x1xf32> to vector<1x8x1xf32>
    %59 = vector.shape_cast %52 : vector<4x1024xf32> to vector<4x1x1024xf32>
    %60 = vector.broadcast %58 : vector<1x8x1xf32> to vector<4x8x1024xf32>
    %61 = vector.broadcast %59 : vector<4x1x1024xf32> to vector<4x8x1024xf32>
    %62 = arith.mulf %60, %61 : vector<4x8x1024xf32>
    %63 = vector.broadcast %55 : vector<1x8x1xf32> to vector<4x8x1024xf32>
    %64 = arith.addf %63, %62 : vector<4x8x1024xf32>
    %65 = arith.mulf %34, %64 : vector<4x8x1024xf32>
    %c2 = arith.constant 2 : index
    %c0_36 = arith.constant 0 : index
    %c0_37 = arith.constant 0 : index
    %66 = vector.load %arg4[%c2, %c0_36, %c0_37] : memref<3x4x6xf32, #tpu.memory_space<vmem>>, vector<1x4x6xf32>
    %67 = vector.shape_cast %66 : vector<1x4x6xf32> to vector<4x6xf32>
    %cst_38 = arith.constant dense<0.000000e+00> : vector<4x1024xf32>
    %68 = tpu.matmul %67, %2, %cst_38 {dimension_numbers = #tpu.dot_dimension_numbers<[1], [0], [0], [1], [0, 0, 1, 1], [], []>} : vector<4x6xf32>, vector<6x1024xf32>, vector<4x1024xf32> -> vector<4x1024xf32>
    %c2_39 = arith.constant 2 : index
    %c0_40 = arith.constant 0 : index
    %c0_41 = arith.constant 0 : index
    %69 = vector.load %arg5[%c2_39, %c0_40, %c0_41] : memref<3x4x1024xf32, #tpu.memory_space<vmem>>, vector<1x4x1024xf32>
    %70 = vector.shape_cast %69 : vector<1x4x1024xf32> to vector<4x1024xf32>
    %71 = arith.mulf %68, %70 : vector<4x1024xf32>
    %c2_42 = arith.constant 2 : index
    %c0_43 = arith.constant 0 : index
    %c0_44 = arith.constant 0 : index
    %72 = vector.load %arg6[%c2_42, %c0_43, %c0_44] : memref<3x4x1xf32, #tpu.memory_space<vmem>>, vector<1x4x1xf32>
    %73 = vector.shape_cast %72 : vector<1x4x1xf32> to vector<4x1xf32>
    %74 = vector.broadcast %73 : vector<4x1xf32> to vector<4x1024xf32>
    %75 = arith.subf %71, %74 : vector<4x1024xf32>
    %cst_45 = arith.constant 5.000000e-01 : f32
    %76 = vector.broadcast %cst_45 : f32 to vector<4x1024xf32>
    %77 = arith.mulf %76, %75 : vector<4x1024xf32>
    %cst_46 = arith.constant 5.000000e-01 : f32
    %78 = vector.broadcast %cst_46 : f32 to vector<4x1024xf32>
    %79 = arith.addf %77, %78 : vector<4x1024xf32>
    %cst_47 = arith.constant 0.000000e+00 : f32
    %cst_48 = arith.constant 1.000000e+00 : f32
    %80 = vector.broadcast %cst_47 : f32 to vector<4x1024xf32>
    %81 = arith.maximumf %80, %79 : vector<4x1024xf32>
    %82 = vector.broadcast %cst_48 : f32 to vector<4x1024xf32>
    %83 = arith.minimumf %82, %81 : vector<4x1024xf32>
    %84 = vector.extract_strided_slice %0 {offsets = [2, 0, 0], sizes = [1, 8, 1], strides = [1, 1, 1]} : vector<3x8x1xf32> to vector<1x8x1xf32>
    %85 = vector.shape_cast %84 : vector<1x8x1xf32> to vector<8x1xf32>
    %86 = vector.shape_cast %85 : vector<8x1xf32> to vector<1x8x1xf32>
    %87 = vector.extract_strided_slice %1 {offsets = [2, 0, 0], sizes = [1, 8, 1], strides = [1, 1, 1]} : vector<3x8x1xf32> to vector<1x8x1xf32>
    %88 = vector.shape_cast %87 : vector<1x8x1xf32> to vector<8x1xf32>
    %89 = vector.shape_cast %88 : vector<8x1xf32> to vector<1x8x1xf32>
    %90 = vector.shape_cast %83 : vector<4x1024xf32> to vector<4x1x1024xf32>
    %91 = vector.broadcast %89 : vector<1x8x1xf32> to vector<4x8x1024xf32>
    %92 = vector.broadcast %90 : vector<4x1x1024xf32> to vector<4x8x1024xf32>
    %93 = arith.mulf %91, %92 : vector<4x8x1024xf32>
    %94 = vector.broadcast %86 : vector<1x8x1xf32> to vector<4x8x1024xf32>
    %95 = arith.addf %94, %93 : vector<4x8x1024xf32>
    %96 = arith.mulf %65, %95 : vector<4x8x1024xf32>
    %cst_49 = arith.constant dense<0.000000e+00> : vector<4x1024xf32>
    %97 = vector.multi_reduction <add>, %96, %cst_49 [1] : vector<4x8x1024xf32> to vector<4x1024xf32>
    %c0_50 = arith.constant 0 : index
    %c0_51 = arith.constant 0 : index
    %c0_52 = arith.constant 0 : index
    %98 = vector.load %arg13[%c0_50, %c0_51, %c0_52] : memref<2x4x1024xf32, #tpu.memory_space<vmem>>, vector<1x4x1024xf32>
    %99 = vector.shape_cast %98 : vector<1x4x1024xf32> to vector<4x1024xf32>
    %100 = vector.shape_cast %97 : vector<4x1024xf32> to vector<1x4x1024xf32>
    tpu.vector_store %arg13[%c0_50, %c0_51, %c0_52], %100 {strides = array<i32>} : memref<2x4x1024xf32, #tpu.memory_space<vmem>>, vector<1x4x1024xf32>,
    %c0_53 = arith.constant 0 : index
    %c0_54 = arith.constant 0 : index
    %c0_55 = arith.constant 0 : index
    %101 = vector.load %arg12[%c0_53, %c0_54, %c0_55] : memref<4x8x1024xf32, #tpu.memory_space<vmem>>, vector<4x8x1024xf32>
    %c0_56 = arith.constant 0 : index
    %c0_57 = arith.constant 0 : index
    %c0_58 = arith.constant 0 : index
    %102 = vector.load %arg8[%c0_56, %c0_57, %c0_58] : memref<3x4x6xf32, #tpu.memory_space<vmem>>, vector<1x4x6xf32>
    %103 = vector.shape_cast %102 : vector<1x4x6xf32> to vector<4x6xf32>
    %cst_59 = arith.constant dense<0.000000e+00> : vector<4x1024xf32>
    %104 = tpu.matmul %103, %2, %cst_59 {dimension_numbers = #tpu.dot_dimension_numbers<[1], [0], [0], [1], [0, 0, 1, 1], [], []>} : vector<4x6xf32>, vector<6x1024xf32>, vector<4x1024xf32> -> vector<4x1024xf32>
    %c0_60 = arith.constant 0 : index
    %c0_61 = arith.constant 0 : index
    %c0_62 = arith.constant 0 : index
    %105 = vector.load %arg9[%c0_60, %c0_61, %c0_62] : memref<3x4x4xf32, #tpu.memory_space<vmem>>, vector<1x4x4xf32>
    %106 = vector.shape_cast %105 : vector<1x4x4xf32> to vector<4x4xf32>
    %cst_63 = arith.constant dense<0.000000e+00> : vector<4x1024xf32>
    %107 = tpu.matmul %106, %97, %cst_63 {dimension_numbers = #tpu.dot_dimension_numbers<[1], [0], [0], [1], [0, 0, 1, 1], [], []>} : vector<4x4xf32>, vector<4x1024xf32>, vector<4x1024xf32> -> vector<4x1024xf32>
    %108 = arith.addf %104, %107 : vector<4x1024xf32>
    %c0_64 = arith.constant 0 : index
    %c0_65 = arith.constant 0 : index
    %c0_66 = arith.constant 0 : index
    %109 = vector.load %arg10[%c0_64, %c0_65, %c0_66] : memref<3x4x1024xf32, #tpu.memory_space<vmem>>, vector<1x4x1024xf32>
    %110 = vector.shape_cast %109 : vector<1x4x1024xf32> to vector<4x1024xf32>
    %111 = arith.mulf %108, %110 : vector<4x1024xf32>
    %c0_67 = arith.constant 0 : index
    %c0_68 = arith.constant 0 : index
    %c0_69 = arith.constant 0 : index
    %112 = vector.load %arg11[%c0_67, %c0_68, %c0_69] : memref<3x4x1xf32, #tpu.memory_space<vmem>>, vector<1x4x1xf32>
    %113 = vector.shape_cast %112 : vector<1x4x1xf32> to vector<4x1xf32>
    %114 = vector.broadcast %113 : vector<4x1xf32> to vector<4x1024xf32>
    %115 = arith.subf %111, %114 : vector<4x1024xf32>
    %cst_70 = arith.constant 5.000000e-01 : f32
    %116 = vector.broadcast %cst_70 : f32 to vector<4x1024xf32>
    %117 = arith.mulf %116, %115 : vector<4x1024xf32>
    %cst_71 = arith.constant 5.000000e-01 : f32
    %118 = vector.broadcast %cst_71 : f32 to vector<4x1024xf32>
    %119 = arith.addf %117, %118 : vector<4x1024xf32>
    %cst_72 = arith.constant 0.000000e+00 : f32
    %cst_73 = arith.constant 1.000000e+00 : f32
    %120 = vector.broadcast %cst_72 : f32 to vector<4x1024xf32>
    %121 = arith.maximumf %120, %119 : vector<4x1024xf32>
    %122 = vector.broadcast %cst_73 : f32 to vector<4x1024xf32>
    %123 = arith.minimumf %122, %121 : vector<4x1024xf32>
    %124 = vector.extract_strided_slice %0 {offsets = [0, 0, 0], sizes = [1, 8, 1], strides = [1, 1, 1]} : vector<3x8x1xf32> to vector<1x8x1xf32>
    %125 = vector.shape_cast %124 : vector<1x8x1xf32> to vector<8x1xf32>
    %126 = vector.shape_cast %125 : vector<8x1xf32> to vector<1x8x1xf32>
    %127 = vector.extract_strided_slice %1 {offsets = [0, 0, 0], sizes = [1, 8, 1], strides = [1, 1, 1]} : vector<3x8x1xf32> to vector<1x8x1xf32>
    %128 = vector.shape_cast %127 : vector<1x8x1xf32> to vector<8x1xf32>
    %129 = vector.shape_cast %128 : vector<8x1xf32> to vector<1x8x1xf32>
    %130 = vector.shape_cast %123 : vector<4x1024xf32> to vector<4x1x1024xf32>
    %131 = vector.broadcast %129 : vector<1x8x1xf32> to vector<4x8x1024xf32>
    %132 = vector.broadcast %130 : vector<4x1x1024xf32> to vector<4x8x1024xf32>
    %133 = arith.mulf %131, %132 : vector<4x8x1024xf32>
    %134 = vector.broadcast %126 : vector<1x8x1xf32> to vector<4x8x1024xf32>
    %135 = arith.addf %134, %133 : vector<4x8x1024xf32>
    %136 = arith.mulf %101, %135 : vector<4x8x1024xf32>
    %c1_74 = arith.constant 1 : index
    %c0_75 = arith.constant 0 : index
    %c0_76 = arith.constant 0 : index
    %137 = vector.load %arg8[%c1_74, %c0_75, %c0_76] : memref<3x4x6xf32, #tpu.memory_space<vmem>>, vector<1x4x6xf32>
    %138 = vector.shape_cast %137 : vector<1x4x6xf32> to vector<4x6xf32>
    %cst_77 = arith.constant dense<0.000000e+00> : vector<4x1024xf32>
    %139 = tpu.matmul %138, %2, %cst_77 {dimension_numbers = #tpu.dot_dimension_numbers<[1], [0], [0], [1], [0, 0, 1, 1], [], []>} : vector<4x6xf32>, vector<6x1024xf32>, vector<4x1024xf32> -> vector<4x1024xf32>
    %c1_78 = arith.constant 1 : index
    %c0_79 = arith.constant 0 : index
    %c0_80 = arith.constant 0 : index
    %140 = vector.load %arg9[%c1_78, %c0_79, %c0_80] : memref<3x4x4xf32, #tpu.memory_space<vmem>>, vector<1x4x4xf32>
    %141 = vector.shape_cast %140 : vector<1x4x4xf32> to vector<4x4xf32>
    %cst_81 = arith.constant dense<0.000000e+00> : vector<4x1024xf32>
    %142 = tpu.matmul %141, %97, %cst_81 {dimension_numbers = #tpu.dot_dimension_numbers<[1], [0], [0], [1], [0, 0, 1, 1], [], []>} : vector<4x4xf32>, vector<4x1024xf32>, vector<4x1024xf32> -> vector<4x1024xf32>
    %143 = arith.addf %139, %142 : vector<4x1024xf32>
    %c1_82 = arith.constant 1 : index
    %c0_83 = arith.constant 0 : index
    %c0_84 = arith.constant 0 : index
    %144 = vector.load %arg10[%c1_82, %c0_83, %c0_84] : memref<3x4x1024xf32, #tpu.memory_space<vmem>>, vector<1x4x1024xf32>
    %145 = vector.shape_cast %144 : vector<1x4x1024xf32> to vector<4x1024xf32>
    %146 = arith.mulf %143, %145 : vector<4x1024xf32>
    %c1_85 = arith.constant 1 : index
    %c0_86 = arith.constant 0 : index
    %c0_87 = arith.constant 0 : index
    %147 = vector.load %arg11[%c1_85, %c0_86, %c0_87] : memref<3x4x1xf32, #tpu.memory_space<vmem>>, vector<1x4x1xf32>
    %148 = vector.shape_cast %147 : vector<1x4x1xf32> to vector<4x1xf32>
    %149 = vector.broadcast %148 : vector<4x1xf32> to vector<4x1024xf32>
    %150 = arith.subf %146, %149 : vector<4x1024xf32>
    %cst_88 = arith.constant 5.000000e-01 : f32
    %151 = vector.broadcast %cst_88 : f32 to vector<4x1024xf32>
    %152 = arith.mulf %151, %150 : vector<4x1024xf32>
    %cst_89 = arith.constant 5.000000e-01 : f32
    %153 = vector.broadcast %cst_89 : f32 to vector<4x1024xf32>
    %154 = arith.addf %152, %153 : vector<4x1024xf32>
    %cst_90 = arith.constant 0.000000e+00 : f32
    %cst_91 = arith.constant 1.000000e+00 : f32
    %155 = vector.broadcast %cst_90 : f32 to vector<4x1024xf32>
    %156 = arith.maximumf %155, %154 : vector<4x1024xf32>
    %157 = vector.broadcast %cst_91 : f32 to vector<4x1024xf32>
    %158 = arith.minimumf %157, %156 : vector<4x1024xf32>
    %159 = vector.extract_strided_slice %0 {offsets = [1, 0, 0], sizes = [1, 8, 1], strides = [1, 1, 1]} : vector<3x8x1xf32> to vector<1x8x1xf32>
    %160 = vector.shape_cast %159 : vector<1x8x1xf32> to vector<8x1xf32>
    %161 = vector.shape_cast %160 : vector<8x1xf32> to vector<1x8x1xf32>
    %162 = vector.extract_strided_slice %1 {offsets = [1, 0, 0], sizes = [1, 8, 1], strides = [1, 1, 1]} : vector<3x8x1xf32> to vector<1x8x1xf32>
    %163 = vector.shape_cast %162 : vector<1x8x1xf32> to vector<8x1xf32>
    %164 = vector.shape_cast %163 : vector<8x1xf32> to vector<1x8x1xf32>
    %165 = vector.shape_cast %158 : vector<4x1024xf32> to vector<4x1x1024xf32>
    %166 = vector.broadcast %164 : vector<1x8x1xf32> to vector<4x8x1024xf32>
    %167 = vector.broadcast %165 : vector<4x1x1024xf32> to vector<4x8x1024xf32>
    %168 = arith.mulf %166, %167 : vector<4x8x1024xf32>
    %169 = vector.broadcast %161 : vector<1x8x1xf32> to vector<4x8x1024xf32>
    %170 = arith.addf %169, %168 : vector<4x8x1024xf32>
    %171 = arith.mulf %136, %170 : vector<4x8x1024xf32>
    %c2_92 = arith.constant 2 : index
    %c0_93 = arith.constant 0 : index
    %c0_94 = arith.constant 0 : index
    %172 = vector.load %arg8[%c2_92, %c0_93, %c0_94] : memref<3x4x6xf32, #tpu.memory_space<vmem>>, vector<1x4x6xf32>
    %173 = vector.shape_cast %172 : vector<1x4x6xf32> to vector<4x6xf32>
    %cst_95 = arith.constant dense<0.000000e+00> : vector<4x1024xf32>
    %174 = tpu.matmul %173, %2, %cst_95 {dimension_numbers = #tpu.dot_dimension_numbers<[1], [0], [0], [1], [0, 0, 1, 1], [], []>} : vector<4x6xf32>, vector<6x1024xf32>, vector<4x1024xf32> -> vector<4x1024xf32>
    %c2_96 = arith.constant 2 : index
    %c0_97 = arith.constant 0 : index
    %c0_98 = arith.constant 0 : index
    %175 = vector.load %arg9[%c2_96, %c0_97, %c0_98] : memref<3x4x4xf32, #tpu.memory_space<vmem>>, vector<1x4x4xf32>
    %176 = vector.shape_cast %175 : vector<1x4x4xf32> to vector<4x4xf32>
    %cst_99 = arith.constant dense<0.000000e+00> : vector<4x1024xf32>
    %177 = tpu.matmul %176, %97, %cst_99 {dimension_numbers = #tpu.dot_dimension_numbers<[1], [0], [0], [1], [0, 0, 1, 1], [], []>} : vector<4x4xf32>, vector<4x1024xf32>, vector<4x1024xf32> -> vector<4x1024xf32>
    %178 = arith.addf %174, %177 : vector<4x1024xf32>
    %c2_100 = arith.constant 2 : index
    %c0_101 = arith.constant 0 : index
    %c0_102 = arith.constant 0 : index
    %179 = vector.load %arg10[%c2_100, %c0_101, %c0_102] : memref<3x4x1024xf32, #tpu.memory_space<vmem>>, vector<1x4x1024xf32>
    %180 = vector.shape_cast %179 : vector<1x4x1024xf32> to vector<4x1024xf32>
    %181 = arith.mulf %178, %180 : vector<4x1024xf32>
    %c2_103 = arith.constant 2 : index
    %c0_104 = arith.constant 0 : index
    %c0_105 = arith.constant 0 : index
    %182 = vector.load %arg11[%c2_103, %c0_104, %c0_105] : memref<3x4x1xf32, #tpu.memory_space<vmem>>, vector<1x4x1xf32>
    %183 = vector.shape_cast %182 : vector<1x4x1xf32> to vector<4x1xf32>
    %184 = vector.broadcast %183 : vector<4x1xf32> to vector<4x1024xf32>
    %185 = arith.subf %181, %184 : vector<4x1024xf32>
    %cst_106 = arith.constant 5.000000e-01 : f32
    %186 = vector.broadcast %cst_106 : f32 to vector<4x1024xf32>
    %187 = arith.mulf %186, %185 : vector<4x1024xf32>
    %cst_107 = arith.constant 5.000000e-01 : f32
    %188 = vector.broadcast %cst_107 : f32 to vector<4x1024xf32>
    %189 = arith.addf %187, %188 : vector<4x1024xf32>
    %cst_108 = arith.constant 0.000000e+00 : f32
    %cst_109 = arith.constant 1.000000e+00 : f32
    %190 = vector.broadcast %cst_108 : f32 to vector<4x1024xf32>
    %191 = arith.maximumf %190, %189 : vector<4x1024xf32>
    %192 = vector.broadcast %cst_109 : f32 to vector<4x1024xf32>
    %193 = arith.minimumf %192, %191 : vector<4x1024xf32>
    %194 = vector.extract_strided_slice %0 {offsets = [2, 0, 0], sizes = [1, 8, 1], strides = [1, 1, 1]} : vector<3x8x1xf32> to vector<1x8x1xf32>
    %195 = vector.shape_cast %194 : vector<1x8x1xf32> to vector<8x1xf32>
    %196 = vector.shape_cast %195 : vector<8x1xf32> to vector<1x8x1xf32>
    %197 = vector.extract_strided_slice %1 {offsets = [2, 0, 0], sizes = [1, 8, 1], strides = [1, 1, 1]} : vector<3x8x1xf32> to vector<1x8x1xf32>
    %198 = vector.shape_cast %197 : vector<1x8x1xf32> to vector<8x1xf32>
    %199 = vector.shape_cast %198 : vector<8x1xf32> to vector<1x8x1xf32>
    %200 = vector.shape_cast %193 : vector<4x1024xf32> to vector<4x1x1024xf32>
    %201 = vector.broadcast %199 : vector<1x8x1xf32> to vector<4x8x1024xf32>
    %202 = vector.broadcast %200 : vector<4x1x1024xf32> to vector<4x8x1024xf32>
    %203 = arith.mulf %201, %202 : vector<4x8x1024xf32>
    %204 = vector.broadcast %196 : vector<1x8x1xf32> to vector<4x8x1024xf32>
    %205 = arith.addf %204, %203 : vector<4x8x1024xf32>
    %206 = arith.mulf %171, %205 : vector<4x8x1024xf32>
    %cst_110 = arith.constant dense<0.000000e+00> : vector<4x1024xf32>
    %207 = vector.multi_reduction <add>, %206, %cst_110 [1] : vector<4x8x1024xf32> to vector<4x1024xf32>
    %c1_111 = arith.constant 1 : index
    %c0_112 = arith.constant 0 : index
    %c0_113 = arith.constant 0 : index
    %208 = vector.load %arg13[%c1_111, %c0_112, %c0_113] : memref<2x4x1024xf32, #tpu.memory_space<vmem>>, vector<1x4x1024xf32>
    %209 = vector.shape_cast %208 : vector<1x4x1024xf32> to vector<4x1024xf32>
    %210 = vector.shape_cast %207 : vector<4x1024xf32> to vector<1x4x1024xf32>
    tpu.vector_store %arg13[%c1_111, %c0_112, %c0_113], %210 {strides = array<i32>} : memref<2x4x1024xf32, #tpu.memory_space<vmem>>, vector<1x4x1024xf32>,
    return
  }
  func.func @transform_0(%arg0: i32) -> (i32, i32) {
    %c0_i32 = arith.constant 0 : i32
    %c0_i32_0 = arith.constant 0 : i32
    return %c0_i32, %arg0 : i32, i32
  }
  func.func @transform_1(%arg0: i32) -> (i32, i32, i32) {
    %c0_i32 = arith.constant 0 : i32
    %c0_i32_0 = arith.constant 0 : i32
    %c0_i32_1 = arith.constant 0 : i32
    %c0_i32_2 = arith.constant 0 : i32
    return %c0_i32, %c0_i32_0, %c0_i32_1 : i32, i32, i32
  }
  func.func @transform_2(%arg0: i32) -> (i32, i32, i32) {
    %c0_i32 = arith.constant 0 : i32
    %c0_i32_0 = arith.constant 0 : i32
    %c0_i32_1 = arith.constant 0 : i32
    %c0_i32_2 = arith.constant 0 : i32
    return %c0_i32, %c0_i32_0, %c0_i32_1 : i32, i32, i32
  }
  func.func @transform_3(%arg0: i32) -> (i32, i32, i32) {
    %c0_i32 = arith.constant 0 : i32
    %c0_i32_0 = arith.constant 0 : i32
    %c0_i32_1 = arith.constant 0 : i32
    %c0_i32_2 = arith.constant 0 : i32
    return %c0_i32, %c0_i32_0, %c0_i32_1 : i32, i32, i32
  }
  func.func @transform_4(%arg0: i32) -> (i32, i32, i32) {
    %c0_i32 = arith.constant 0 : i32
    %c0_i32_0 = arith.constant 0 : i32
    %c0_i32_1 = arith.constant 0 : i32
    %c0_i32_2 = arith.constant 0 : i32
    return %c0_i32, %c0_i32_0, %c0_i32_1 : i32, i32, i32
  }
  func.func @transform_5(%arg0: i32) -> (i32, i32, i32) {
    %c0_i32 = arith.constant 0 : i32
    %c0_i32_0 = arith.constant 0 : i32
    %c0_i32_1 = arith.constant 0 : i32
    %c0_i32_2 = arith.constant 0 : i32
    return %c0_i32, %c0_i32_0, %c0_i32_1 : i32, i32, i32
  }
  func.func @transform_6(%arg0: i32) -> (i32, i32, i32) {
    %c0_i32 = arith.constant 0 : i32
    %c0_i32_0 = arith.constant 0 : i32
    %c0_i32_1 = arith.constant 0 : i32
    %c0_i32_2 = arith.constant 0 : i32
    return %c0_i32, %c0_i32_0, %c0_i32_1 : i32, i32, i32
  }
  func.func @transform_7(%arg0: i32) -> (i32, i32, i32) {
    %c0_i32 = arith.constant 0 : i32
    %c0_i32_0 = arith.constant 0 : i32
    %c0_i32_1 = arith.constant 0 : i32
    %c0_i32_2 = arith.constant 0 : i32
    return %c0_i32, %c0_i32_0, %c0_i32_1 : i32, i32, i32
  }
  func.func @transform_8(%arg0: i32) -> (i32, i32, i32) {
    %c0_i32 = arith.constant 0 : i32
    %c0_i32_0 = arith.constant 0 : i32
    %c0_i32_1 = arith.constant 0 : i32
    %c0_i32_2 = arith.constant 0 : i32
    return %c0_i32, %c0_i32_0, %c0_i32_1 : i32, i32, i32
  }
  func.func @transform_9(%arg0: i32) -> (i32, i32, i32) {
    %c0_i32 = arith.constant 0 : i32
    %c0_i32_0 = arith.constant 0 : i32
    %c0_i32_1 = arith.constant 0 : i32
    %c0_i32_2 = arith.constant 0 : i32
    return %c0_i32, %c0_i32_0, %c0_i32_1 : i32, i32, i32
  }
  func.func @transform_10(%arg0: i32) -> (i32, i32, i32) {
    %c0_i32 = arith.constant 0 : i32
    %c0_i32_0 = arith.constant 0 : i32
    %c0_i32_1 = arith.constant 0 : i32
    %c0_i32_2 = arith.constant 0 : i32
    return %c0_i32, %c0_i32_0, %c0_i32_1 : i32, i32, i32
  }
  func.func @transform_11(%arg0: i32) -> (i32, i32, i32) {
    %c0_i32 = arith.constant 0 : i32
    %c0_i32_0 = arith.constant 0 : i32
    %c0_i32_1 = arith.constant 0 : i32
    %c0_i32_2 = arith.constant 0 : i32
    return %c0_i32, %c0_i32_0, %c0_i32_1 : i32, i32, i32
  }
  func.func @transform_12(%arg0: i32) -> (i32, i32, i32) {
    %c0_i32 = arith.constant 0 : i32
    %c0_i32_0 = arith.constant 0 : i32
    %c0_i32_1 = arith.constant 0 : i32
    return %c0_i32, %c0_i32_0, %arg0 : i32, i32, i32
  }
}

</mosaic_0001>

<llo_original>
// kernel: forward.1
$region0: #{forward.1}
  #allocation0 [shape = 'u32[]', space=smem, size = 0x4, offset = 0x4, fixed_abs, tag = 'smem constant byte address 0x4 - core index']
  #allocation1 [shape = 'u32[72,128]{1,0:T(1,128)}', space=vmem, size = 0x9000, scoped, tag = 'internal scratch']
  %s0 = inlined_call_operand.vmem [shape: f32[6,2048], index: 0, kind: input, shape index: {}]
  %s1 = inlined_call_operand.vmem [shape: f32[3,8,1], index: 1, kind: input, shape index: {}]
  %s2 = inlined_call_operand.vmem [shape: f32[3,8,1], index: 2, kind: input, shape index: {}]
  %s3 = inlined_call_operand.vmem [shape: f32[3,4,6], index: 3, kind: input, shape index: {}]
  %s4 = inlined_call_operand.vmem [shape: f32[3,4,1024], index: 4, kind: input, shape index: {}]
  %s5 = inlined_call_operand.vmem [shape: f32[3,4,1], index: 5, kind: input, shape index: {}]
  %s6 = inlined_call_operand.vmem [shape: f32[4,8,1024], index: 6, kind: input, shape index: {}]
  %s7 = inlined_call_operand.vmem [shape: f32[3,4,6], index: 7, kind: input, shape index: {}]
  %s8 = inlined_call_operand.vmem [shape: f32[3,4,4], index: 8, kind: input, shape index: {}]
  %s9 = inlined_call_operand.vmem [shape: f32[3,4,1024], index: 9, kind: input, shape index: {}]
  %s10 = inlined_call_operand.vmem [shape: f32[3,4,1], index: 10, kind: input, shape index: {}]
  %s11 = inlined_call_operand.vmem [shape: f32[4,8,1024], index: 11, kind: input, shape index: {}]
  %s12 = inlined_call_operand.vmem [shape: f32[2,4,2048], index: 12, kind: output, shape index: {}]
  %s13 = sld [smem:[#allocation0]]
  $region100: #{forward.1} parent=0
    _
  %s15 = ssub.s32 1, %s13
  %s16 = scalar_select 0, %s15, %s13
  $region1: #{forward.1} parent=0
    #allocation2 [shape = 'u8[65536]{0}', space=vmem, size = 0x10000, scoped, tag = 'output window, operand 0']
    loop: start=0, step=1, limit=4
    $region2: #{forward.1} parent=1 // loop_pre_header
      _
    $region3: #{forward.1} parent=1 // loop_header
      %s18 = sphi 0, %s22
      %p19 = scmp.ge.s32.totalorder %s18, 4
      %s28 = sphi 0, %s30
      %s31 = sphi 0, %s28
      %s32 = sphi 0, %s31
      %s48 = sphi 0, %s32
      %s52 = sphi 0, %s52
      %s54 = sphi 0, %s52
      %s55 = sphi 0, %s54
      %s69 = sphi 0, %s55
      %s73 = sphi 0, %s73
      %s75 = sphi 0, %s73
      %s76 = sphi 0, %s75
      %s90 = sphi 0, %s76
      %s94 = sphi 0, %s94
      %s96 = sphi 0, %s94
      %s97 = sphi 0, %s96
      %s111 = sphi 0, %s97
      %s115 = sphi 0, %s115
      %s117 = sphi 0, %s115
      %s118 = sphi 0, %s117
      %s132 = sphi 0, %s118
      %s136 = sphi 0, %s136
      %s138 = sphi 0, %s136
      %s139 = sphi 0, %s138
      %s153 = sphi 0, %s139
      %s157 = sphi 0, %s157
      %s159 = sphi 0, %s157
      %s160 = sphi 0, %s159
      %s174 = sphi 0, %s160
      %s178 = sphi 0, %s178
      %s180 = sphi 0, %s178
      %s181 = sphi 0, %s180
      %s195 = sphi 0, %s181
      %s199 = sphi 0, %s199
      %s201 = sphi 0, %s199
      %s202 = sphi 0, %s201
      %s216 = sphi 0, %s202
      %s220 = sphi 0, %s220
      %s222 = sphi 0, %s220
      %s223 = sphi 0, %s222
      %s237 = sphi 0, %s223
      %s241 = sphi 0, %s241
      %s243 = sphi 0, %s241
      %s244 = sphi 0, %s243
      %s258 = sphi 0, %s244
      %s262 = sphi 0, %s262
      %s264 = sphi 0, %s262
      %s265 = sphi 0, %s264
      %s279 = sphi 0, %s265
      %s285 = sphi 0, %s287
      %s288 = sphi 0, %s285
      %s289 = sphi 0, %s288
      %s305 = sphi 0, %s289
    $region4: #{forward.1} parent=1 // loop_header_branch
      %21 = sbr.rel (%p19) target = $region8
    $region5: #{forward.1} parent=1 // loop_body
      %s23 = ssub.s32 %s18, 1
      %s24 = ssub.s32 %s18, 2
      %s25 = sadd.s32 %s18, 1
      %s26 = ssub.s32 %s18, %s25
      %p27 = scmp.eq.s32.totalorder %s26, 0
      %s29 = sadd.s32 %s28, 1
      %s30 = scalar_select %p27, %s28, %s29
      %p33 = pneg %p27
      %p34 = scmp.eq.s32.totalorder %s18, 1
      %p35 = por %p33, %p34
      %p36 = scmp.ne.s32.totalorder %s28, %s31
      %p37 = scmp.eq.s32.totalorder %s18, 0
      %p38 = por %p36, %p37
      %p39 = scmp.ne.s32.totalorder %s28, %s31
      %p40 = scmp.eq.s32.totalorder %s23, 1
      %p41 = por %p39, %p40
      %p42 = scmp.ne.s32.totalorder %s31, %s32
      %p43 = scmp.eq.s32.totalorder %s23, 0
      %p44 = por %p42, %p43
      %p45 = scmp.ne.s32.totalorder %s31, %s32
      %p46 = scmp.eq.s32.totalorder %s24, 1
      %p47 = por %p45, %p46
      %p49 = scmp.ne.s32.totalorder %s32, %s48
      %p50 = scmp.eq.s32.totalorder %s24, 0
      %p51 = por %p49, %p50
      %s53 = sadd.s32 %s52, 1
      %p56 = scmp.eq.s32.totalorder %s18, 1
      %p57 = scmp.ne.s32.totalorder %s52, %s54
      %p58 = scmp.eq.s32.totalorder %s18, 0
      %p59 = por %p57, %p58
      %p60 = scmp.ne.s32.totalorder %s52, %s54
      %p61 = scmp.eq.s32.totalorder %s23, 1
      %p62 = por %p60, %p61
      %p63 = scmp.ne.s32.totalorder %s54, %s55
      %p64 = scmp.eq.s32.totalorder %s23, 0
      %p65 = por %p63, %p64
      %p66 = scmp.ne.s32.totalorder %s54, %s55
      %p67 = scmp.eq.s32.totalorder %s24, 1
      %p68 = por %p66, %p67
      %p70 = scmp.ne.s32.totalorder %s55, %s69
      %p71 = scmp.eq.s32.totalorder %s24, 0
      %p72 = por %p70, %p71
      %s74 = sadd.s32 %s73, 1
      %p77 = scmp.eq.s32.totalorder %s18, 1
      %p78 = scmp.ne.s32.totalorder %s73, %s75
      %p79 = scmp.eq.s32.totalorder %s18, 0
      %p80 = por %p78, %p79
      %p81 = scmp.ne.s32.totalorder %s73, %s75
      %p82 = scmp.eq.s32.totalorder %s23, 1
      %p83 = por %p81, %p82
      %p84 = scmp.ne.s32.totalorder %s75, %s76
      %p85 = scmp.eq.s32.totalorder %s23, 0
      %p86 = por %p84, %p85
      %p87 = scmp.ne.s32.totalorder %s75, %s76
      %p88 = scmp.eq.s32.totalorder %s24, 1
      %p89 = por %p87, %p88
      %p91 = scmp.ne.s32.totalorder %s76, %s90
      %p92 = scmp.eq.s32.totalorder %s24, 0
      %p93 = por %p91, %p92
      %s95 = sadd.s32 %s94, 1
      %p98 = scmp.eq.s32.totalorder %s18, 1
      %p99 = scmp.ne.s32.totalorder %s94, %s96
      %p100 = scmp.eq.s32.totalorder %s18, 0
      %p101 = por %p99, %p100
      %p102 = scmp.ne.s32.totalorder %s94, %s96
      %p103 = scmp.eq.s32.totalorder %s23, 1
      %p104 = por %p102, %p103
      %p105 = scmp.ne.s32.totalorder %s96, %s97
      %p106 = scmp.eq.s32.totalorder %s23, 0
      %p107 = por %p105, %p106
      %p108 = scmp.ne.s32.totalorder %s96, %s97
      %p109 = scmp.eq.s32.totalorder %s24, 1
      %p110 = por %p108, %p109
      %p112 = scmp.ne.s32.totalorder %s97, %s111
      %p113 = scmp.eq.s32.totalorder %s24, 0
      %p114 = por %p112, %p113
      %s116 = sadd.s32 %s115, 1
      %p119 = scmp.eq.s32.totalorder %s18, 1
      %p120 = scmp.ne.s32.totalorder %s115, %s117
      %p121 = scmp.eq.s32.totalorder %s18, 0
      %p122 = por %p120, %p121
      %p123 = scmp.ne.s32.totalorder %s115, %s117
      %p124 = scmp.eq.s32.totalorder %s23, 1
      %p125 = por %p123, %p124
      %p126 = scmp.ne.s32.totalorder %s117, %s118
      %p127 = scmp.eq.s32.totalorder %s23, 0
      %p128 = por %p126, %p127
      %p129 = scmp.ne.s32.totalorder %s117, %s118
      %p130 = scmp.eq.s32.totalorder %s24, 1
      %p131 = por %p129, %p130
      %p133 = scmp.ne.s32.totalorder %s118, %s132
      %p134 = scmp.eq.s32.totalorder %s24, 0
      %p135 = por %p133, %p134
      %s137 = sadd.s32 %s136, 1
      %p140 = scmp.eq.s32.totalorder %s18, 1
      %p141 = scmp.ne.s32.totalorder %s136, %s138
      %p142 = scmp.eq.s32.totalorder %s18, 0
      %p143 = por %p141, %p142
      %p144 = scmp.ne.s32.totalorder %s136, %s138
      %p145 = scmp.eq.s32.totalorder %s23, 1
      %p146 = por %p144, %p145
      %p147 = scmp.ne.s32.totalorder %s138, %s139
      %p148 = scmp.eq.s32.totalorder %s23, 0
      %p149 = por %p147, %p148
      %p150 = scmp.ne.s32.totalorder %s138, %s139
      %p151 = scmp.eq.s32.totalorder %s24, 1
      %p152 = por %p150, %p151
      %p154 = scmp.ne.s32.totalorder %s139, %s153
      %p155 = scmp.eq.s32.totalorder %s24, 0
      %p156 = por %p154, %p155
      %s158 = sadd.s32 %s157, 1
      %p161 = scmp.eq.s32.totalorder %s18, 1
      %p162 = scmp.ne.s32.totalorder %s157, %s159
      %p163 = scmp.eq.s32.totalorder %s18, 0
      %p164 = por %p162, %p163
      %p165 = scmp.ne.s32.totalorder %s157, %s159
      %p166 = scmp.eq.s32.totalorder %s23, 1
      %p167 = por %p165, %p166
      %p168 = scmp.ne.s32.totalorder %s159, %s160
      %p169 = scmp.eq.s32.totalorder %s23, 0
      %p170 = por %p168, %p169
      %p171 = scmp.ne.s32.totalorder %s159, %s160
      %p172 = scmp.eq.s32.totalorder %s24, 1
      %p173 = por %p171, %p172
      %p175 = scmp.ne.s32.totalorder %s160, %s174
      %p176 = scmp.eq.s32.totalorder %s24, 0
      %p177 = por %p175, %p176
      %s179 = sadd.s32 %s178, 1
      %p182 = scmp.eq.s32.totalorder %s18, 1
      %p183 = scmp.ne.s32.totalorder %s178, %s180
      %p184 = scmp.eq.s32.totalorder %s18, 0
      %p185 = por %p183, %p184
      %p186 = scmp.ne.s32.totalorder %s178, %s180
      %p187 = scmp.eq.s32.totalorder %s23, 1
      %p188 = por %p186, %p187
      %p189 = scmp.ne.s32.totalorder %s180, %s181
      %p190 = scmp.eq.s32.totalorder %s23, 0
      %p191 = por %p189, %p190
      %p192 = scmp.ne.s32.totalorder %s180, %s181
      %p193 = scmp.eq.s32.totalorder %s24, 1
      %p194 = por %p192, %p193
      %p196 = scmp.ne.s32.totalorder %s181, %s195
      %p197 = scmp.eq.s32.totalorder %s24, 0
      %p198 = por %p196, %p197
      %s200 = sadd.s32 %s199, 1
      %p203 = scmp.eq.s32.totalorder %s18, 1
      %p204 = scmp.ne.s32.totalorder %s199, %s201
      %p205 = scmp.eq.s32.totalorder %s18, 0
      %p206 = por %p204, %p205
      %p207 = scmp.ne.s32.totalorder %s199, %s201
      %p208 = scmp.eq.s32.totalorder %s23, 1
      %p209 = por %p207, %p208
      %p210 = scmp.ne.s32.totalorder %s201, %s202
      %p211 = scmp.eq.s32.totalorder %s23, 0
      %p212 = por %p210, %p211
      %p213 = scmp.ne.s32.totalorder %s201, %s202
      %p214 = scmp.eq.s32.totalorder %s24, 1
      %p215 = por %p213, %p214
      %p217 = scmp.ne.s32.totalorder %s202, %s216
      %p218 = scmp.eq.s32.totalorder %s24, 0
      %p219 = por %p217, %p218
      %s221 = sadd.s32 %s220, 1
      %p224 = scmp.eq.s32.totalorder %s18, 1
      %p225 = scmp.ne.s32.totalorder %s220, %s222
      %p226 = scmp.eq.s32.totalorder %s18, 0
      %p227 = por %p225, %p226
      %p228 = scmp.ne.s32.totalorder %s220, %s222
      %p229 = scmp.eq.s32.totalorder %s23, 1
      %p230 = por %p228, %p229
      %p231 = scmp.ne.s32.totalorder %s222, %s223
      %p232 = scmp.eq.s32.totalorder %s23, 0
      %p233 = por %p231, %p232
      %p234 = scmp.ne.s32.totalorder %s222, %s223
      %p235 = scmp.eq.s32.totalorder %s24, 1
      %p236 = por %p234, %p235
      %p238 = scmp.ne.s32.totalorder %s223, %s237
      %p239 = scmp.eq.s32.totalorder %s24, 0
      %p240 = por %p238, %p239
      %s242 = sadd.s32 %s241, 1
      %p245 = scmp.eq.s32.totalorder %s18, 1
      %p246 = scmp.ne.s32.totalorder %s241, %s243
      %p247 = scmp.eq.s32.totalorder %s18, 0
      %p248 = por %p246, %p247
      %p249 = scmp.ne.s32.totalorder %s241, %s243
      %p250 = scmp.eq.s32.totalorder %s23, 1
      %p251 = por %p249, %p250
      %p252 = scmp.ne.s32.totalorder %s243, %s244
      %p253 = scmp.eq.s32.totalorder %s23, 0
      %p254 = por %p252, %p253
      %p255 = scmp.ne.s32.totalorder %s243, %s244
      %p256 = scmp.eq.s32.totalorder %s24, 1
      %p257 = por %p255, %p256
      %p259 = scmp.ne.s32.totalorder %s244, %s258
      %p260 = scmp.eq.s32.totalorder %s24, 0
      %p261 = por %p259, %p260
      %s263 = sadd.s32 %s262, 1
      %p266 = scmp.eq.s32.totalorder %s18, 1
      %p267 = scmp.ne.s32.totalorder %s262, %s264
      %p268 = scmp.eq.s32.totalorder %s18, 0
      %p269 = por %p267, %p268
      %p270 = scmp.ne.s32.totalorder %s262, %s264
      %p271 = scmp.eq.s32.totalorder %s23, 1
      %p272 = por %p270, %p271
      %p273 = scmp.ne.s32.totalorder %s264, %s265
      %p274 = scmp.eq.s32.totalorder %s23, 0
      %p275 = por %p273, %p274
      %p276 = scmp.ne.s32.totalorder %s264, %s265
      %p277 = scmp.eq.s32.totalorder %s24, 1
      %p278 = por %p276, %p277
      %p280 = scmp.ne.s32.totalorder %s265, %s279
      %p281 = scmp.eq.s32.totalorder %s24, 0
      %p282 = por %p280, %p281
      %s283 = ssub.s32 %s18, %s25
      %p284 = scmp.eq.s32.totalorder %s283, 0
      %s286 = sadd.s32 %s285, 1
      %s287 = scalar_select %p284, %s285, %s286
      %p290 = pneg %p284
      %p291 = scmp.eq.s32.totalorder %s18, 1
      %p292 = por %p290, %p291
      %p293 = scmp.ne.s32.totalorder %s285, %s288
      %p294 = scmp.eq.s32.totalorder %s18, 0
      %p295 = por %p293, %p294
      %p296 = scmp.ne.s32.totalorder %s285, %s288
      %p297 = scmp.eq.s32.totalorder %s23, 1
      %p298 = por %p296, %p297
      %p299 = scmp.ne.s32.totalorder %s288, %s289
      %p300 = scmp.eq.s32.totalorder %s23, 0
      %p301 = por %p299, %p300
      %p302 = scmp.ne.s32.totalorder %s288, %s289
      %p303 = scmp.eq.s32.totalorder %s24, 1
      %p304 = por %p302, %p303
      %p306 = scmp.ne.s32.totalorder %s289, %s305
      %p307 = scmp.eq.s32.totalorder %s24, 0
      %p308 = por %p306, %p307
      %p309 = scmp.le.s32.totalorder 1, %s18
      %p310 = scmp.lt.s32.totalorder %s18, 3
      %p311 = pnand %p309, %p310
      %p312 = pneg %p311
      // Predicated region
      $region9: #{forward.1} parent=5 // pred_check
        _
      $region10: #{forward.1} parent=5 // pred_check_branch
        %314 = sbr.rel (%p311) target = $region12
      $region11: #{forward.1} parent=5 // pred_region
        %s315 = ssub.s32 %s18, 1
        // Predicated region
        $region13: #{forward.1} parent=11 // pred_check
          %p316 = pneg %p65
        $region14: #{forward.1} parent=11 // pred_check_branch
          %318 = sbr.rel (%p316) target = $region16
        $region15: #{forward.1} parent=11 // pred_region
          _
        $region16: #{forward.1} parent=11 // pred_fallthru
          _
        // Predicated region
        $region17: #{forward.1} parent=11 // pred_check
          %p319 = pneg %p86
        $region18: #{forward.1} parent=11 // pred_check_branch
          %321 = sbr.rel (%p319) target = $region20
        $region19: #{forward.1} parent=11 // pred_region
          _
        $region20: #{forward.1} parent=11 // pred_fallthru
          _
        // Predicated region
        $region21: #{forward.1} parent=11 // pred_check
          %p322 = pneg %p107
        $region22: #{forward.1} parent=11 // pred_check_branch
          %324 = sbr.rel (%p322) target = $region24
        $region23: #{forward.1} parent=11 // pred_region
          _
        $region24: #{forward.1} parent=11 // pred_fallthru
          _
        // Predicated region
        $region25: #{forward.1} parent=11 // pred_check
          %p325 = pneg %p128
        $region26: #{forward.1} parent=11 // pred_check_branch
          %327 = sbr.rel (%p325) target = $region28
        $region27: #{forward.1} parent=11 // pred_region
          _
        $region28: #{forward.1} parent=11 // pred_fallthru
          _
        // Predicated region
        $region29: #{forward.1} parent=11 // pred_check
          %p328 = pneg %p149
        $region30: #{forward.1} parent=11 // pred_check_branch
          %330 = sbr.rel (%p328) target = $region32
        $region31: #{forward.1} parent=11 // pred_region
          _
        $region32: #{forward.1} parent=11 // pred_fallthru
          _
        // Predicated region
        $region33: #{forward.1} parent=11 // pred_check
          %p331 = pneg %p170
        $region34: #{forward.1} parent=11 // pred_check_branch
          %333 = sbr.rel (%p331) target = $region36
        $region35: #{forward.1} parent=11 // pred_region
          _
        $region36: #{forward.1} parent=11 // pred_fallthru
          _
        // Predicated region
        $region37: #{forward.1} parent=11 // pred_check
          %p334 = pneg %p191
        $region38: #{forward.1} parent=11 // pred_check_branch
          %336 = sbr.rel (%p334) target = $region40
        $region39: #{forward.1} parent=11 // pred_region
          _
        $region40: #{forward.1} parent=11 // pred_fallthru
          _
        // Predicated region
        $region41: #{forward.1} parent=11 // pred_check
          %p337 = pneg %p212
        $region42: #{forward.1} parent=11 // pred_check_branch
          %339 = sbr.rel (%p337) target = $region44
        $region43: #{forward.1} parent=11 // pred_region
          _
        $region44: #{forward.1} parent=11 // pred_fallthru
          _
        // Predicated region
        $region45: #{forward.1} parent=11 // pred_check
          %p340 = pneg %p233
        $region46: #{forward.1} parent=11 // pred_check_branch
          %342 = sbr.rel (%p340) target = $region48
        $region47: #{forward.1} parent=11 // pred_region
          _
        $region48: #{forward.1} parent=11 // pred_fallthru
          _
        // Predicated region
        $region49: #{forward.1} parent=11 // pred_check
          %p343 = pneg %p254
        $region50: #{forward.1} parent=11 // pred_check_branch
          %345 = sbr.rel (%p343) target = $region52
        $region51: #{forward.1} parent=11 // pred_region
          _
        $region52: #{forward.1} parent=11 // pred_fallthru
          _
        // Predicated region
        $region53: #{forward.1} parent=11 // pred_check
          %p346 = pneg %p275
        $region54: #{forward.1} parent=11 // pred_check_branch
          %348 = sbr.rel (%p346) target = $region56
        $region55: #{forward.1} parent=11 // pred_region
          _
        $region56: #{forward.1} parent=11 // pred_fallthru
          _
      $region12: #{forward.1} parent=5 // pred_fallthru
        _
      %p349 = scmp.lt.s32.totalorder %s18, 2
      // Predicated region
      $region57: #{forward.1} parent=5 // pred_check
        %p350 = pneg %p349
      $region58: #{forward.1} parent=5 // pred_check_branch
        %352 = sbr.rel (%p350) target = $region60
      $region59: #{forward.1} parent=5 // pred_region
        // Predicated region
        $region61: #{forward.1} parent=59 // pred_check
          %p353 = pneg %p38
        $region62: #{forward.1} parent=59 // pred_check_branch
          %355 = sbr.rel (%p353) target = $region64
        $region63: #{forward.1} parent=59 // pred_region
          %s356 = smul.u32 8, %s18
          %p357 = scmp.lt.s32.totalorder %s356, 15
          %s358 = scalar_select %p357, %s356, 15
          %s359 = smul.addr %s358, 8
          %s360 = scalar_lea.vmem %s0, %s359
          %s361 = smul.u32 8, %s18
        $region64: #{forward.1} parent=59 // pred_fallthru
          _
      $region60: #{forward.1} parent=5 // pred_fallthru
        _
      %p362 = scmp.le.s32.totalorder 1, %s18
      %p363 = scmp.lt.s32.totalorder %s18, 3
      %p364 = pnand %p362, %p363
      %p365 = pneg %p364
      // Predicated region
      $region65: #{forward.1} parent=5 // pred_check
        _
      $region66: #{forward.1} parent=5 // pred_check_branch
        %367 = sbr.rel (%p364) target = $region68
      $region67: #{forward.1} parent=5 // pred_region
        %s368 = ssub.s32 %s18, 1
        %s369 = smul.u32 8, %s23
        %p370 = scmp.lt.s32.totalorder %s369, 15
        %s371 = scalar_select %p370, %s369, 15
        %s372 = smul.addr %s371, 8
        %s373 = scalar_lea.vmem %s0, %s372
        %p374 = pneg %p44
        %p375 = pneg %p41
        %p376 = pneg %p65
        %p377 = pneg %p62
        %p378 = pneg %p86
        %p379 = pneg %p83
        %p380 = pneg %p107
        %p381 = pneg %p104
        %p382 = pneg %p128
        %p383 = pneg %p125
        %p384 = pneg %p149
        %p385 = pneg %p146
        %p386 = pneg %p170
        %p387 = pneg %p167
        %p388 = pneg %p191
        %p389 = pneg %p188
        %p390 = pneg %p212
        %p391 = pneg %p209
        %p392 = pneg %p233
        %p393 = pneg %p230
        %p394 = pneg %p254
        %p395 = pneg %p251
        %p396 = pneg %p275
        %p397 = pneg %p272
        %p398 = pneg %p301
        %p399 = pneg %p298
        %s400 = sand.u32 %s288, 1
        %s401 = sand.u32 %s288, 1
        %s402 = smul.addr %s401, 64
        %s403 = scalar_lea.vmem [#allocation2], %s402
        %s404 = smul.u32 8, %s23
        %p405 = scmp.lt.s32.totalorder %s404, 15
        %s406 = scalar_select %p405, %s404, 15
        %s407 = smul.addr %s406, 8
        %s408 = scalar_lea.vmem %s0, %s407
        %s409 = smul.u32 8, %s23
        %s410 = smul.u32 8, %s23
        %v411 = vld [vmem:[%s1] sm:$0xff]
        %v412 = vld [vmem:[%s1 + $0x8] sm:$0xff]
        %v413 = vld [vmem:[%s1 + $0x10] sm:$0xff]
        %v414 = vld [vmem:[%s2] sm:$0xff]
        %v415 = vld [vmem:[%s2 + $0x8] sm:$0xff]
        %v416 = vld [vmem:[%s2 + $0x10] sm:$0xff]
        %v417 = vld [vmem:[%s408] sm:$0x3f]
        %v418 = vld [vmem:[%s408 + $0x8] sm:$0x3f]
        %v419 = vld [vmem:[%s408 + $0x10] sm:$0x3f]
        %v420 = vld [vmem:[%s408 + $0x18] sm:$0x3f]
        %v421 = vld [vmem:[%s408 + $0x20] sm:$0x3f]
        %v422 = vld [vmem:[%s408 + $0x28] sm:$0x3f]
        %v423 = vld [vmem:[%s408 + $0x30] sm:$0x3f]
        %v424 = vld [vmem:[%s408 + $0x38] sm:$0x3f]
        %v425 = vld [vmem:[%s6] sm:$0xff]
        %v426 = vld [vmem:[%s6 + $0x8] sm:$0xff]
        %v427 = vld [vmem:[%s6 + $0x10] sm:$0xff]
        %v428 = vld [vmem:[%s6 + $0x18] sm:$0xff]
        %v429 = vld [vmem:[%s6 + $0x20] sm:$0xff]
        %v430 = vld [vmem:[%s6 + $0x28] sm:$0xff]
        %v431 = vld [vmem:[%s6 + $0x30] sm:$0xff]
        %v432 = vld [vmem:[%s6 + $0x38] sm:$0xff]
        %v433 = vld [vmem:[%s6 + $0x40] sm:$0xff]
        %v434 = vld [vmem:[%s6 + $0x48] sm:$0xff]
        %v435 = vld [vmem:[%s6 + $0x50] sm:$0xff]
        %v436 = vld [vmem:[%s6 + $0x58] sm:$0xff]
        %v437 = vld [vmem:[%s6 + $0x60] sm:$0xff]
        %v438 = vld [vmem:[%s6 + $0x68] sm:$0xff]
        %v439 = vld [vmem:[%s6 + $0x70] sm:$0xff]
        %v440 = vld [vmem:[%s6 + $0x78] sm:$0xff]
        %v441 = vld [vmem:[%s6 + $0x80] sm:$0xff]
        %v442 = vld [vmem:[%s6 + $0x88] sm:$0xff]
        %v443 = vld [vmem:[%s6 + $0x90] sm:$0xff]
        %v444 = vld [vmem:[%s6 + $0x98] sm:$0xff]
        %v445 = vld [vmem:[%s6 + $0xa0] sm:$0xff]
        %v446 = vld [vmem:[%s6 + $0xa8] sm:$0xff]
        %v447 = vld [vmem:[%s6 + $0xb0] sm:$0xff]
        %v448 = vld [vmem:[%s6 + $0xb8] sm:$0xff]
        %v449 = vld [vmem:[%s6 + $0xc0] sm:$0xff]
        %v450 = vld [vmem:[%s6 + $0xc8] sm:$0xff]
        %v451 = vld [vmem:[%s6 + $0xd0] sm:$0xff]
        %v452 = vld [vmem:[%s6 + $0xd8] sm:$0xff]
        %v453 = vld [vmem:[%s6 + $0xe0] sm:$0xff]
        %v454 = vld [vmem:[%s6 + $0xe8] sm:$0xff]
        %v455 = vld [vmem:[%s6 + $0xf0] sm:$0xff]
        %v456 = vld [vmem:[%s6 + $0xf8] sm:$0xff]
        %v457 = vld [vmem:[%s3] sm:$0xf]
        %vm458 = vcmask 48128
        %v460 = vsel %vm458, %v457, 0
        %vm462 = vcmask 1045504
        %v464 = vsel %vm462, %v417, 0
        %v467 = vsel %vm462, %v418, 0
        %v470 = vsel %vm462, %v419, 0
        %v473 = vsel %vm462, %v420, 0
        %v476 = vsel %vm462, %v421, 0
        %v479 = vsel %vm462, %v422, 0
        %v482 = vsel %vm462, %v423, 0
        %v485 = vsel %vm462, %v424, 0
        %487 = vmatpush.msra.mxu0 0.0
        %488 = vmatpush.msra.mxu0 0.0
        %489 = vmatpush.msra.mxu0 0.0
        %490 = vmatpush.msra.mxu0 0.0
        %491 = vmatpush.msra.mxu0 0.0
        %492 = vmatpush.msra.mxu0 0.0
        %493 = vmatpush.msra.mxu0 0.0
        %494 = vmatpush.msra.mxu0 0.0
        %495 = vmatpush.msra.mxu0 0.0
        %496 = vmatpush.msra.mxu0 0.0
        %497 = vmatpush.msra.mxu0 0.0
        %498 = vmatpush.msra.mxu0 0.0
        %499 = vmatpush.msra.mxu0 0.0
        %500 = vmatpush.msra.mxu0 0.0
        %501 = vmatpush.msra.mxu0 0.0
        %502 = vmatpush.msra.mxu0 %v464
        %503 = vmatmul.f32.gmra.mxu0 %v460
        %v504 = vpop.f32.mrf.mxu0
        %v505 = vadd.f32 0.0, %v504
        %506 = vdwg.mxu0
        %507 = vmatpush.msra.mxu0 0.0
        %508 = vmatpush.msra.mxu0 0.0
        %509 = vmatpush.msra.mxu0 0.0
        %510 = vmatpush.msra.mxu0 0.0
        %511 = vmatpush.msra.mxu0 0.0
        %512 = vmatpush.msra.mxu0 0.0
        %513 = vmatpush.msra.mxu0 0.0
        %514 = vmatpush.msra.mxu0 0.0
        %515 = vmatpush.msra.mxu0 0.0
        %516 = vmatpush.msra.mxu0 0.0
        %517 = vmatpush.msra.mxu0 0.0
        %518 = vmatpush.msra.mxu0 0.0
        %519 = vmatpush.msra.mxu0 0.0
        %520 = vmatpush.msra.mxu0 0.0
        %521 = vmatpush.msra.mxu0 0.0
        %522 = vmatpush.msra.mxu0 %v467
        %523 = vmatmul.f32.gmra.mxu0 %v460
        %v524 = vpop.f32.mrf.mxu0
        %v525 = vadd.f32 0.0, %v524
        %526 = vdwg.mxu0
        %527 = vmatpush.msra.mxu0 0.0
        %528 = vmatpush.msra.mxu0 0.0
        %529 = vmatpush.msra.mxu0 0.0
        %530 = vmatpush.msra.mxu0 0.0
        %531 = vmatpush.msra.mxu0 0.0
        %532 = vmatpush.msra.mxu0 0.0
        %533 = vmatpush.msra.mxu0 0.0
        %534 = vmatpush.msra.mxu0 0.0
        %535 = vmatpush.msra.mxu0 0.0
        %536 = vmatpush.msra.mxu0 0.0
        %537 = vmatpush.msra.mxu0 0.0
        %538 = vmatpush.msra.mxu0 0.0
        %539 = vmatpush.msra.mxu0 0.0
        %540 = vmatpush.msra.mxu0 0.0
        %541 = vmatpush.msra.mxu0 0.0
        %542 = vmatpush.msra.mxu0 %v470
        %543 = vmatmul.f32.gmra.mxu0 %v460
        %v544 = vpop.f32.mrf.mxu0
        %v545 = vadd.f32 0.0, %v544
        %546 = vdwg.mxu0
        %547 = vmatpush.msra.mxu0 0.0
        %548 = vmatpush.msra.mxu0 0.0
        %549 = vmatpush.msra.mxu0 0.0
        %550 = vmatpush.msra.mxu0 0.0
        %551 = vmatpush.msra.mxu0 0.0
        %552 = vmatpush.msra.mxu0 0.0
        %553 = vmatpush.msra.mxu0 0.0
        %554 = vmatpush.msra.mxu0 0.0
        %555 = vmatpush.msra.mxu0 0.0
        %556 = vmatpush.msra.mxu0 0.0
        %557 = vmatpush.msra.mxu0 0.0
        %558 = vmatpush.msra.mxu0 0.0
        %559 = vmatpush.msra.mxu0 0.0
        %560 = vmatpush.msra.mxu0 0.0
        %561 = vmatpush.msra.mxu0 0.0
        %562 = vmatpush.msra.mxu0 %v473
        %563 = vmatmul.f32.gmra.mxu0 %v460
        %v564 = vpop.f32.mrf.mxu0
        %v565 = vadd.f32 0.0, %v564
        %566 = vdwg.mxu0
        %567 = vmatpush.msra.mxu0 0.0
        %568 = vmatpush.msra.mxu0 0.0
        %569 = vmatpush.msra.mxu0 0.0
        %570 = vmatpush.msra.mxu0 0.0
        %571 = vmatpush.msra.mxu0 0.0
        %572 = vmatpush.msra.mxu0 0.0
        %573 = vmatpush.msra.mxu0 0.0
        %574 = vmatpush.msra.mxu0 0.0
        %575 = vmatpush.msra.mxu0 0.0
        %576 = vmatpush.msra.mxu0 0.0
        %577 = vmatpush.msra.mxu0 0.0
        %578 = vmatpush.msra.mxu0 0.0
        %579 = vmatpush.msra.mxu0 0.0
        %580 = vmatpush.msra.mxu0 0.0
        %581 = vmatpush.msra.mxu0 0.0
        %582 = vmatpush.msra.mxu0 %v476
        %583 = vmatmul.f32.gmra.mxu0 %v460
        %v584 = vpop.f32.mrf.mxu0
        %v585 = vadd.f32 0.0, %v584
        %586 = vdwg.mxu0
        %587 = vmatpush.msra.mxu0 0.0
        %588 = vmatpush.msra.mxu0 0.0
        %589 = vmatpush.msra.mxu0 0.0
        %590 = vmatpush.msra.mxu0 0.0
        %591 = vmatpush.msra.mxu0 0.0
        %592 = vmatpush.msra.mxu0 0.0
        %593 = vmatpush.msra.mxu0 0.0
        %594 = vmatpush.msra.mxu0 0.0
        %595 = vmatpush.msra.mxu0 0.0
        %596 = vmatpush.msra.mxu0 0.0
        %597 = vmatpush.msra.mxu0 0.0
        %598 = vmatpush.msra.mxu0 0.0
        %599 = vmatpush.msra.mxu0 0.0
        %600 = vmatpush.msra.mxu0 0.0
        %601 = vmatpush.msra.mxu0 0.0
        %602 = vmatpush.msra.mxu0 %v479
        %603 = vmatmul.f32.gmra.mxu0 %v460
        %v604 = vpop.f32.mrf.mxu0
        %v605 = vadd.f32 0.0, %v604
        %606 = vdwg.mxu0
        %607 = vmatpush.msra.mxu0 0.0
        %608 = vmatpush.msra.mxu0 0.0
        %609 = vmatpush.msra.mxu0 0.0
        %610 = vmatpush.msra.mxu0 0.0
        %611 = vmatpush.msra.mxu0 0.0
        %612 = vmatpush.msra.mxu0 0.0
        %613 = vmatpush.msra.mxu0 0.0
        %614 = vmatpush.msra.mxu0 0.0
        %615 = vmatpush.msra.mxu0 0.0
        %616 = vmatpush.msra.mxu0 0.0
        %617 = vmatpush.msra.mxu0 0.0
        %618 = vmatpush.msra.mxu0 0.0
        %619 = vmatpush.msra.mxu0 0.0
        %620 = vmatpush.msra.mxu0 0.0
        %621 = vmatpush.msra.mxu0 0.0
        %622 = vmatpush.msra.mxu0 %v482
        %623 = vmatmul.f32.gmra.mxu0 %v460
        %v624 = vpop.f32.mrf.mxu0
        %v625 = vadd.f32 0.0, %v624
        %626 = vdwg.mxu0
        %627 = vmatpush.msra.mxu0 0.0
        %628 = vmatpush.msra.mxu0 0.0
        %629 = vmatpush.msra.mxu0 0.0
        %630 = vmatpush.msra.mxu0 0.0
        %631 = vmatpush.msra.mxu0 0.0
        %632 = vmatpush.msra.mxu0 0.0
        %633 = vmatpush.msra.mxu0 0.0
        %634 = vmatpush.msra.mxu0 0.0
        %635 = vmatpush.msra.mxu0 0.0
        %636 = vmatpush.msra.mxu0 0.0
        %637 = vmatpush.msra.mxu0 0.0
        %638 = vmatpush.msra.mxu0 0.0
        %639 = vmatpush.msra.mxu0 0.0
        %640 = vmatpush.msra.mxu0 0.0
        %641 = vmatpush.msra.mxu0 0.0
        %642 = vmatpush.msra.mxu0 %v485
        %643 = vmatmul.f32.gmra.mxu0 %v460
        %v644 = vpop.f32.mrf.mxu0
        %v645 = vadd.f32 0.0, %v644
        %646 = vdwg.mxu0
        %v647 = vld [vmem:[%s4] sm:$0xff]
        %v648 = vld [vmem:[%s4 + $0x8] sm:$0xff]
        %v649 = vld [vmem:[%s4 + $0x10] sm:$0xff]
        %v650 = vld [vmem:[%s4 + $0x18] sm:$0xff]
        %655 = vst [vmem:[#allocation1] ss:$2 sm:$0xff] %v647
        %s656 = scalar_lea.vmem [#allocation1], 16
        %657 = vst [vmem:[%s656] ss:$2 sm:$0xff] %v648
        %s658 = scalar_lea.vmem [#allocation1], 32
        %659 = vst [vmem:[%s658] ss:$2 sm:$0xff] %v649
        %s660 = scalar_lea.vmem [#allocation1], 48
        %661 = vst [vmem:[%s660] ss:$2 sm:$0xff] %v650
        %v662 = vld.sshfl [vmem:[#allocation1] sm:$0xff pattern:$0x75316420]
        %v663 = vld.sshfl [vmem:[#allocation1 + $0x8] sm:$0xff pattern:$0x75316420]
        %v664 = vld.sshfl [vmem:[#allocation1 + $0x10] sm:$0xff pattern:$0x75316420]
        %v665 = vld.sshfl [vmem:[#allocation1 + $0x18] sm:$0xff pattern:$0x75316420]
        %v666 = vld.sshfl [vmem:[#allocation1 + $0x20] sm:$0xff pattern:$0x75316420]
        %v667 = vld.sshfl [vmem:[#allocation1 + $0x28] sm:$0xff pattern:$0x75316420]
        %v668 = vld.sshfl [vmem:[#allocation1 + $0x30] sm:$0xff pattern:$0x75316420]
        %v669 = vld.sshfl [vmem:[#allocation1 + $0x38] sm:$0xff pattern:$0x75316420]
        %v678 = vmul.f32 %v505, %v662
        %v679 = vmul.f32 %v525, %v663
        %v680 = vmul.f32 %v545, %v664
        %v681 = vmul.f32 %v565, %v665
        %v682 = vmul.f32 %v585, %v666
        %v683 = vmul.f32 %v605, %v667
        %v684 = vmul.f32 %v625, %v668
        %v685 = vmul.f32 %v645, %v669
        %v686 = vld [vmem:[%s5] sm:$0xf]
        %688 = vset.pattern.permute.xlu0 0
        %689 = vperm.xlu0 %688, %v686
        %v690 = vpop.permute.xlu0 %689
        %v692 = vsub.f32 %v678, %v690
        %v693 = vsub.f32 %v679, %v690
        %v694 = vsub.f32 %v680, %v690
        %v695 = vsub.f32 %v681, %v690
        %v696 = vsub.f32 %v682, %v690
        %v697 = vsub.f32 %v683, %v690
        %v698 = vsub.f32 %v684, %v690
        %v699 = vsub.f32 %v685, %v690
        %v700 = vmul.f32 %v692, 0.5
        %v701 = vmul.f32 %v693, 0.5
        %v702 = vmul.f32 %v694, 0.5
        %v703 = vmul.f32 %v695, 0.5
        %v704 = vmul.f32 %v696, 0.5
        %v705 = vmul.f32 %v697, 0.5
        %v706 = vmul.f32 %v698, 0.5
        %v707 = vmul.f32 %v699, 0.5
        %v708 = vadd.f32 %v700, 0.5
        %v709 = vadd.f32 %v701, 0.5
        %v710 = vadd.f32 %v702, 0.5
        %v711 = vadd.f32 %v703, 0.5
        %v712 = vadd.f32 %v704, 0.5
        %v713 = vadd.f32 %v705, 0.5
        %v714 = vadd.f32 %v706, 0.5
        %v715 = vadd.f32 %v707, 0.5
        %v716 = vmax.f32 %v708, 0.0
        %v717 = vmax.f32 %v709, 0.0
        %v718 = vmax.f32 %v710, 0.0
        %v719 = vmax.f32 %v711, 0.0
        %v720 = vmax.f32 %v712, 0.0
        %v721 = vmax.f32 %v713, 0.0
        %v722 = vmax.f32 %v714, 0.0
        %v723 = vmax.f32 %v715, 0.0
        %v724 = vmin.f32 %v716, 1.0
        %v725 = vmin.f32 %v717, 1.0
        %v726 = vmin.f32 %v718, 1.0
        %v727 = vmin.f32 %v719, 1.0
        %v728 = vmin.f32 %v720, 1.0
        %v729 = vmin.f32 %v721, 1.0
        %v730 = vmin.f32 %v722, 1.0
        %v731 = vmin.f32 %v723, 1.0
        %v740 = vrot.slane %v725, 7
        %v741 = vrot.slane %v726, 6
        %v742 = vrot.slane %v727, 5
        %v743 = vrot.slane %v728, 4
        %v744 = vrot.slane %v729, 3
        %v745 = vrot.slane %v730, 2
        %v746 = vrot.slane %v731, 1
        %vm747 = vcmask 1040384
        %v748 = vsel %vm747, %v724, %v740
        %vm749 = vcmask 1042434
        %v750 = vsel %vm749, %v741, %v742
        %vm751 = vcmask 1041408
        %v752 = vsel %vm751, %v748, %v750
        %vm753 = vcmask 1044484
        %v754 = vsel %vm753, %v743, %v744
        %vm755 = vcmask 1046534
        %v756 = vsel %vm755, %v745, %v746
        %vm757 = vcmask 1045508
        %v758 = vsel %vm757, %v754, %v756
        %vm759 = vcmask 1043456
        %v760 = vsel %vm759, %v752, %v758
        %vm761 = vcmask 1041409
        %v762 = vsel %vm761, %v724, %v740
        %vm763 = vcmask 1043459
        %v764 = vsel %vm763, %v741, %v742
        %vm765 = vcmask 1042433
        %v766 = vsel %vm765, %v762, %v764
        %vm767 = vcmask 1045509
        %v768 = vsel %vm767, %v743, %v744
        %vm769 = vcmask 1046528
        %v770 = vsel %vm769, %v746, %v745
        %vm771 = vcmask 1046533
        %v772 = vsel %vm771, %v768, %v770
        %vm773 = vcmask 1044481
        %v774 = vsel %vm773, %v766, %v772
        %v775 = vrot.slane %v774, 1
        %v776 = vsel %vm749, %v724, %v740
        %v777 = vsel %vm753, %v741, %v742
        %vm778 = vcmask 1043458
        %v779 = vsel %vm778, %v776, %v777
        %v780 = vsel %vm755, %v743, %v744
        %v781 = vsel %vm747, %v745, %v746
        %v782 = vsel %vm462, %v781, %v780
        %vm783 = vcmask 1045506
        %v784 = vsel %vm783, %v779, %v782
        %v785 = vrot.slane %v784, 2
        %v786 = vsel %vm763, %v724, %v740
        %v787 = vsel %vm767, %v741, %v742
        %vm788 = vcmask 1044483
        %v789 = vsel %vm788, %v786, %v787
        %v790 = vsel %vm769, %v744, %v743
        %v791 = vsel %vm761, %v745, %v746
        %vm792 = vcmask 1046529
        %v793 = vsel %vm792, %v791, %v790
        %vm794 = vcmask 1046531
        %v795 = vsel %vm794, %v789, %v793
        %v796 = vrot.slane %v795, 3
        %798 = vset.pattern.permute.xlu0 0
        %799 = vperm.xlu0 %798, %v414
        %v800 = vpop.permute.xlu0 %799
        %v802 = vperm.slane %v760, 0
        %v803 = vperm.slane %v760, 1
        %v804 = vperm.slane %v760, 2
        %v805 = vperm.slane %v760, 3
        %v806 = vperm.slane %v760, 4
        %v807 = vperm.slane %v760, 5
        %v808 = vperm.slane %v760, 6
        %v809 = vperm.slane %v760, 7
        %v810 = vperm.slane %v775, 0
        %v811 = vperm.slane %v775, 1
        %v812 = vperm.slane %v775, 2
        %v813 = vperm.slane %v775, 3
        %v814 = vperm.slane %v775, 4
        %v815 = vperm.slane %v775, 5
        %v816 = vperm.slane %v775, 6
        %v817 = vperm.slane %v775, 7
        %v818 = vperm.slane %v785, 0
        %v819 = vperm.slane %v785, 1
        %v820 = vperm.slane %v785, 2
        %v821 = vperm.slane %v785, 3
        %v822 = vperm.slane %v785, 4
        %v823 = vperm.slane %v785, 5
        %v824 = vperm.slane %v785, 6
        %v825 = vperm.slane %v785, 7
        %v826 = vperm.slane %v796, 0
        %v827 = vperm.slane %v796, 1
        %v828 = vperm.slane %v796, 2
        %v829 = vperm.slane %v796, 3
        %v830 = vperm.slane %v796, 4
        %v831 = vperm.slane %v796, 5
        %v832 = vperm.slane %v796, 6
        %v833 = vperm.slane %v796, 7
        %v866 = vmul.f32 %v800, %v802
        %v867 = vmul.f32 %v800, %v803
        %v868 = vmul.f32 %v800, %v804
        %v869 = vmul.f32 %v800, %v805
        %v870 = vmul.f32 %v800, %v806
        %v871 = vmul.f32 %v800, %v807
        %v872 = vmul.f32 %v800, %v808
        %v873 = vmul.f32 %v800, %v809
        %v874 = vmul.f32 %v800, %v810
        %v875 = vmul.f32 %v800, %v811
        %v876 = vmul.f32 %v800, %v812
        %v877 = vmul.f32 %v800, %v813
        %v878 = vmul.f32 %v800, %v814
        %v879 = vmul.f32 %v800, %v815
        %v880 = vmul.f32 %v800, %v816
        %v881 = vmul.f32 %v800, %v817
        %v882 = vmul.f32 %v800, %v818
        %v883 = vmul.f32 %v800, %v819
        %v884 = vmul.f32 %v800, %v820
        %v885 = vmul.f32 %v800, %v821
        %v886 = vmul.f32 %v800, %v822
        %v887 = vmul.f32 %v800, %v823
        %v888 = vmul.f32 %v800, %v824
        %v889 = vmul.f32 %v800, %v825
        %v890 = vmul.f32 %v800, %v826
        %v891 = vmul.f32 %v800, %v827
        %v892 = vmul.f32 %v800, %v828
        %v893 = vmul.f32 %v800, %v829
        %v894 = vmul.f32 %v800, %v830
        %v895 = vmul.f32 %v800, %v831
        %v896 = vmul.f32 %v800, %v832
        %v897 = vmul.f32 %v800, %v833
        %899 = vset.pattern.permute.xlu0 0
        %900 = vperm.xlu0 %899, %v411
        %v901 = vpop.permute.xlu0 %900
        %v903 = vadd.f32 %v901, %v866
        %v904 = vadd.f32 %v901, %v867
        %v905 = vadd.f32 %v901, %v868
        %v906 = vadd.f32 %v901, %v869
        %v907 = vadd.f32 %v901, %v870
        %v908 = vadd.f32 %v901, %v871
        %v909 = vadd.f32 %v901, %v872
        %v910 = vadd.f32 %v901, %v873
        %v911 = vadd.f32 %v901, %v874
        %v912 = vadd.f32 %v901, %v875
        %v913 = vadd.f32 %v901, %v876
        %v914 = vadd.f32 %v901, %v877
        %v915 = vadd.f32 %v901, %v878
        %v916 = vadd.f32 %v901, %v879
        %v917 = vadd.f32 %v901, %v880
        %v918 = vadd.f32 %v901, %v881
        %v919 = vadd.f32 %v901, %v882
        %v920 = vadd.f32 %v901, %v883
        %v921 = vadd.f32 %v901, %v884
        %v922 = vadd.f32 %v901, %v885
        %v923 = vadd.f32 %v901, %v886
        %v924 = vadd.f32 %v901, %v887
        %v925 = vadd.f32 %v901, %v888
        %v926 = vadd.f32 %v901, %v889
        %v927 = vadd.f32 %v901, %v890
        %v928 = vadd.f32 %v901, %v891
        %v929 = vadd.f32 %v901, %v892
        %v930 = vadd.f32 %v901, %v893
        %v931 = vadd.f32 %v901, %v894
        %v932 = vadd.f32 %v901, %v895
        %v933 = vadd.f32 %v901, %v896
        %v934 = vadd.f32 %v901, %v897
        %v935 = vmul.f32 %v425, %v903
        %v936 = vmul.f32 %v426, %v904
        %v937 = vmul.f32 %v427, %v905
        %v938 = vmul.f32 %v428, %v906
        %v939 = vmul.f32 %v429, %v907
        %v940 = vmul.f32 %v430, %v908
        %v941 = vmul.f32 %v431, %v909
        %v942 = vmul.f32 %v432, %v910
        %v943 = vmul.f32 %v433, %v911
        %v944 = vmul.f32 %v434, %v912
        %v945 = vmul.f32 %v435, %v913
        %v946 = vmul.f32 %v436, %v914
        %v947 = vmul.f32 %v437, %v915
        %v948 = vmul.f32 %v438, %v916
        %v949 = vmul.f32 %v439, %v917
        %v950 = vmul.f32 %v440, %v918
        %v951 = vmul.f32 %v441, %v919
        %v952 = vmul.f32 %v442, %v920
        %v953 = vmul.f32 %v443, %v921
        %v954 = vmul.f32 %v444, %v922
        %v955 = vmul.f32 %v445, %v923
        %v956 = vmul.f32 %v446, %v924
        %v957 = vmul.f32 %v447, %v925
        %v958 = vmul.f32 %v448, %v926
        %v959 = vmul.f32 %v449, %v927
        %v960 = vmul.f32 %v450, %v928
        %v961 = vmul.f32 %v451, %v929
        %v962 = vmul.f32 %v452, %v930
        %v963 = vmul.f32 %v453, %v931
        %v964 = vmul.f32 %v454, %v932
        %v965 = vmul.f32 %v455, %v933
        %v966 = vmul.f32 %v456, %v934
        %s967 = scalar_lea.vmem %s3, 4
        %v968 = vld [vmem:[%s967] sm:$0xf]
        %v970 = vsel %vm458, %v968, 0
        %972 = vmatpush.msra.mxu0 0.0
        %973 = vmatpush.msra.mxu0 0.0
        %974 = vmatpush.msra.mxu0 0.0
        %975 = vmatpush.msra.mxu0 0.0
        %976 = vmatpush.msra.mxu0 0.0
        %977 = vmatpush.msra.mxu0 0.0
        %978 = vmatpush.msra.mxu0 0.0
        %979 = vmatpush.msra.mxu0 0.0
        %980 = vmatpush.msra.mxu0 0.0
        %981 = vmatpush.msra.mxu0 0.0
        %982 = vmatpush.msra.mxu0 0.0
        %983 = vmatpush.msra.mxu0 0.0
        %984 = vmatpush.msra.mxu0 0.0
        %985 = vmatpush.msra.mxu0 0.0
        %986 = vmatpush.msra.mxu0 0.0
        %987 = vmatpush.msra.mxu0 %v464
        %988 = vmatmul.f32.gmra.mxu0 %v970
        %v989 = vpop.f32.mrf.mxu0
        %v990 = vadd.f32 0.0, %v989
        %991 = vdwg.mxu0
        %992 = vmatpush.msra.mxu0 0.0
        %993 = vmatpush.msra.mxu0 0.0
        %994 = vmatpush.msra.mxu0 0.0
        %995 = vmatpush.msra.mxu0 0.0
        %996 = vmatpush.msra.mxu0 0.0
        %997 = vmatpush.msra.mxu0 0.0
        %998 = vmatpush.msra.mxu0 0.0
        %999 = vmatpush.msra.mxu0 0.0
        %1000 = vmatpush.msra.mxu0 0.0
        %1001 = vmatpush.msra.mxu0 0.0
        %1002 = vmatpush.msra.mxu0 0.0
        %1003 = vmatpush.msra.mxu0 0.0
        %1004 = vmatpush.msra.mxu0 0.0
        %1005 = vmatpush.msra.mxu0 0.0
        %1006 = vmatpush.msra.mxu0 0.0
        %1007 = vmatpush.msra.mxu0 %v467
        %1008 = vmatmul.f32.gmra.mxu0 %v970
        %v1009 = vpop.f32.mrf.mxu0
        %v1010 = vadd.f32 0.0, %v1009
        %1011 = vdwg.mxu0
        %1012 = vmatpush.msra.mxu0 0.0
        %1013 = vmatpush.msra.mxu0 0.0
        %1014 = vmatpush.msra.mxu0 0.0
        %1015 = vmatpush.msra.mxu0 0.0
        %1016 = vmatpush.msra.mxu0 0.0
        %1017 = vmatpush.msra.mxu0 0.0
        %1018 = vmatpush.msra.mxu0 0.0
        %1019 = vmatpush.msra.mxu0 0.0
        %1020 = vmatpush.msra.mxu0 0.0
        %1021 = vmatpush.msra.mxu0 0.0
        %1022 = vmatpush.msra.mxu0 0.0
        %1023 = vmatpush.msra.mxu0 0.0
        %1024 = vmatpush.msra.mxu0 0.0
        %1025 = vmatpush.msra.mxu0 0.0
        %1026 = vmatpush.msra.mxu0 0.0
        %1027 = vmatpush.msra.mxu0 %v470
        %1028 = vmatmul.f32.gmra.mxu0 %v970
        %v1029 = vpop.f32.mrf.mxu0
        %v1030 = vadd.f32 0.0, %v1029
        %1031 = vdwg.mxu0
        %1032 = vmatpush.msra.mxu0 0.0
        %1033 = vmatpush.msra.mxu0 0.0
        %1034 = vmatpush.msra.mxu0 0.0
        %1035 = vmatpush.msra.mxu0 0.0
        %1036 = vmatpush.msra.mxu0 0.0
        %1037 = vmatpush.msra.mxu0 0.0
        %1038 = vmatpush.msra.mxu0 0.0
        %1039 = vmatpush.msra.mxu0 0.0
        %1040 = vmatpush.msra.mxu0 0.0
        %1041 = vmatpush.msra.mxu0 0.0
        %1042 = vmatpush.msra.mxu0 0.0
        %1043 = vmatpush.msra.mxu0 0.0
        %1044 = vmatpush.msra.mxu0 0.0
        %1045 = vmatpush.msra.mxu0 0.0
        %1046 = vmatpush.msra.mxu0 0.0
        %1047 = vmatpush.msra.mxu0 %v473
        %1048 = vmatmul.f32.gmra.mxu0 %v970
        %v1049 = vpop.f32.mrf.mxu0
        %v1050 = vadd.f32 0.0, %v1049
        %1051 = vdwg.mxu0
        %1052 = vmatpush.msra.mxu0 0.0
        %1053 = vmatpush.msra.mxu0 0.0
        %1054 = vmatpush.msra.mxu0 0.0
        %1055 = vmatpush.msra.mxu0 0.0
        %1056 = vmatpush.msra.mxu0 0.0
        %1057 = vmatpush.msra.mxu0 0.0
        %1058 = vmatpush.msra.mxu0 0.0
        %1059 = vmatpush.msra.mxu0 0.0
        %1060 = vmatpush.msra.mxu0 0.0
        %1061 = vmatpush.msra.mxu0 0.0
        %1062 = vmatpush.msra.mxu0 0.0
        %1063 = vmatpush.msra.mxu0 0.0
        %1064 = vmatpush.msra.mxu0 0.0
        %1065 = vmatpush.msra.mxu0 0.0
        %1066 = vmatpush.msra.mxu0 0.0
        %1067 = vmatpush.msra.mxu0 %v476
        %1068 = vmatmul.f32.gmra.mxu0 %v970
        %v1069 = vpop.f32.mrf.mxu0
        %v1070 = vadd.f32 0.0, %v1069
        %1071 = vdwg.mxu0
        %1072 = vmatpush.msra.mxu0 0.0
        %1073 = vmatpush.msra.mxu0 0.0
        %1074 = vmatpush.msra.mxu0 0.0
        %1075 = vmatpush.msra.mxu0 0.0
        %1076 = vmatpush.msra.mxu0 0.0
        %1077 = vmatpush.msra.mxu0 0.0
        %1078 = vmatpush.msra.mxu0 0.0
        %1079 = vmatpush.msra.mxu0 0.0
        %1080 = vmatpush.msra.mxu0 0.0
        %1081 = vmatpush.msra.mxu0 0.0
        %1082 = vmatpush.msra.mxu0 0.0
        %1083 = vmatpush.msra.mxu0 0.0
        %1084 = vmatpush.msra.mxu0 0.0
        %1085 = vmatpush.msra.mxu0 0.0
        %1086 = vmatpush.msra.mxu0 0.0
        %1087 = vmatpush.msra.mxu0 %v479
        %1088 = vmatmul.f32.gmra.mxu0 %v970
        %v1089 = vpop.f32.mrf.mxu0
        %v1090 = vadd.f32 0.0, %v1089
        %1091 = vdwg.mxu0
        %1092 = vmatpush.msra.mxu0 0.0
        %1093 = vmatpush.msra.mxu0 0.0
        %1094 = vmatpush.msra.mxu0 0.0
        %1095 = vmatpush.msra.mxu0 0.0
        %1096 = vmatpush.msra.mxu0 0.0
        %1097 = vmatpush.msra.mxu0 0.0
        %1098 = vmatpush.msra.mxu0 0.0
        %1099 = vmatpush.msra.mxu0 0.0
        %1100 = vmatpush.msra.mxu0 0.0
        %1101 = vmatpush.msra.mxu0 0.0
        %1102 = vmatpush.msra.mxu0 0.0
        %1103 = vmatpush.msra.mxu0 0.0
        %1104 = vmatpush.msra.mxu0 0.0
        %1105 = vmatpush.msra.mxu0 0.0
        %1106 = vmatpush.msra.mxu0 0.0
        %1107 = vmatpush.msra.mxu0 %v482
        %1108 = vmatmul.f32.gmra.mxu0 %v970
        %v1109 = vpop.f32.mrf.mxu0
        %v1110 = vadd.f32 0.0, %v1109
        %1111 = vdwg.mxu0
        %1112 = vmatpush.msra.mxu0 0.0
        %1113 = vmatpush.msra.mxu0 0.0
        %1114 = vmatpush.msra.mxu0 0.0
        %1115 = vmatpush.msra.mxu0 0.0
        %1116 = vmatpush.msra.mxu0 0.0
        %1117 = vmatpush.msra.mxu0 0.0
        %1118 = vmatpush.msra.mxu0 0.0
        %1119 = vmatpush.msra.mxu0 0.0
        %1120 = vmatpush.msra.mxu0 0.0
        %1121 = vmatpush.msra.mxu0 0.0
        %1122 = vmatpush.msra.mxu0 0.0
        %1123 = vmatpush.msra.mxu0 0.0
        %1124 = vmatpush.msra.mxu0 0.0
        %1125 = vmatpush.msra.mxu0 0.0
        %1126 = vmatpush.msra.mxu0 0.0
        %1127 = vmatpush.msra.mxu0 %v485
        %1128 = vmatmul.f32.gmra.mxu0 %v970
        %v1129 = vpop.f32.mrf.mxu0
        %v1130 = vadd.f32 0.0, %v1129
        %1131 = vdwg.mxu0
        %s1132 = scalar_lea.vmem %s4, 32
        %v1133 = vld [vmem:[%s1132] sm:$0xff]
        %v1134 = vld [vmem:[%s1132 + $0x8] sm:$0xff]
        %v1135 = vld [vmem:[%s1132 + $0x10] sm:$0xff]
        %v1136 = vld [vmem:[%s1132 + $0x18] sm:$0xff]
        %1141 = vst [vmem:[#allocation1] ss:$2 sm:$0xff] %v1133
        %s1142 = scalar_lea.vmem [#allocation1], 16
        %1143 = vst [vmem:[%s1142] ss:$2 sm:$0xff] %v1134
        %s1144 = scalar_lea.vmem [#allocation1], 32
        %1145 = vst [vmem:[%s1144] ss:$2 sm:$0xff] %v1135
        %s1146 = scalar_lea.vmem [#allocation1], 48
        %1147 = vst [vmem:[%s1146] ss:$2 sm:$0xff] %v1136
        %v1148 = vld.sshfl [vmem:[#allocation1] sm:$0xff pattern:$0x75316420]
        %v1149 = vld.sshfl [vmem:[#allocation1 + $0x8] sm:$0xff pattern:$0x75316420]
        %v1150 = vld.sshfl [vmem:[#allocation1 + $0x10] sm:$0xff pattern:$0x75316420]
        %v1151 = vld.sshfl [vmem:[#allocation1 + $0x18] sm:$0xff pattern:$0x75316420]
        %v1152 = vld.sshfl [vmem:[#allocation1 + $0x20] sm:$0xff pattern:$0x75316420]
        %v1153 = vld.sshfl [vmem:[#allocation1 + $0x28] sm:$0xff pattern:$0x75316420]
        %v1154 = vld.sshfl [vmem:[#allocation1 + $0x30] sm:$0xff pattern:$0x75316420]
        %v1155 = vld.sshfl [vmem:[#allocation1 + $0x38] sm:$0xff pattern:$0x75316420]
        %v1164 = vmul.f32 %v990, %v1148
        %v1165 = vmul.f32 %v1010, %v1149
        %v1166 = vmul.f32 %v1030, %v1150
        %v1167 = vmul.f32 %v1050, %v1151
        %v1168 = vmul.f32 %v1070, %v1152
        %v1169 = vmul.f32 %v1090, %v1153
        %v1170 = vmul.f32 %v1110, %v1154
        %v1171 = vmul.f32 %v1130, %v1155
        %s1172 = scalar_lea.vmem %s5, 4
        %v1173 = vld [vmem:[%s1172] sm:$0xf]
        %1175 = vset.pattern.permute.xlu0 0
        %1176 = vperm.xlu0 %1175, %v1173
        %v1177 = vpop.permute.xlu0 %1176
        %v1179 = vsub.f32 %v1164, %v1177
        %v1180 = vsub.f32 %v1165, %v1177
        %v1181 = vsub.f32 %v1166, %v1177
        %v1182 = vsub.f32 %v1167, %v1177
        %v1183 = vsub.f32 %v1168, %v1177
        %v1184 = vsub.f32 %v1169, %v1177
        %v1185 = vsub.f32 %v1170, %v1177
        %v1186 = vsub.f32 %v1171, %v1177
        %v1187 = vmul.f32 %v1179, 0.5
        %v1188 = vmul.f32 %v1180, 0.5
        %v1189 = vmul.f32 %v1181, 0.5
        %v1190 = vmul.f32 %v1182, 0.5
        %v1191 = vmul.f32 %v1183, 0.5
        %v1192 = vmul.f32 %v1184, 0.5
        %v1193 = vmul.f32 %v1185, 0.5
        %v1194 = vmul.f32 %v1186, 0.5
        %v1195 = vadd.f32 %v1187, 0.5
        %v1196 = vadd.f32 %v1188, 0.5
        %v1197 = vadd.f32 %v1189, 0.5
        %v1198 = vadd.f32 %v1190, 0.5
        %v1199 = vadd.f32 %v1191, 0.5
        %v1200 = vadd.f32 %v1192, 0.5
        %v1201 = vadd.f32 %v1193, 0.5
        %v1202 = vadd.f32 %v1194, 0.5
        %v1203 = vmax.f32 %v1195, 0.0
        %v1204 = vmax.f32 %v1196, 0.0
        %v1205 = vmax.f32 %v1197, 0.0
        %v1206 = vmax.f32 %v1198, 0.0
        %v1207 = vmax.f32 %v1199, 0.0
        %v1208 = vmax.f32 %v1200, 0.0
        %v1209 = vmax.f32 %v1201, 0.0
        %v1210 = vmax.f32 %v1202, 0.0
        %v1211 = vmin.f32 %v1203, 1.0
        %v1212 = vmin.f32 %v1204, 1.0
        %v1213 = vmin.f32 %v1205, 1.0
        %v1214 = vmin.f32 %v1206, 1.0
        %v1215 = vmin.f32 %v1207, 1.0
        %v1216 = vmin.f32 %v1208, 1.0
        %v1217 = vmin.f32 %v1209, 1.0
        %v1218 = vmin.f32 %v1210, 1.0
        %v1227 = vrot.slane %v1212, 7
        %v1228 = vrot.slane %v1213, 6
        %v1229 = vrot.slane %v1214, 5
        %v1230 = vrot.slane %v1215, 4
        %v1231 = vrot.slane %v1216, 3
        %v1232 = vrot.slane %v1217, 2
        %v1233 = vrot.slane %v1218, 1
        %v1234 = vsel %vm747, %v1211, %v1227
        %v1235 = vsel %vm749, %v1228, %v1229
        %v1236 = vsel %vm751, %v1234, %v1235
        %v1237 = vsel %vm753, %v1230, %v1231
        %v1238 = vsel %vm755, %v1232, %v1233
        %v1239 = vsel %vm757, %v1237, %v1238
        %v1240 = vsel %vm759, %v1236, %v1239
        %v1241 = vsel %vm761, %v1211, %v1227
        %v1242 = vsel %vm763, %v1228, %v1229
        %v1243 = vsel %vm765, %v1241, %v1242
        %v1244 = vsel %vm767, %v1230, %v1231
        %v1245 = vsel %vm769, %v1233, %v1232
        %v1246 = vsel %vm771, %v1244, %v1245
        %v1247 = vsel %vm773, %v1243, %v1246
        %v1248 = vrot.slane %v1247, 1
        %v1249 = vsel %vm749, %v1211, %v1227
        %v1250 = vsel %vm753, %v1228, %v1229
        %v1251 = vsel %vm778, %v1249, %v1250
        %v1252 = vsel %vm755, %v1230, %v1231
        %v1253 = vsel %vm747, %v1232, %v1233
        %v1254 = vsel %vm462, %v1253, %v1252
        %v1255 = vsel %vm783, %v1251, %v1254
        %v1256 = vrot.slane %v1255, 2
        %v1257 = vsel %vm763, %v1211, %v1227
        %v1258 = vsel %vm767, %v1228, %v1229
        %v1259 = vsel %vm788, %v1257, %v1258
        %v1260 = vsel %vm769, %v1231, %v1230
        %v1261 = vsel %vm761, %v1232, %v1233
        %v1262 = vsel %vm792, %v1261, %v1260
        %v1263 = vsel %vm794, %v1259, %v1262
        %v1264 = vrot.slane %v1263, 3
        %1266 = vset.pattern.permute.xlu0 0
        %1267 = vperm.xlu0 %1266, %v415
        %v1268 = vpop.permute.xlu0 %1267
        %v1270 = vperm.slane %v1240, 0
        %v1271 = vperm.slane %v1240, 1
        %v1272 = vperm.slane %v1240, 2
        %v1273 = vperm.slane %v1240, 3
        %v1274 = vperm.slane %v1240, 4
        %v1275 = vperm.slane %v1240, 5
        %v1276 = vperm.slane %v1240, 6
        %v1277 = vperm.slane %v1240, 7
        %v1278 = vperm.slane %v1248, 0
        %v1279 = vperm.slane %v1248, 1
        %v1280 = vperm.slane %v1248, 2
        %v1281 = vperm.slane %v1248, 3
        %v1282 = vperm.slane %v1248, 4
        %v1283 = vperm.slane %v1248, 5
        %v1284 = vperm.slane %v1248, 6
        %v1285 = vperm.slane %v1248, 7
        %v1286 = vperm.slane %v1256, 0
        %v1287 = vperm.slane %v1256, 1
        %v1288 = vperm.slane %v1256, 2
        %v1289 = vperm.slane %v1256, 3
        %v1290 = vperm.slane %v1256, 4
        %v1291 = vperm.slane %v1256, 5
        %v1292 = vperm.slane %v1256, 6
        %v1293 = vperm.slane %v1256, 7
        %v1294 = vperm.slane %v1264, 0
        %v1295 = vperm.slane %v1264, 1
        %v1296 = vperm.slane %v1264, 2
        %v1297 = vperm.slane %v1264, 3
        %v1298 = vperm.slane %v1264, 4
        %v1299 = vperm.slane %v1264, 5
        %v1300 = vperm.slane %v1264, 6
        %v1301 = vperm.slane %v1264, 7
        %v1334 = vmul.f32 %v1268, %v1270
        %v1335 = vmul.f32 %v1268, %v1271
        %v1336 = vmul.f32 %v1268, %v1272
        %v1337 = vmul.f32 %v1268, %v1273
        %v1338 = vmul.f32 %v1268, %v1274
        %v1339 = vmul.f32 %v1268, %v1275
        %v1340 = vmul.f32 %v1268, %v1276
        %v1341 = vmul.f32 %v1268, %v1277
        %v1342 = vmul.f32 %v1268, %v1278
        %v1343 = vmul.f32 %v1268, %v1279
        %v1344 = vmul.f32 %v1268, %v1280
        %v1345 = vmul.f32 %v1268, %v1281
        %v1346 = vmul.f32 %v1268, %v1282
        %v1347 = vmul.f32 %v1268, %v1283
        %v1348 = vmul.f32 %v1268, %v1284
        %v1349 = vmul.f32 %v1268, %v1285
        %v1350 = vmul.f32 %v1268, %v1286
        %v1351 = vmul.f32 %v1268, %v1287
        %v1352 = vmul.f32 %v1268, %v1288
        %v1353 = vmul.f32 %v1268, %v1289
        %v1354 = vmul.f32 %v1268, %v1290
        %v1355 = vmul.f32 %v1268, %v1291
        %v1356 = vmul.f32 %v1268, %v1292
        %v1357 = vmul.f32 %v1268, %v1293
        %v1358 = vmul.f32 %v1268, %v1294
        %v1359 = vmul.f32 %v1268, %v1295
        %v1360 = vmul.f32 %v1268, %v1296
        %v1361 = vmul.f32 %v1268, %v1297
        %v1362 = vmul.f32 %v1268, %v1298
        %v1363 = vmul.f32 %v1268, %v1299
        %v1364 = vmul.f32 %v1268, %v1300
        %v1365 = vmul.f32 %v1268, %v1301
        %1367 = vset.pattern.permute.xlu0 0
        %1368 = vperm.xlu0 %1367, %v412
        %v1369 = vpop.permute.xlu0 %1368
        %v1371 = vadd.f32 %v1369, %v1334
        %v1372 = vadd.f32 %v1369, %v1335
        %v1373 = vadd.f32 %v1369, %v1336
        %v1374 = vadd.f32 %v1369, %v1337
        %v1375 = vadd.f32 %v1369, %v1338
        %v1376 = vadd.f32 %v1369, %v1339
        %v1377 = vadd.f32 %v1369, %v1340
        %v1378 = vadd.f32 %v1369, %v1341
        %v1379 = vadd.f32 %v1369, %v1342
        %v1380 = vadd.f32 %v1369, %v1343
        %v1381 = vadd.f32 %v1369, %v1344
        %v1382 = vadd.f32 %v1369, %v1345
        %v1383 = vadd.f32 %v1369, %v1346
        %v1384 = vadd.f32 %v1369, %v1347
        %v1385 = vadd.f32 %v1369, %v1348
        %v1386 = vadd.f32 %v1369, %v1349
        %v1387 = vadd.f32 %v1369, %v1350
        %v1388 = vadd.f32 %v1369, %v1351
        %v1389 = vadd.f32 %v1369, %v1352
        %v1390 = vadd.f32 %v1369, %v1353
        %v1391 = vadd.f32 %v1369, %v1354
        %v1392 = vadd.f32 %v1369, %v1355
        %v1393 = vadd.f32 %v1369, %v1356
        %v1394 = vadd.f32 %v1369, %v1357
        %v1395 = vadd.f32 %v1369, %v1358
        %v1396 = vadd.f32 %v1369, %v1359
        %v1397 = vadd.f32 %v1369, %v1360
        %v1398 = vadd.f32 %v1369, %v1361
        %v1399 = vadd.f32 %v1369, %v1362
        %v1400 = vadd.f32 %v1369, %v1363
        %v1401 = vadd.f32 %v1369, %v1364
        %v1402 = vadd.f32 %v1369, %v1365
        %v1403 = vmul.f32 %v935, %v1371
        %v1404 = vmul.f32 %v936, %v1372
        %v1405 = vmul.f32 %v937, %v1373
        %v1406 = vmul.f32 %v938, %v1374
        %v1407 = vmul.f32 %v939, %v1375
        %v1408 = vmul.f32 %v940, %v1376
        %v1409 = vmul.f32 %v941, %v1377
        %v1410 = vmul.f32 %v942, %v1378
        %v1411 = vmul.f32 %v943, %v1379
        %v1412 = vmul.f32 %v944, %v1380
        %v1413 = vmul.f32 %v945, %v1381
        %v1414 = vmul.f32 %v946, %v1382
        %v1415 = vmul.f32 %v947, %v1383
        %v1416 = vmul.f32 %v948, %v1384
        %v1417 = vmul.f32 %v949, %v1385
        %v1418 = vmul.f32 %v950, %v1386
        %v1419 = vmul.f32 %v951, %v1387
        %v1420 = vmul.f32 %v952, %v1388
        %v1421 = vmul.f32 %v953, %v1389
        %v1422 = vmul.f32 %v954, %v1390
        %v1423 = vmul.f32 %v955, %v1391
        %v1424 = vmul.f32 %v956, %v1392
        %v1425 = vmul.f32 %v957, %v1393
        %v1426 = vmul.f32 %v958, %v1394
        %v1427 = vmul.f32 %v959, %v1395
        %v1428 = vmul.f32 %v960, %v1396
        %v1429 = vmul.f32 %v961, %v1397
        %v1430 = vmul.f32 %v962, %v1398
        %v1431 = vmul.f32 %v963, %v1399
        %v1432 = vmul.f32 %v964, %v1400
        %v1433 = vmul.f32 %v965, %v1401
        %v1434 = vmul.f32 %v966, %v1402
        %s1435 = scalar_lea.vmem %s3, 8
        %v1436 = vld [vmem:[%s1435] sm:$0xf]
        %v1438 = vsel %vm458, %v1436, 0
        %1440 = vmatpush.msra.mxu0 0.0
        %1441 = vmatpush.msra.mxu0 0.0
        %1442 = vmatpush.msra.mxu0 0.0
        %1443 = vmatpush.msra.mxu0 0.0
        %1444 = vmatpush.msra.mxu0 0.0
        %1445 = vmatpush.msra.mxu0 0.0
        %1446 = vmatpush.msra.mxu0 0.0
        %1447 = vmatpush.msra.mxu0 0.0
        %1448 = vmatpush.msra.mxu0 0.0
        %1449 = vmatpush.msra.mxu0 0.0
        %1450 = vmatpush.msra.mxu0 0.0
        %1451 = vmatpush.msra.mxu0 0.0
        %1452 = vmatpush.msra.mxu0 0.0
        %1453 = vmatpush.msra.mxu0 0.0
        %1454 = vmatpush.msra.mxu0 0.0
        %1455 = vmatpush.msra.mxu0 %v464
        %1456 = vmatmul.f32.gmra.mxu0 %v1438
        %v1457 = vpop.f32.mrf.mxu0
        %v1458 = vadd.f32 0.0, %v1457
        %1459 = vdwg.mxu0
        %1460 = vmatpush.msra.mxu0 0.0
        %1461 = vmatpush.msra.mxu0 0.0
        %1462 = vmatpush.msra.mxu0 0.0
        %1463 = vmatpush.msra.mxu0 0.0
        %1464 = vmatpush.msra.mxu0 0.0
        %1465 = vmatpush.msra.mxu0 0.0
        %1466 = vmatpush.msra.mxu0 0.0
        %1467 = vmatpush.msra.mxu0 0.0
        %1468 = vmatpush.msra.mxu0 0.0
        %1469 = vmatpush.msra.mxu0 0.0
        %1470 = vmatpush.msra.mxu0 0.0
        %1471 = vmatpush.msra.mxu0 0.0
        %1472 = vmatpush.msra.mxu0 0.0
        %1473 = vmatpush.msra.mxu0 0.0
        %1474 = vmatpush.msra.mxu0 0.0
        %1475 = vmatpush.msra.mxu0 %v467
        %1476 = vmatmul.f32.gmra.mxu0 %v1438
        %v1477 = vpop.f32.mrf.mxu0
        %v1478 = vadd.f32 0.0, %v1477
        %1479 = vdwg.mxu0
        %1480 = vmatpush.msra.mxu0 0.0
        %1481 = vmatpush.msra.mxu0 0.0
        %1482 = vmatpush.msra.mxu0 0.0
        %1483 = vmatpush.msra.mxu0 0.0
        %1484 = vmatpush.msra.mxu0 0.0
        %1485 = vmatpush.msra.mxu0 0.0
        %1486 = vmatpush.msra.mxu0 0.0
        %1487 = vmatpush.msra.mxu0 0.0
        %1488 = vmatpush.msra.mxu0 0.0
        %1489 = vmatpush.msra.mxu0 0.0
        %1490 = vmatpush.msra.mxu0 0.0
        %1491 = vmatpush.msra.mxu0 0.0
        %1492 = vmatpush.msra.mxu0 0.0
        %1493 = vmatpush.msra.mxu0 0.0
        %1494 = vmatpush.msra.mxu0 0.0
        %1495 = vmatpush.msra.mxu0 %v470
        %1496 = vmatmul.f32.gmra.mxu0 %v1438
        %v1497 = vpop.f32.mrf.mxu0
        %v1498 = vadd.f32 0.0, %v1497
        %1499 = vdwg.mxu0
        %1500 = vmatpush.msra.mxu0 0.0
        %1501 = vmatpush.msra.mxu0 0.0
        %1502 = vmatpush.msra.mxu0 0.0
        %1503 = vmatpush.msra.mxu0 0.0
        %1504 = vmatpush.msra.mxu0 0.0
        %1505 = vmatpush.msra.mxu0 0.0
        %1506 = vmatpush.msra.mxu0 0.0
        %1507 = vmatpush.msra.mxu0 0.0
        %1508 = vmatpush.msra.mxu0 0.0
        %1509 = vmatpush.msra.mxu0 0.0
        %1510 = vmatpush.msra.mxu0 0.0
        %1511 = vmatpush.msra.mxu0 0.0
        %1512 = vmatpush.msra.mxu0 0.0
        %1513 = vmatpush.msra.mxu0 0.0
        %1514 = vmatpush.msra.mxu0 0.0
        %1515 = vmatpush.msra.mxu0 %v473
        %1516 = vmatmul.f32.gmra.mxu0 %v1438
        %v1517 = vpop.f32.mrf.mxu0
        %v1518 = vadd.f32 0.0, %v1517
        %1519 = vdwg.mxu0
        %1520 = vmatpush.msra.mxu0 0.0
        %1521 = vmatpush.msra.mxu0 0.0
        %1522 = vmatpush.msra.mxu0 0.0
        %1523 = vmatpush.msra.mxu0 0.0
        %1524 = vmatpush.msra.mxu0 0.0
        %1525 = vmatpush.msra.mxu0 0.0
        %1526 = vmatpush.msra.mxu0 0.0
        %1527 = vmatpush.msra.mxu0 0.0
        %1528 = vmatpush.msra.mxu0 0.0
        %1529 = vmatpush.msra.mxu0 0.0
        %1530 = vmatpush.msra.mxu0 0.0
        %1531 = vmatpush.msra.mxu0 0.0
        %1532 = vmatpush.msra.mxu0 0.0
        %1533 = vmatpush.msra.mxu0 0.0
        %1534 = vmatpush.msra.mxu0 0.0
        %1535 = vmatpush.msra.mxu0 %v476
        %1536 = vmatmul.f32.gmra.mxu0 %v1438
        %v1537 = vpop.f32.mrf.mxu0
        %v1538 = vadd.f32 0.0, %v1537
        %1539 = vdwg.mxu0
        %1540 = vmatpush.msra.mxu0 0.0
        %1541 = vmatpush.msra.mxu0 0.0
        %1542 = vmatpush.msra.mxu0 0.0
        %1543 = vmatpush.msra.mxu0 0.0
        %1544 = vmatpush.msra.mxu0 0.0
        %1545 = vmatpush.msra.mxu0 0.0
        %1546 = vmatpush.msra.mxu0 0.0
        %1547 = vmatpush.msra.mxu0 0.0
        %1548 = vmatpush.msra.mxu0 0.0
        %1549 = vmatpush.msra.mxu0 0.0
        %1550 = vmatpush.msra.mxu0 0.0
        %1551 = vmatpush.msra.mxu0 0.0
        %1552 = vmatpush.msra.mxu0 0.0
        %1553 = vmatpush.msra.mxu0 0.0
        %1554 = vmatpush.msra.mxu0 0.0
        %1555 = vmatpush.msra.mxu0 %v479
        %1556 = vmatmul.f32.gmra.mxu0 %v1438
        %v1557 = vpop.f32.mrf.mxu0
        %v1558 = vadd.f32 0.0, %v1557
        %1559 = vdwg.mxu0
        %1560 = vmatpush.msra.mxu0 0.0
        %1561 = vmatpush.msra.mxu0 0.0
        %1562 = vmatpush.msra.mxu0 0.0
        %1563 = vmatpush.msra.mxu0 0.0
        %1564 = vmatpush.msra.mxu0 0.0
        %1565 = vmatpush.msra.mxu0 0.0
        %1566 = vmatpush.msra.mxu0 0.0
        %1567 = vmatpush.msra.mxu0 0.0
        %1568 = vmatpush.msra.mxu0 0.0
        %1569 = vmatpush.msra.mxu0 0.0
        %1570 = vmatpush.msra.mxu0 0.0
        %1571 = vmatpush.msra.mxu0 0.0
        %1572 = vmatpush.msra.mxu0 0.0
        %1573 = vmatpush.msra.mxu0 0.0
        %1574 = vmatpush.msra.mxu0 0.0
        %1575 = vmatpush.msra.mxu0 %v482
        %1576 = vmatmul.f32.gmra.mxu0 %v1438
        %v1577 = vpop.f32.mrf.mxu0
        %v1578 = vadd.f32 0.0, %v1577
        %1579 = vdwg.mxu0
        %1580 = vmatpush.msra.mxu0 0.0
        %1581 = vmatpush.msra.mxu0 0.0
        %1582 = vmatpush.msra.mxu0 0.0
        %1583 = vmatpush.msra.mxu0 0.0
        %1584 = vmatpush.msra.mxu0 0.0
        %1585 = vmatpush.msra.mxu0 0.0
        %1586 = vmatpush.msra.mxu0 0.0
        %1587 = vmatpush.msra.mxu0 0.0
        %1588 = vmatpush.msra.mxu0 0.0
        %1589 = vmatpush.msra.mxu0 0.0
        %1590 = vmatpush.msra.mxu0 0.0
        %1591 = vmatpush.msra.mxu0 0.0
        %1592 = vmatpush.msra.mxu0 0.0
        %1593 = vmatpush.msra.mxu0 0.0
        %1594 = vmatpush.msra.mxu0 0.0
        %1595 = vmatpush.msra.mxu0 %v485
        %1596 = vmatmul.f32.gmra.mxu0 %v1438
        %v1597 = vpop.f32.mrf.mxu0
        %v1598 = vadd.f32 0.0, %v1597
        %1599 = vdwg.mxu0
        %s1600 = scalar_lea.vmem %s4, 64
        %v1601 = vld [vmem:[%s1600] sm:$0xff]
        %v1602 = vld [vmem:[%s1600 + $0x8] sm:$0xff]
        %v1603 = vld [vmem:[%s1600 + $0x10] sm:$0xff]
        %v1604 = vld [vmem:[%s1600 + $0x18] sm:$0xff]
        %1609 = vst [vmem:[#allocation1] ss:$2 sm:$0xff] %v1601
        %s1610 = scalar_lea.vmem [#allocation1], 16
        %1611 = vst [vmem:[%s1610] ss:$2 sm:$0xff] %v1602
        %s1612 = scalar_lea.vmem [#allocation1], 32
        %1613 = vst [vmem:[%s1612] ss:$2 sm:$0xff] %v1603
        %s1614 = scalar_lea.vmem [#allocation1], 48
        %1615 = vst [vmem:[%s1614] ss:$2 sm:$0xff] %v1604
        %v1616 = vld.sshfl [vmem:[#allocation1] sm:$0xff pattern:$0x75316420]
        %v1617 = vld.sshfl [vmem:[#allocation1 + $0x8] sm:$0xff pattern:$0x75316420]
        %v1618 = vld.sshfl [vmem:[#allocation1 + $0x10] sm:$0xff pattern:$0x75316420]
        %v1619 = vld.sshfl [vmem:[#allocation1 + $0x18] sm:$0xff pattern:$0x75316420]
        %v1620 = vld.sshfl [vmem:[#allocation1 + $0x20] sm:$0xff pattern:$0x75316420]
        %v1621 = vld.sshfl [vmem:[#allocation1 + $0x28] sm:$0xff pattern:$0x75316420]
        %v1622 = vld.sshfl [vmem:[#allocation1 + $0x30] sm:$0xff pattern:$0x75316420]
        %v1623 = vld.sshfl [vmem:[#allocation1 + $0x38] sm:$0xff pattern:$0x75316420]
        %v1632 = vmul.f32 %v1458, %v1616
        %v1633 = vmul.f32 %v1478, %v1617
        %v1634 = vmul.f32 %v1498, %v1618
        %v1635 = vmul.f32 %v1518, %v1619
        %v1636 = vmul.f32 %v1538, %v1620
        %v1637 = vmul.f32 %v1558, %v1621
        %v1638 = vmul.f32 %v1578, %v1622
        %v1639 = vmul.f32 %v1598, %v1623
        %s1640 = scalar_lea.vmem %s5, 8
        %v1641 = vld [vmem:[%s1640] sm:$0xf]
        %1643 = vset.pattern.permute.xlu0 0
        %1644 = vperm.xlu0 %1643, %v1641
        %v1645 = vpop.permute.xlu0 %1644
        %v1647 = vsub.f32 %v1632, %v1645
        %v1648 = vsub.f32 %v1633, %v1645
        %v1649 = vsub.f32 %v1634, %v1645
        %v1650 = vsub.f32 %v1635, %v1645
        %v1651 = vsub.f32 %v1636, %v1645
        %v1652 = vsub.f32 %v1637, %v1645
        %v1653 = vsub.f32 %v1638, %v1645
        %v1654 = vsub.f32 %v1639, %v1645
        %v1655 = vmul.f32 %v1647, 0.5
        %v1656 = vmul.f32 %v1648, 0.5
        %v1657 = vmul.f32 %v1649, 0.5
        %v1658 = vmul.f32 %v1650, 0.5
        %v1659 = vmul.f32 %v1651, 0.5
        %v1660 = vmul.f32 %v1652, 0.5
        %v1661 = vmul.f32 %v1653, 0.5
        %v1662 = vmul.f32 %v1654, 0.5
        %v1663 = vadd.f32 %v1655, 0.5
        %v1664 = vadd.f32 %v1656, 0.5
        %v1665 = vadd.f32 %v1657, 0.5
        %v1666 = vadd.f32 %v1658, 0.5
        %v1667 = vadd.f32 %v1659, 0.5
        %v1668 = vadd.f32 %v1660, 0.5
        %v1669 = vadd.f32 %v1661, 0.5
        %v1670 = vadd.f32 %v1662, 0.5
        %v1671 = vmax.f32 %v1663, 0.0
        %v1672 = vmax.f32 %v1664, 0.0
        %v1673 = vmax.f32 %v1665, 0.0
        %v1674 = vmax.f32 %v1666, 0.0
        %v1675 = vmax.f32 %v1667, 0.0
        %v1676 = vmax.f32 %v1668, 0.0
        %v1677 = vmax.f32 %v1669, 0.0
        %v1678 = vmax.f32 %v1670, 0.0
        %v1679 = vmin.f32 %v1671, 1.0
        %v1680 = vmin.f32 %v1672, 1.0
        %v1681 = vmin.f32 %v1673, 1.0
        %v1682 = vmin.f32 %v1674, 1.0
        %v1683 = vmin.f32 %v1675, 1.0
        %v1684 = vmin.f32 %v1676, 1.0
        %v1685 = vmin.f32 %v1677, 1.0
        %v1686 = vmin.f32 %v1678, 1.0
        %v1695 = vrot.slane %v1680, 7
        %v1696 = vrot.slane %v1681, 6
        %v1697 = vrot.slane %v1682, 5
        %v1698 = vrot.slane %v1683, 4
        %v1699 = vrot.slane %v1684, 3
        %v1700 = vrot.slane %v1685, 2
        %v1701 = vrot.slane %v1686, 1
        %v1702 = vsel %vm747, %v1679, %v1695
        %v1703 = vsel %vm749, %v1696, %v1697
        %v1704 = vsel %vm751, %v1702, %v1703
        %v1705 = vsel %vm753, %v1698, %v1699
        %v1706 = vsel %vm755, %v1700, %v1701
        %v1707 = vsel %vm757, %v1705, %v1706
        %v1708 = vsel %vm759, %v1704, %v1707
        %v1709 = vsel %vm761, %v1679, %v1695
        %v1710 = vsel %vm763, %v1696, %v1697
        %v1711 = vsel %vm765, %v1709, %v1710
        %v1712 = vsel %vm767, %v1698, %v1699
        %v1713 = vsel %vm769, %v1701, %v1700
        %v1714 = vsel %vm771, %v1712, %v1713
        %v1715 = vsel %vm773, %v1711, %v1714
        %v1716 = vrot.slane %v1715, 1
        %v1717 = vsel %vm749, %v1679, %v1695
        %v1718 = vsel %vm753, %v1696, %v1697
        %v1719 = vsel %vm778, %v1717, %v1718
        %v1720 = vsel %vm755, %v1698, %v1699
        %v1721 = vsel %vm747, %v1700, %v1701
        %v1722 = vsel %vm462, %v1721, %v1720
        %v1723 = vsel %vm783, %v1719, %v1722
        %v1724 = vrot.slane %v1723, 2
        %v1725 = vsel %vm763, %v1679, %v1695
        %v1726 = vsel %vm767, %v1696, %v1697
        %v1727 = vsel %vm788, %v1725, %v1726
        %v1728 = vsel %vm769, %v1699, %v1698
        %v1729 = vsel %vm761, %v1700, %v1701
        %v1730 = vsel %vm792, %v1729, %v1728
        %v1731 = vsel %vm794, %v1727, %v1730
        %v1732 = vrot.slane %v1731, 3
        %1734 = vset.pattern.permute.xlu0 0
        %1735 = vperm.xlu0 %1734, %v416
        %v1736 = vpop.permute.xlu0 %1735
        %v1738 = vperm.slane %v1708, 0
        %v1739 = vperm.slane %v1708, 1
        %v1740 = vperm.slane %v1708, 2
        %v1741 = vperm.slane %v1708, 3
        %v1742 = vperm.slane %v1708, 4
        %v1743 = vperm.slane %v1708, 5
        %v1744 = vperm.slane %v1708, 6
        %v1745 = vperm.slane %v1708, 7
        %v1746 = vperm.slane %v1716, 0
        %v1747 = vperm.slane %v1716, 1
        %v1748 = vperm.slane %v1716, 2
        %v1749 = vperm.slane %v1716, 3
        %v1750 = vperm.slane %v1716, 4
        %v1751 = vperm.slane %v1716, 5
        %v1752 = vperm.slane %v1716, 6
        %v1753 = vperm.slane %v1716, 7
        %v1754 = vperm.slane %v1724, 0
        %v1755 = vperm.slane %v1724, 1
        %v1756 = vperm.slane %v1724, 2
        %v1757 = vperm.slane %v1724, 3
        %v1758 = vperm.slane %v1724, 4
        %v1759 = vperm.slane %v1724, 5
        %v1760 = vperm.slane %v1724, 6
        %v1761 = vperm.slane %v1724, 7
        %v1762 = vperm.slane %v1732, 0
        %v1763 = vperm.slane %v1732, 1
        %v1764 = vperm.slane %v1732, 2
        %v1765 = vperm.slane %v1732, 3
        %v1766 = vperm.slane %v1732, 4
        %v1767 = vperm.slane %v1732, 5
        %v1768 = vperm.slane %v1732, 6
        %v1769 = vperm.slane %v1732, 7
        %v1802 = vmul.f32 %v1736, %v1738
        %v1803 = vmul.f32 %v1736, %v1739
        %v1804 = vmul.f32 %v1736, %v1740
        %v1805 = vmul.f32 %v1736, %v1741
        %v1806 = vmul.f32 %v1736, %v1742
        %v1807 = vmul.f32 %v1736, %v1743
        %v1808 = vmul.f32 %v1736, %v1744
        %v1809 = vmul.f32 %v1736, %v1745
        %v1810 = vmul.f32 %v1736, %v1746
        %v1811 = vmul.f32 %v1736, %v1747
        %v1812 = vmul.f32 %v1736, %v1748
        %v1813 = vmul.f32 %v1736, %v1749
        %v1814 = vmul.f32 %v1736, %v1750
        %v1815 = vmul.f32 %v1736, %v1751
        %v1816 = vmul.f32 %v1736, %v1752
        %v1817 = vmul.f32 %v1736, %v1753
        %v1818 = vmul.f32 %v1736, %v1754
        %v1819 = vmul.f32 %v1736, %v1755
        %v1820 = vmul.f32 %v1736, %v1756
        %v1821 = vmul.f32 %v1736, %v1757
        %v1822 = vmul.f32 %v1736, %v1758
        %v1823 = vmul.f32 %v1736, %v1759
        %v1824 = vmul.f32 %v1736, %v1760
        %v1825 = vmul.f32 %v1736, %v1761
        %v1826 = vmul.f32 %v1736, %v1762
        %v1827 = vmul.f32 %v1736, %v1763
        %v1828 = vmul.f32 %v1736, %v1764
        %v1829 = vmul.f32 %v1736, %v1765
        %v1830 = vmul.f32 %v1736, %v1766
        %v1831 = vmul.f32 %v1736, %v1767
        %v1832 = vmul.f32 %v1736, %v1768
        %v1833 = vmul.f32 %v1736, %v1769
        %1835 = vset.pattern.permute.xlu0 0
        %1836 = vperm.xlu0 %1835, %v413
        %v1837 = vpop.permute.xlu0 %1836
        %v1839 = vadd.f32 %v1837, %v1802
        %v1840 = vadd.f32 %v1837, %v1803
        %v1841 = vadd.f32 %v1837, %v1804
        %v1842 = vadd.f32 %v1837, %v1805
        %v1843 = vadd.f32 %v1837, %v1806
        %v1844 = vadd.f32 %v1837, %v1807
        %v1845 = vadd.f32 %v1837, %v1808
        %v1846 = vadd.f32 %v1837, %v1809
        %v1847 = vadd.f32 %v1837, %v1810
        %v1848 = vadd.f32 %v1837, %v1811
        %v1849 = vadd.f32 %v1837, %v1812
        %v1850 = vadd.f32 %v1837, %v1813
        %v1851 = vadd.f32 %v1837, %v1814
        %v1852 = vadd.f32 %v1837, %v1815
        %v1853 = vadd.f32 %v1837, %v1816
        %v1854 = vadd.f32 %v1837, %v1817
        %v1855 = vadd.f32 %v1837, %v1818
        %v1856 = vadd.f32 %v1837, %v1819
        %v1857 = vadd.f32 %v1837, %v1820
        %v1858 = vadd.f32 %v1837, %v1821
        %v1859 = vadd.f32 %v1837, %v1822
        %v1860 = vadd.f32 %v1837, %v1823
        %v1861 = vadd.f32 %v1837, %v1824
        %v1862 = vadd.f32 %v1837, %v1825
        %v1863 = vadd.f32 %v1837, %v1826
        %v1864 = vadd.f32 %v1837, %v1827
        %v1865 = vadd.f32 %v1837, %v1828
        %v1866 = vadd.f32 %v1837, %v1829
        %v1867 = vadd.f32 %v1837, %v1830
        %v1868 = vadd.f32 %v1837, %v1831
        %v1869 = vadd.f32 %v1837, %v1832
        %v1870 = vadd.f32 %v1837, %v1833
        %v1871 = vmul.f32 %v1403, %v1839
        %v1872 = vmul.f32 %v1404, %v1840
        %v1873 = vmul.f32 %v1405, %v1841
        %v1874 = vmul.f32 %v1406, %v1842
        %v1875 = vmul.f32 %v1407, %v1843
        %v1876 = vmul.f32 %v1408, %v1844
        %v1877 = vmul.f32 %v1409, %v1845
        %v1878 = vmul.f32 %v1410, %v1846
        %v1879 = vmul.f32 %v1411, %v1847
        %v1880 = vmul.f32 %v1412, %v1848
        %v1881 = vmul.f32 %v1413, %v1849
        %v1882 = vmul.f32 %v1414, %v1850
        %v1883 = vmul.f32 %v1415, %v1851
        %v1884 = vmul.f32 %v1416, %v1852
        %v1885 = vmul.f32 %v1417, %v1853
        %v1886 = vmul.f32 %v1418, %v1854
        %v1887 = vmul.f32 %v1419, %v1855
        %v1888 = vmul.f32 %v1420, %v1856
        %v1889 = vmul.f32 %v1421, %v1857
        %v1890 = vmul.f32 %v1422, %v1858
        %v1891 = vmul.f32 %v1423, %v1859
        %v1892 = vmul.f32 %v1424, %v1860
        %v1893 = vmul.f32 %v1425, %v1861
        %v1894 = vmul.f32 %v1426, %v1862
        %v1895 = vmul.f32 %v1427, %v1863
        %v1896 = vmul.f32 %v1428, %v1864
        %v1897 = vmul.f32 %v1429, %v1865
        %v1898 = vmul.f32 %v1430, %v1866
        %v1899 = vmul.f32 %v1431, %v1867
        %v1900 = vmul.f32 %v1432, %v1868
        %v1901 = vmul.f32 %v1433, %v1869
        %v1902 = vmul.f32 %v1434, %v1870
        %v1903 = vrot.slane %v1871, 4
        %v1904 = vadd.f32 %v1871, %v1903
        %v1905 = vrot.slane %v1904, 2
        %v1906 = vadd.f32 %v1904, %v1905
        %v1907 = vrot.slane %v1906, 1
        %v1908 = vadd.f32 %v1906, %v1907
        %v1909 = vrot.slane %v1872, 4
        %v1910 = vadd.f32 %v1872, %v1909
        %v1911 = vrot.slane %v1910, 2
        %v1912 = vadd.f32 %v1910, %v1911
        %v1913 = vrot.slane %v1912, 1
        %v1914 = vadd.f32 %v1912, %v1913
        %v1915 = vrot.slane %v1873, 4
        %v1916 = vadd.f32 %v1873, %v1915
        %v1917 = vrot.slane %v1916, 2
        %v1918 = vadd.f32 %v1916, %v1917
        %v1919 = vrot.slane %v1918, 1
        %v1920 = vadd.f32 %v1918, %v1919
        %v1921 = vrot.slane %v1874, 4
        %v1922 = vadd.f32 %v1874, %v1921
        %v1923 = vrot.slane %v1922, 2
        %v1924 = vadd.f32 %v1922, %v1923
        %v1925 = vrot.slane %v1924, 1
        %v1926 = vadd.f32 %v1924, %v1925
        %v1927 = vrot.slane %v1875, 4
        %v1928 = vadd.f32 %v1875, %v1927
        %v1929 = vrot.slane %v1928, 2
        %v1930 = vadd.f32 %v1928, %v1929
        %v1931 = vrot.slane %v1930, 1
        %v1932 = vadd.f32 %v1930, %v1931
        %v1933 = vrot.slane %v1876, 4
        %v1934 = vadd.f32 %v1876, %v1933
        %v1935 = vrot.slane %v1934, 2
        %v1936 = vadd.f32 %v1934, %v1935
        %v1937 = vrot.slane %v1936, 1
        %v1938 = vadd.f32 %v1936, %v1937
        %v1939 = vrot.slane %v1877, 4
        %v1940 = vadd.f32 %v1877, %v1939
        %v1941 = vrot.slane %v1940, 2
        %v1942 = vadd.f32 %v1940, %v1941
        %v1943 = vrot.slane %v1942, 1
        %v1944 = vadd.f32 %v1942, %v1943
        %v1945 = vrot.slane %v1878, 4
        %v1946 = vadd.f32 %v1878, %v1945
        %v1947 = vrot.slane %v1946, 2
        %v1948 = vadd.f32 %v1946, %v1947
        %v1949 = vrot.slane %v1948, 1
        %v1950 = vadd.f32 %v1948, %v1949
        %v1951 = vrot.slane %v1879, 4
        %v1952 = vadd.f32 %v1879, %v1951
        %v1953 = vrot.slane %v1952, 2
        %v1954 = vadd.f32 %v1952, %v1953
        %v1955 = vrot.slane %v1954, 1
        %v1956 = vadd.f32 %v1954, %v1955
        %v1957 = vrot.slane %v1880, 4
        %v1958 = vadd.f32 %v1880, %v1957
        %v1959 = vrot.slane %v1958, 2
        %v1960 = vadd.f32 %v1958, %v1959
        %v1961 = vrot.slane %v1960, 1
        %v1962 = vadd.f32 %v1960, %v1961
        %v1963 = vrot.slane %v1881, 4
        %v1964 = vadd.f32 %v1881, %v1963
        %v1965 = vrot.slane %v1964, 2
        %v1966 = vadd.f32 %v1964, %v1965
        %v1967 = vrot.slane %v1966, 1
        %v1968 = vadd.f32 %v1966, %v1967
        %v1969 = vrot.slane %v1882, 4
        %v1970 = vadd.f32 %v1882, %v1969
        %v1971 = vrot.slane %v1970, 2
        %v1972 = vadd.f32 %v1970, %v1971
        %v1973 = vrot.slane %v1972, 1
        %v1974 = vadd.f32 %v1972, %v1973
        %v1975 = vrot.slane %v1883, 4
        %v1976 = vadd.f32 %v1883, %v1975
        %v1977 = vrot.slane %v1976, 2
        %v1978 = vadd.f32 %v1976, %v1977
        %v1979 = vrot.slane %v1978, 1
        %v1980 = vadd.f32 %v1978, %v1979
        %v1981 = vrot.slane %v1884, 4
        %v1982 = vadd.f32 %v1884, %v1981
        %v1983 = vrot.slane %v1982, 2
        %v1984 = vadd.f32 %v1982, %v1983
        %v1985 = vrot.slane %v1984, 1
        %v1986 = vadd.f32 %v1984, %v1985
        %v1987 = vrot.slane %v1885, 4
        %v1988 = vadd.f32 %v1885, %v1987
        %v1989 = vrot.slane %v1988, 2
        %v1990 = vadd.f32 %v1988, %v1989
        %v1991 = vrot.slane %v1990, 1
        %v1992 = vadd.f32 %v1990, %v1991
        %v1993 = vrot.slane %v1886, 4
        %v1994 = vadd.f32 %v1886, %v1993
        %v1995 = vrot.slane %v1994, 2
        %v1996 = vadd.f32 %v1994, %v1995
        %v1997 = vrot.slane %v1996, 1
        %v1998 = vadd.f32 %v1996, %v1997
        %v1999 = vrot.slane %v1887, 4
        %v2000 = vadd.f32 %v1887, %v1999
        %v2001 = vrot.slane %v2000, 2
        %v2002 = vadd.f32 %v2000, %v2001
        %v2003 = vrot.slane %v2002, 1
        %v2004 = vadd.f32 %v2002, %v2003
        %v2005 = vrot.slane %v1888, 4
        %v2006 = vadd.f32 %v1888, %v2005
        %v2007 = vrot.slane %v2006, 2
        %v2008 = vadd.f32 %v2006, %v2007
        %v2009 = vrot.slane %v2008, 1
        %v2010 = vadd.f32 %v2008, %v2009
        %v2011 = vrot.slane %v1889, 4
        %v2012 = vadd.f32 %v1889, %v2011
        %v2013 = vrot.slane %v2012, 2
        %v2014 = vadd.f32 %v2012, %v2013
        %v2015 = vrot.slane %v2014, 1
        %v2016 = vadd.f32 %v2014, %v2015
        %v2017 = vrot.slane %v1890, 4
        %v2018 = vadd.f32 %v1890, %v2017
        %v2019 = vrot.slane %v2018, 2
        %v2020 = vadd.f32 %v2018, %v2019
        %v2021 = vrot.slane %v2020, 1
        %v2022 = vadd.f32 %v2020, %v2021
        %v2023 = vrot.slane %v1891, 4
        %v2024 = vadd.f32 %v1891, %v2023
        %v2025 = vrot.slane %v2024, 2
        %v2026 = vadd.f32 %v2024, %v2025
        %v2027 = vrot.slane %v2026, 1
        %v2028 = vadd.f32 %v2026, %v2027
        %v2029 = vrot.slane %v1892, 4
        %v2030 = vadd.f32 %v1892, %v2029
        %v2031 = vrot.slane %v2030, 2
        %v2032 = vadd.f32 %v2030, %v2031
        %v2033 = vrot.slane %v2032, 1
        %v2034 = vadd.f32 %v2032, %v2033
        %v2035 = vrot.slane %v1893, 4
        %v2036 = vadd.f32 %v1893, %v2035
        %v2037 = vrot.slane %v2036, 2
        %v2038 = vadd.f32 %v2036, %v2037
        %v2039 = vrot.slane %v2038, 1
        %v2040 = vadd.f32 %v2038, %v2039
        %v2041 = vrot.slane %v1894, 4
        %v2042 = vadd.f32 %v1894, %v2041
        %v2043 = vrot.slane %v2042, 2
        %v2044 = vadd.f32 %v2042, %v2043
        %v2045 = vrot.slane %v2044, 1
        %v2046 = vadd.f32 %v2044, %v2045
        %v2047 = vrot.slane %v1895, 4
        %v2048 = vadd.f32 %v1895, %v2047
        %v2049 = vrot.slane %v2048, 2
        %v2050 = vadd.f32 %v2048, %v2049
        %v2051 = vrot.slane %v2050, 1
        %v2052 = vadd.f32 %v2050, %v2051
        %v2053 = vrot.slane %v1896, 4
        %v2054 = vadd.f32 %v1896, %v2053
        %v2055 = vrot.slane %v2054, 2
        %v2056 = vadd.f32 %v2054, %v2055
        %v2057 = vrot.slane %v2056, 1
        %v2058 = vadd.f32 %v2056, %v2057
        %v2059 = vrot.slane %v1897, 4
        %v2060 = vadd.f32 %v1897, %v2059
        %v2061 = vrot.slane %v2060, 2
        %v2062 = vadd.f32 %v2060, %v2061
        %v2063 = vrot.slane %v2062, 1
        %v2064 = vadd.f32 %v2062, %v2063
        %v2065 = vrot.slane %v1898, 4
        %v2066 = vadd.f32 %v1898, %v2065
        %v2067 = vrot.slane %v2066, 2
        %v2068 = vadd.f32 %v2066, %v2067
        %v2069 = vrot.slane %v2068, 1
        %v2070 = vadd.f32 %v2068, %v2069
        %v2071 = vrot.slane %v1899, 4
        %v2072 = vadd.f32 %v1899, %v2071
        %v2073 = vrot.slane %v2072, 2
        %v2074 = vadd.f32 %v2072, %v2073
        %v2075 = vrot.slane %v2074, 1
        %v2076 = vadd.f32 %v2074, %v2075
        %v2077 = vrot.slane %v1900, 4
        %v2078 = vadd.f32 %v1900, %v2077
        %v2079 = vrot.slane %v2078, 2
        %v2080 = vadd.f32 %v2078, %v2079
        %v2081 = vrot.slane %v2080, 1
        %v2082 = vadd.f32 %v2080, %v2081
        %v2083 = vrot.slane %v1901, 4
        %v2084 = vadd.f32 %v1901, %v2083
        %v2085 = vrot.slane %v2084, 2
        %v2086 = vadd.f32 %v2084, %v2085
        %v2087 = vrot.slane %v2086, 1
        %v2088 = vadd.f32 %v2086, %v2087
        %v2089 = vrot.slane %v1902, 4
        %v2090 = vadd.f32 %v1902, %v2089
        %v2091 = vrot.slane %v2090, 2
        %v2092 = vadd.f32 %v2090, %v2091
        %v2093 = vrot.slane %v2092, 1
        %v2094 = vadd.f32 %v2092, %v2093
        %v2127 = vrot.slane %v1914, 4
        %v2128 = vrot.slane %v1926, 4
        %v2129 = vrot.slane %v1938, 4
        %v2130 = vrot.slane %v1950, 4
        %v2131 = vrot.slane %v1962, 4
        %v2132 = vrot.slane %v1974, 4
        %v2133 = vrot.slane %v1986, 4
        %v2134 = vrot.slane %v1998, 4
        %v2135 = vrot.slane %v2010, 4
        %v2136 = vrot.slane %v2022, 4
        %v2137 = vrot.slane %v2034, 4
        %v2138 = vrot.slane %v2046, 4
        %v2139 = vrot.slane %v2058, 4
        %v2140 = vrot.slane %v2070, 4
        %v2141 = vrot.slane %v2082, 4
        %v2142 = vrot.slane %v2094, 4
        %v2143 = vsel %vm759, %v1908, %v2127
        %v2144 = vsel %vm759, %v1920, %v2128
        %v2145 = vsel %vm759, %v1932, %v2129
        %v2146 = vsel %vm759, %v1944, %v2130
        %v2147 = vsel %vm759, %v1956, %v2131
        %v2148 = vsel %vm759, %v1968, %v2132
        %v2149 = vsel %vm759, %v1980, %v2133
        %v2150 = vsel %vm759, %v1992, %v2134
        %v2151 = vsel %vm759, %v2004, %v2135
        %v2152 = vsel %vm759, %v2016, %v2136
        %v2153 = vsel %vm759, %v2028, %v2137
        %v2154 = vsel %vm759, %v2040, %v2138
        %v2155 = vsel %vm759, %v2052, %v2139
        %v2156 = vsel %vm759, %v2064, %v2140
        %v2157 = vsel %vm759, %v2076, %v2141
        %v2158 = vsel %vm759, %v2088, %v2142
        %v2159 = vrot.slane %v2147, 7
        %v2160 = vsel %vm761, %v2159, %v2143
        %v2161 = vsel %vm767, %v2159, %v2160
        %v2162 = vrot.slane %v2151, 6
        %v2163 = vsel %vm749, %v2162, %v2161
        %v2164 = vsel %vm755, %v2162, %v2163
        %v2165 = vrot.slane %v2155, 5
        %v2166 = vsel %vm763, %v2165, %v2164
        %vm2167 = vcmask 1047559
        %v2168 = vsel %vm2167, %v2165, %v2166
        %v2169 = vrot.slane %v2148, 7
        %v2170 = vsel %vm761, %v2169, %v2144
        %v2171 = vsel %vm767, %v2169, %v2170
        %v2172 = vrot.slane %v2152, 6
        %v2173 = vsel %vm749, %v2172, %v2171
        %v2174 = vsel %vm755, %v2172, %v2173
        %v2175 = vrot.slane %v2156, 5
        %v2176 = vsel %vm763, %v2175, %v2174
        %v2177 = vsel %vm2167, %v2175, %v2176
        %v2178 = vrot.slane %v2149, 7
        %v2179 = vsel %vm761, %v2178, %v2145
        %v2180 = vsel %vm767, %v2178, %v2179
        %v2181 = vrot.slane %v2153, 6
        %v2182 = vsel %vm749, %v2181, %v2180
        %v2183 = vsel %vm755, %v2181, %v2182
        %v2184 = vrot.slane %v2157, 5
        %v2185 = vsel %vm763, %v2184, %v2183
        %v2186 = vsel %vm2167, %v2184, %v2185
        %v2187 = vrot.slane %v2150, 7
        %v2188 = vsel %vm761, %v2187, %v2146
        %v2189 = vsel %vm767, %v2187, %v2188
        %v2190 = vrot.slane %v2154, 6
        %v2191 = vsel %vm749, %v2190, %v2189
        %v2192 = vsel %vm755, %v2190, %v2191
        %v2193 = vrot.slane %v2158, 5
        %v2194 = vsel %vm763, %v2193, %v2192
        %v2195 = vsel %vm2167, %v2193, %v2194
        %2200 = vst [vmem:[%s403] sm:$0xff] %v2168
        %2201 = vst [vmem:[%s403 + $0x8] sm:$0xff] %v2177
        %2202 = vst [vmem:[%s403 + $0x10] sm:$0xff] %v2186
        %2203 = vst [vmem:[%s403 + $0x18] sm:$0xff] %v2195
        %v2204 = vld [vmem:[%s11] sm:$0xff]
        %v2205 = vld [vmem:[%s11 + $0x8] sm:$0xff]
        %v2206 = vld [vmem:[%s11 + $0x10] sm:$0xff]
        %v2207 = vld [vmem:[%s11 + $0x18] sm:$0xff]
        %v2208 = vld [vmem:[%s11 + $0x20] sm:$0xff]
        %v2209 = vld [vmem:[%s11 + $0x28] sm:$0xff]
        %v2210 = vld [vmem:[%s11 + $0x30] sm:$0xff]
        %v2211 = vld [vmem:[%s11 + $0x38] sm:$0xff]
        %v2212 = vld [vmem:[%s11 + $0x40] sm:$0xff]
        %v2213 = vld [vmem:[%s11 + $0x48] sm:$0xff]
        %v2214 = vld [vmem:[%s11 + $0x50] sm:$0xff]
        %v2215 = vld [vmem:[%s11 + $0x58] sm:$0xff]
        %v2216 = vld [vmem:[%s11 + $0x60] sm:$0xff]
        %v2217 = vld [vmem:[%s11 + $0x68] sm:$0xff]
        %v2218 = vld [vmem:[%s11 + $0x70] sm:$0xff]
        %v2219 = vld [vmem:[%s11 + $0x78] sm:$0xff]
        %v2220 = vld [vmem:[%s11 + $0x80] sm:$0xff]
        %v2221 = vld [vmem:[%s11 + $0x88] sm:$0xff]
        %v2222 = vld [vmem:[%s11 + $0x90] sm:$0xff]
        %v2223 = vld [vmem:[%s11 + $0x98] sm:$0xff]
        %v2224 = vld [vmem:[%s11 + $0xa0] sm:$0xff]
        %v2225 = vld [vmem:[%s11 + $0xa8] sm:$0xff]
        %v2226 = vld [vmem:[%s11 + $0xb0] sm:$0xff]
        %v2227 = vld [vmem:[%s11 + $0xb8] sm:$0xff]
        %v2228 = vld [vmem:[%s11 + $0xc0] sm:$0xff]
        %v2229 = vld [vmem:[%s11 + $0xc8] sm:$0xff]
        %v2230 = vld [vmem:[%s11 + $0xd0] sm:$0xff]
        %v2231 = vld [vmem:[%s11 + $0xd8] sm:$0xff]
        %v2232 = vld [vmem:[%s11 + $0xe0] sm:$0xff]
        %v2233 = vld [vmem:[%s11 + $0xe8] sm:$0xff]
        %v2234 = vld [vmem:[%s11 + $0xf0] sm:$0xff]
        %v2235 = vld [vmem:[%s11 + $0xf8] sm:$0xff]
        %v2236 = vld [vmem:[%s7] sm:$0xf]
        %v2237 = vld [vmem:[%s8] sm:$0xf]
        %v2238 = vsel %vm761, %v1956, %v1908
        %v2239 = vsel %vm749, %v2004, %v2238
        %v2240 = vsel %vm763, %v2052, %v2239
        %v2241 = vsel %vm761, %v1962, %v1914
        %v2242 = vsel %vm749, %v2010, %v2241
        %v2243 = vsel %vm763, %v2058, %v2242
        %v2244 = vsel %vm761, %v1968, %v1920
        %v2245 = vsel %vm749, %v2016, %v2244
        %v2246 = vsel %vm763, %v2064, %v2245
        %v2247 = vsel %vm761, %v1974, %v1926
        %v2248 = vsel %vm749, %v2022, %v2247
        %v2249 = vsel %vm763, %v2070, %v2248
        %v2250 = vsel %vm761, %v1980, %v1932
        %v2251 = vsel %vm749, %v2028, %v2250
        %v2252 = vsel %vm763, %v2076, %v2251
        %v2253 = vsel %vm761, %v1986, %v1938
        %v2254 = vsel %vm749, %v2034, %v2253
        %v2255 = vsel %vm763, %v2082, %v2254
        %v2256 = vsel %vm761, %v1992, %v1944
        %v2257 = vsel %vm749, %v2040, %v2256
        %v2258 = vsel %vm763, %v2088, %v2257
        %v2259 = vsel %vm761, %v1998, %v1950
        %v2260 = vsel %vm749, %v2046, %v2259
        %v2261 = vsel %vm763, %v2094, %v2260
        %vm2262 = vcmask 31744
        %v2264 = vsel %vm2262, %v2237, 0
        %v2266 = vsel %vm759, %v2240, 0
        %v2268 = vsel %vm759, %v2243, 0
        %v2270 = vsel %vm759, %v2246, 0
        %v2272 = vsel %vm759, %v2249, 0
        %v2274 = vsel %vm759, %v2252, 0
        %v2276 = vsel %vm759, %v2255, 0
        %v2278 = vsel %vm759, %v2258, 0
        %v2280 = vsel %vm759, %v2261, 0
        %2282 = vmatpush.msra.mxu0 0.0
        %2283 = vmatpush.msra.mxu0 0.0
        %2284 = vmatpush.msra.mxu0 0.0
        %2285 = vmatpush.msra.mxu0 0.0
        %2286 = vmatpush.msra.mxu0 0.0
        %2287 = vmatpush.msra.mxu0 0.0
        %2288 = vmatpush.msra.mxu0 0.0
        %2289 = vmatpush.msra.mxu0 0.0
        %2290 = vmatpush.msra.mxu0 0.0
        %2291 = vmatpush.msra.mxu0 0.0
        %2292 = vmatpush.msra.mxu0 0.0
        %2293 = vmatpush.msra.mxu0 0.0
        %2294 = vmatpush.msra.mxu0 0.0
        %2295 = vmatpush.msra.mxu0 0.0
        %2296 = vmatpush.msra.mxu0 0.0
        %2297 = vmatpush.msra.mxu0 %v2266
        %2298 = vmatmul.f32.gmra.mxu0 %v2264
        %v2299 = vpop.f32.mrf.mxu0
        %v2300 = vadd.f32 0.0, %v2299
        %2301 = vdwg.mxu0
        %2302 = vmatpush.msra.mxu0 0.0
        %2303 = vmatpush.msra.mxu0 0.0
        %2304 = vmatpush.msra.mxu0 0.0
        %2305 = vmatpush.msra.mxu0 0.0
        %2306 = vmatpush.msra.mxu0 0.0
        %2307 = vmatpush.msra.mxu0 0.0
        %2308 = vmatpush.msra.mxu0 0.0
        %2309 = vmatpush.msra.mxu0 0.0
        %2310 = vmatpush.msra.mxu0 0.0
        %2311 = vmatpush.msra.mxu0 0.0
        %2312 = vmatpush.msra.mxu0 0.0
        %2313 = vmatpush.msra.mxu0 0.0
        %2314 = vmatpush.msra.mxu0 0.0
        %2315 = vmatpush.msra.mxu0 0.0
        %2316 = vmatpush.msra.mxu0 0.0
        %2317 = vmatpush.msra.mxu0 %v2268
        %2318 = vmatmul.f32.gmra.mxu0 %v2264
        %v2319 = vpop.f32.mrf.mxu0
        %v2320 = vadd.f32 0.0, %v2319
        %2321 = vdwg.mxu0
        %2322 = vmatpush.msra.mxu0 0.0
        %2323 = vmatpush.msra.mxu0 0.0
        %2324 = vmatpush.msra.mxu0 0.0
        %2325 = vmatpush.msra.mxu0 0.0
        %2326 = vmatpush.msra.mxu0 0.0
        %2327 = vmatpush.msra.mxu0 0.0
        %2328 = vmatpush.msra.mxu0 0.0
        %2329 = vmatpush.msra.mxu0 0.0
        %2330 = vmatpush.msra.mxu0 0.0
        %2331 = vmatpush.msra.mxu0 0.0
        %2332 = vmatpush.msra.mxu0 0.0
        %2333 = vmatpush.msra.mxu0 0.0
        %2334 = vmatpush.msra.mxu0 0.0
        %2335 = vmatpush.msra.mxu0 0.0
        %2336 = vmatpush.msra.mxu0 0.0
        %2337 = vmatpush.msra.mxu0 %v2270
        %2338 = vmatmul.f32.gmra.mxu0 %v2264
        %v2339 = vpop.f32.mrf.mxu0
        %v2340 = vadd.f32 0.0, %v2339
        %2341 = vdwg.mxu0
        %2342 = vmatpush.msra.mxu0 0.0
        %2343 = vmatpush.msra.mxu0 0.0
        %2344 = vmatpush.msra.mxu0 0.0
        %2345 = vmatpush.msra.mxu0 0.0
        %2346 = vmatpush.msra.mxu0 0.0
        %2347 = vmatpush.msra.mxu0 0.0
        %2348 = vmatpush.msra.mxu0 0.0
        %2349 = vmatpush.msra.mxu0 0.0
        %2350 = vmatpush.msra.mxu0 0.0
        %2351 = vmatpush.msra.mxu0 0.0
        %2352 = vmatpush.msra.mxu0 0.0
        %2353 = vmatpush.msra.mxu0 0.0
        %2354 = vmatpush.msra.mxu0 0.0
        %2355 = vmatpush.msra.mxu0 0.0
        %2356 = vmatpush.msra.mxu0 0.0
        %2357 = vmatpush.msra.mxu0 %v2272
        %2358 = vmatmul.f32.gmra.mxu0 %v2264
        %v2359 = vpop.f32.mrf.mxu0
        %v2360 = vadd.f32 0.0, %v2359
        %2361 = vdwg.mxu0
        %2362 = vmatpush.msra.mxu0 0.0
        %2363 = vmatpush.msra.mxu0 0.0
        %2364 = vmatpush.msra.mxu0 0.0
        %2365 = vmatpush.msra.mxu0 0.0
        %2366 = vmatpush.msra.mxu0 0.0
        %2367 = vmatpush.msra.mxu0 0.0
        %2368 = vmatpush.msra.mxu0 0.0
        %2369 = vmatpush.msra.mxu0 0.0
        %2370 = vmatpush.msra.mxu0 0.0
        %2371 = vmatpush.msra.mxu0 0.0
        %2372 = vmatpush.msra.mxu0 0.0
        %2373 = vmatpush.msra.mxu0 0.0
        %2374 = vmatpush.msra.mxu0 0.0
        %2375 = vmatpush.msra.mxu0 0.0
        %2376 = vmatpush.msra.mxu0 0.0
        %2377 = vmatpush.msra.mxu0 %v2274
        %2378 = vmatmul.f32.gmra.mxu0 %v2264
        %v2379 = vpop.f32.mrf.mxu0
        %v2380 = vadd.f32 0.0, %v2379
        %2381 = vdwg.mxu0
        %2382 = vmatpush.msra.mxu0 0.0
        %2383 = vmatpush.msra.mxu0 0.0
        %2384 = vmatpush.msra.mxu0 0.0
        %2385 = vmatpush.msra.mxu0 0.0
        %2386 = vmatpush.msra.mxu0 0.0
        %2387 = vmatpush.msra.mxu0 0.0
        %2388 = vmatpush.msra.mxu0 0.0
        %2389 = vmatpush.msra.mxu0 0.0
        %2390 = vmatpush.msra.mxu0 0.0
        %2391 = vmatpush.msra.mxu0 0.0
        %2392 = vmatpush.msra.mxu0 0.0
        %2393 = vmatpush.msra.mxu0 0.0
        %2394 = vmatpush.msra.mxu0 0.0
        %2395 = vmatpush.msra.mxu0 0.0
        %2396 = vmatpush.msra.mxu0 0.0
        %2397 = vmatpush.msra.mxu0 %v2276
        %2398 = vmatmul.f32.gmra.mxu0 %v2264
        %v2399 = vpop.f32.mrf.mxu0
        %v2400 = vadd.f32 0.0, %v2399
        %2401 = vdwg.mxu0
        %2402 = vmatpush.msra.mxu0 0.0
        %2403 = vmatpush.msra.mxu0 0.0
        %2404 = vmatpush.msra.mxu0 0.0
        %2405 = vmatpush.msra.mxu0 0.0
        %2406 = vmatpush.msra.mxu0 0.0
        %2407 = vmatpush.msra.mxu0 0.0
        %2408 = vmatpush.msra.mxu0 0.0
        %2409 = vmatpush.msra.mxu0 0.0
        %2410 = vmatpush.msra.mxu0 0.0
        %2411 = vmatpush.msra.mxu0 0.0
        %2412 = vmatpush.msra.mxu0 0.0
        %2413 = vmatpush.msra.mxu0 0.0
        %2414 = vmatpush.msra.mxu0 0.0
        %2415 = vmatpush.msra.mxu0 0.0
        %2416 = vmatpush.msra.mxu0 0.0
        %2417 = vmatpush.msra.mxu0 %v2278
        %2418 = vmatmul.f32.gmra.mxu0 %v2264
        %v2419 = vpop.f32.mrf.mxu0
        %v2420 = vadd.f32 0.0, %v2419
        %2421 = vdwg.mxu0
        %2422 = vmatpush.msra.mxu0 0.0
        %2423 = vmatpush.msra.mxu0 0.0
        %2424 = vmatpush.msra.mxu0 0.0
        %2425 = vmatpush.msra.mxu0 0.0
        %2426 = vmatpush.msra.mxu0 0.0
        %2427 = vmatpush.msra.mxu0 0.0
        %2428 = vmatpush.msra.mxu0 0.0
        %2429 = vmatpush.msra.mxu0 0.0
        %2430 = vmatpush.msra.mxu0 0.0
        %2431 = vmatpush.msra.mxu0 0.0
        %2432 = vmatpush.msra.mxu0 0.0
        %2433 = vmatpush.msra.mxu0 0.0
        %2434 = vmatpush.msra.mxu0 0.0
        %2435 = vmatpush.msra.mxu0 0.0
        %2436 = vmatpush.msra.mxu0 0.0
        %2437 = vmatpush.msra.mxu0 %v2280
        %2438 = vmatmul.f32.gmra.mxu0 %v2264
        %v2439 = vpop.f32.mrf.mxu0
        %v2440 = vadd.f32 0.0, %v2439
        %2441 = vdwg.mxu0
        %v2443 = vsel %vm458, %v2236, 0
        %2445 = vmatpush.msra.mxu0 0.0
        %2446 = vmatpush.msra.mxu0 0.0
        %2447 = vmatpush.msra.mxu0 0.0
        %2448 = vmatpush.msra.mxu0 0.0
        %2449 = vmatpush.msra.mxu0 0.0
        %2450 = vmatpush.msra.mxu0 0.0
        %2451 = vmatpush.msra.mxu0 0.0
        %2452 = vmatpush.msra.mxu0 0.0
        %2453 = vmatpush.msra.mxu0 0.0
        %2454 = vmatpush.msra.mxu0 0.0
        %2455 = vmatpush.msra.mxu0 0.0
        %2456 = vmatpush.msra.mxu0 0.0
        %2457 = vmatpush.msra.mxu0 0.0
        %2458 = vmatpush.msra.mxu0 0.0
        %2459 = vmatpush.msra.mxu0 0.0
        %2460 = vmatpush.msra.mxu0 %v464
        %2461 = vmatmul.f32.gmra.mxu0 %v2443
        %v2462 = vpop.f32.mrf.mxu0
        %v2463 = vadd.f32 %v2300, %v2462
        %2464 = vdwg.mxu0
        %2465 = vmatpush.msra.mxu0 0.0
        %2466 = vmatpush.msra.mxu0 0.0
        %2467 = vmatpush.msra.mxu0 0.0
        %2468 = vmatpush.msra.mxu0 0.0
        %2469 = vmatpush.msra.mxu0 0.0
        %2470 = vmatpush.msra.mxu0 0.0
        %2471 = vmatpush.msra.mxu0 0.0
        %2472 = vmatpush.msra.mxu0 0.0
        %2473 = vmatpush.msra.mxu0 0.0
        %2474 = vmatpush.msra.mxu0 0.0
        %2475 = vmatpush.msra.mxu0 0.0
        %2476 = vmatpush.msra.mxu0 0.0
        %2477 = vmatpush.msra.mxu0 0.0
        %2478 = vmatpush.msra.mxu0 0.0
        %2479 = vmatpush.msra.mxu0 0.0
        %2480 = vmatpush.msra.mxu0 %v467
        %2481 = vmatmul.f32.gmra.mxu0 %v2443
        %v2482 = vpop.f32.mrf.mxu0
        %v2483 = vadd.f32 %v2320, %v2482
        %2484 = vdwg.mxu0
        %2485 = vmatpush.msra.mxu0 0.0
        %2486 = vmatpush.msra.mxu0 0.0
        %2487 = vmatpush.msra.mxu0 0.0
        %2488 = vmatpush.msra.mxu0 0.0
        %2489 = vmatpush.msra.mxu0 0.0
        %2490 = vmatpush.msra.mxu0 0.0
        %2491 = vmatpush.msra.mxu0 0.0
        %2492 = vmatpush.msra.mxu0 0.0
        %2493 = vmatpush.msra.mxu0 0.0
        %2494 = vmatpush.msra.mxu0 0.0
        %2495 = vmatpush.msra.mxu0 0.0
        %2496 = vmatpush.msra.mxu0 0.0
        %2497 = vmatpush.msra.mxu0 0.0
        %2498 = vmatpush.msra.mxu0 0.0
        %2499 = vmatpush.msra.mxu0 0.0
        %2500 = vmatpush.msra.mxu0 %v470
        %2501 = vmatmul.f32.gmra.mxu0 %v2443
        %v2502 = vpop.f32.mrf.mxu0
        %v2503 = vadd.f32 %v2340, %v2502
        %2504 = vdwg.mxu0
        %2505 = vmatpush.msra.mxu0 0.0
        %2506 = vmatpush.msra.mxu0 0.0
        %2507 = vmatpush.msra.mxu0 0.0
        %2508 = vmatpush.msra.mxu0 0.0
        %2509 = vmatpush.msra.mxu0 0.0
        %2510 = vmatpush.msra.mxu0 0.0
        %2511 = vmatpush.msra.mxu0 0.0
        %2512 = vmatpush.msra.mxu0 0.0
        %2513 = vmatpush.msra.mxu0 0.0
        %2514 = vmatpush.msra.mxu0 0.0
        %2515 = vmatpush.msra.mxu0 0.0
        %2516 = vmatpush.msra.mxu0 0.0
        %2517 = vmatpush.msra.mxu0 0.0
        %2518 = vmatpush.msra.mxu0 0.0
        %2519 = vmatpush.msra.mxu0 0.0
        %2520 = vmatpush.msra.mxu0 %v473
        %2521 = vmatmul.f32.gmra.mxu0 %v2443
        %v2522 = vpop.f32.mrf.mxu0
        %v2523 = vadd.f32 %v2360, %v2522
        %2524 = vdwg.mxu0
        %2525 = vmatpush.msra.mxu0 0.0
        %2526 = vmatpush.msra.mxu0 0.0
        %2527 = vmatpush.msra.mxu0 0.0
        %2528 = vmatpush.msra.mxu0 0.0
        %2529 = vmatpush.msra.mxu0 0.0
        %2530 = vmatpush.msra.mxu0 0.0
        %2531 = vmatpush.msra.mxu0 0.0
        %2532 = vmatpush.msra.mxu0 0.0
        %2533 = vmatpush.msra.mxu0 0.0
        %2534 = vmatpush.msra.mxu0 0.0
        %2535 = vmatpush.msra.mxu0 0.0
        %2536 = vmatpush.msra.mxu0 0.0
        %2537 = vmatpush.msra.mxu0 0.0
        %2538 = vmatpush.msra.mxu0 0.0
        %2539 = vmatpush.msra.mxu0 0.0
        %2540 = vmatpush.msra.mxu0 %v476
        %2541 = vmatmul.f32.gmra.mxu0 %v2443
        %v2542 = vpop.f32.mrf.mxu0
        %v2543 = vadd.f32 %v2380, %v2542
        %2544 = vdwg.mxu0
        %2545 = vmatpush.msra.mxu0 0.0
        %2546 = vmatpush.msra.mxu0 0.0
        %2547 = vmatpush.msra.mxu0 0.0
        %2548 = vmatpush.msra.mxu0 0.0
        %2549 = vmatpush.msra.mxu0 0.0
        %2550 = vmatpush.msra.mxu0 0.0
        %2551 = vmatpush.msra.mxu0 0.0
        %2552 = vmatpush.msra.mxu0 0.0
        %2553 = vmatpush.msra.mxu0 0.0
        %2554 = vmatpush.msra.mxu0 0.0
        %2555 = vmatpush.msra.mxu0 0.0
        %2556 = vmatpush.msra.mxu0 0.0
        %2557 = vmatpush.msra.mxu0 0.0
        %2558 = vmatpush.msra.mxu0 0.0
        %2559 = vmatpush.msra.mxu0 0.0
        %2560 = vmatpush.msra.mxu0 %v479
        %2561 = vmatmul.f32.gmra.mxu0 %v2443
        %v2562 = vpop.f32.mrf.mxu0
        %v2563 = vadd.f32 %v2400, %v2562
        %2564 = vdwg.mxu0
        %2565 = vmatpush.msra.mxu0 0.0
        %2566 = vmatpush.msra.mxu0 0.0
        %2567 = vmatpush.msra.mxu0 0.0
        %2568 = vmatpush.msra.mxu0 0.0
        %2569 = vmatpush.msra.mxu0 0.0
        %2570 = vmatpush.msra.mxu0 0.0
        %2571 = vmatpush.msra.mxu0 0.0
        %2572 = vmatpush.msra.mxu0 0.0
        %2573 = vmatpush.msra.mxu0 0.0
        %2574 = vmatpush.msra.mxu0 0.0
        %2575 = vmatpush.msra.mxu0 0.0
        %2576 = vmatpush.msra.mxu0 0.0
        %2577 = vmatpush.msra.mxu0 0.0
        %2578 = vmatpush.msra.mxu0 0.0
        %2579 = vmatpush.msra.mxu0 0.0
        %2580 = vmatpush.msra.mxu0 %v482
        %2581 = vmatmul.f32.gmra.mxu0 %v2443
        %v2582 = vpop.f32.mrf.mxu0
        %v2583 = vadd.f32 %v2420, %v2582
        %2584 = vdwg.mxu0
        %2585 = vmatpush.msra.mxu0 0.0
        %2586 = vmatpush.msra.mxu0 0.0
        %2587 = vmatpush.msra.mxu0 0.0
        %2588 = vmatpush.msra.mxu0 0.0
        %2589 = vmatpush.msra.mxu0 0.0
        %2590 = vmatpush.msra.mxu0 0.0
        %2591 = vmatpush.msra.mxu0 0.0
        %2592 = vmatpush.msra.mxu0 0.0
        %2593 = vmatpush.msra.mxu0 0.0
        %2594 = vmatpush.msra.mxu0 0.0
        %2595 = vmatpush.msra.mxu0 0.0
        %2596 = vmatpush.msra.mxu0 0.0
        %2597 = vmatpush.msra.mxu0 0.0
        %2598 = vmatpush.msra.mxu0 0.0
        %2599 = vmatpush.msra.mxu0 0.0
        %2600 = vmatpush.msra.mxu0 %v485
        %2601 = vmatmul.f32.gmra.mxu0 %v2443
        %v2602 = vpop.f32.mrf.mxu0
        %v2603 = vadd.f32 %v2440, %v2602
        %2604 = vdwg.mxu0
        %v2605 = vld [vmem:[%s9] sm:$0xff]
        %v2606 = vld [vmem:[%s9 + $0x8] sm:$0xff]
        %v2607 = vld [vmem:[%s9 + $0x10] sm:$0xff]
        %v2608 = vld [vmem:[%s9 + $0x18] sm:$0xff]
        %2613 = vst [vmem:[#allocation1] ss:$2 sm:$0xff] %v2605
        %s2614 = scalar_lea.vmem [#allocation1], 16
        %2615 = vst [vmem:[%s2614] ss:$2 sm:$0xff] %v2606
        %s2616 = scalar_lea.vmem [#allocation1], 32
        %2617 = vst [vmem:[%s2616] ss:$2 sm:$0xff] %v2607
        %s2618 = scalar_lea.vmem [#allocation1], 48
        %2619 = vst [vmem:[%s2618] ss:$2 sm:$0xff] %v2608
        %v2620 = vld.sshfl [vmem:[#allocation1] sm:$0xff pattern:$0x75316420]
        %v2621 = vld.sshfl [vmem:[#allocation1 + $0x8] sm:$0xff pattern:$0x75316420]
        %v2622 = vld.sshfl [vmem:[#allocation1 + $0x10] sm:$0xff pattern:$0x75316420]
        %v2623 = vld.sshfl [vmem:[#allocation1 + $0x18] sm:$0xff pattern:$0x75316420]
        %v2624 = vld.sshfl [vmem:[#allocation1 + $0x20] sm:$0xff pattern:$0x75316420]
        %v2625 = vld.sshfl [vmem:[#allocation1 + $0x28] sm:$0xff pattern:$0x75316420]
        %v2626 = vld.sshfl [vmem:[#allocation1 + $0x30] sm:$0xff pattern:$0x75316420]
        %v2627 = vld.sshfl [vmem:[#allocation1 + $0x38] sm:$0xff pattern:$0x75316420]
        %v2636 = vmul.f32 %v2463, %v2620
        %v2637 = vmul.f32 %v2483, %v2621
        %v2638 = vmul.f32 %v2503, %v2622
        %v2639 = vmul.f32 %v2523, %v2623
        %v2640 = vmul.f32 %v2543, %v2624
        %v2641 = vmul.f32 %v2563, %v2625
        %v2642 = vmul.f32 %v2583, %v2626
        %v2643 = vmul.f32 %v2603, %v2627
        %v2644 = vld [vmem:[%s10] sm:$0xf]
        %2646 = vset.pattern.permute.xlu0 0
        %2647 = vperm.xlu0 %2646, %v2644
        %v2648 = vpop.permute.xlu0 %2647
        %v2650 = vsub.f32 %v2636, %v2648
        %v2651 = vsub.f32 %v2637, %v2648
        %v2652 = vsub.f32 %v2638, %v2648
        %v2653 = vsub.f32 %v2639, %v2648
        %v2654 = vsub.f32 %v2640, %v2648
        %v2655 = vsub.f32 %v2641, %v2648
        %v2656 = vsub.f32 %v2642, %v2648
        %v2657 = vsub.f32 %v2643, %v2648
        %v2658 = vmul.f32 %v2650, 0.5
        %v2659 = vmul.f32 %v2651, 0.5
        %v2660 = vmul.f32 %v2652, 0.5
        %v2661 = vmul.f32 %v2653, 0.5
        %v2662 = vmul.f32 %v2654, 0.5
        %v2663 = vmul.f32 %v2655, 0.5
        %v2664 = vmul.f32 %v2656, 0.5
        %v2665 = vmul.f32 %v2657, 0.5
        %v2666 = vadd.f32 %v2658, 0.5
        %v2667 = vadd.f32 %v2659, 0.5
        %v2668 = vadd.f32 %v2660, 0.5
        %v2669 = vadd.f32 %v2661, 0.5
        %v2670 = vadd.f32 %v2662, 0.5
        %v2671 = vadd.f32 %v2663, 0.5
        %v2672 = vadd.f32 %v2664, 0.5
        %v2673 = vadd.f32 %v2665, 0.5
        %v2674 = vmax.f32 %v2666, 0.0
        %v2675 = vmax.f32 %v2667, 0.0
        %v2676 = vmax.f32 %v2668, 0.0
        %v2677 = vmax.f32 %v2669, 0.0
        %v2678 = vmax.f32 %v2670, 0.0
        %v2679 = vmax.f32 %v2671, 0.0
        %v2680 = vmax.f32 %v2672, 0.0
        %v2681 = vmax.f32 %v2673, 0.0
        %v2682 = vmin.f32 %v2674, 1.0
        %v2683 = vmin.f32 %v2675, 1.0
        %v2684 = vmin.f32 %v2676, 1.0
        %v2685 = vmin.f32 %v2677, 1.0
        %v2686 = vmin.f32 %v2678, 1.0
        %v2687 = vmin.f32 %v2679, 1.0
        %v2688 = vmin.f32 %v2680, 1.0
        %v2689 = vmin.f32 %v2681, 1.0
        %v2698 = vrot.slane %v2683, 7
        %v2699 = vrot.slane %v2684, 6
        %v2700 = vrot.slane %v2685, 5
        %v2701 = vrot.slane %v2686, 4
        %v2702 = vrot.slane %v2687, 3
        %v2703 = vrot.slane %v2688, 2
        %v2704 = vrot.slane %v2689, 1
        %v2705 = vsel %vm747, %v2682, %v2698
        %v2706 = vsel %vm749, %v2699, %v2700
        %v2707 = vsel %vm751, %v2705, %v2706
        %v2708 = vsel %vm753, %v2701, %v2702
        %v2709 = vsel %vm755, %v2703, %v2704
        %v2710 = vsel %vm757, %v2708, %v2709
        %v2711 = vsel %vm759, %v2707, %v2710
        %v2712 = vsel %vm761, %v2682, %v2698
        %v2713 = vsel %vm763, %v2699, %v2700
        %v2714 = vsel %vm765, %v2712, %v2713
        %v2715 = vsel %vm767, %v2701, %v2702
        %v2716 = vsel %vm769, %v2704, %v2703
        %v2717 = vsel %vm771, %v2715, %v2716
        %v2718 = vsel %vm773, %v2714, %v2717
        %v2719 = vrot.slane %v2718, 1
        %v2720 = vsel %vm749, %v2682, %v2698
        %v2721 = vsel %vm753, %v2699, %v2700
        %v2722 = vsel %vm778, %v2720, %v2721
        %v2723 = vsel %vm755, %v2701, %v2702
        %v2724 = vsel %vm747, %v2703, %v2704
        %v2725 = vsel %vm462, %v2724, %v2723
        %v2726 = vsel %vm783, %v2722, %v2725
        %v2727 = vrot.slane %v2726, 2
        %v2728 = vsel %vm763, %v2682, %v2698
        %v2729 = vsel %vm767, %v2699, %v2700
        %v2730 = vsel %vm788, %v2728, %v2729
        %v2731 = vsel %vm769, %v2702, %v2701
        %v2732 = vsel %vm761, %v2703, %v2704
        %v2733 = vsel %vm792, %v2732, %v2731
        %v2734 = vsel %vm794, %v2730, %v2733
        %v2735 = vrot.slane %v2734, 3
        %v2736 = vperm.slane %v2711, 0
        %v2737 = vperm.slane %v2711, 1
        %v2738 = vperm.slane %v2711, 2
        %v2739 = vperm.slane %v2711, 3
        %v2740 = vperm.slane %v2711, 4
        %v2741 = vperm.slane %v2711, 5
        %v2742 = vperm.slane %v2711, 6
        %v2743 = vperm.slane %v2711, 7
        %v2744 = vperm.slane %v2719, 0
        %v2745 = vperm.slane %v2719, 1
        %v2746 = vperm.slane %v2719, 2
        %v2747 = vperm.slane %v2719, 3
        %v2748 = vperm.slane %v2719, 4
        %v2749 = vperm.slane %v2719, 5
        %v2750 = vperm.slane %v2719, 6
        %v2751 = vperm.slane %v2719, 7
        %v2752 = vperm.slane %v2727, 0
        %v2753 = vperm.slane %v2727, 1
        %v2754 = vperm.slane %v2727, 2
        %v2755 = vperm.slane %v2727, 3
        %v2756 = vperm.slane %v2727, 4
        %v2757 = vperm.slane %v2727, 5
        %v2758 = vperm.slane %v2727, 6
        %v2759 = vperm.slane %v2727, 7
        %v2760 = vperm.slane %v2735, 0
        %v2761 = vperm.slane %v2735, 1
        %v2762 = vperm.slane %v2735, 2
        %v2763 = vperm.slane %v2735, 3
        %v2764 = vperm.slane %v2735, 4
        %v2765 = vperm.slane %v2735, 5
        %v2766 = vperm.slane %v2735, 6
        %v2767 = vperm.slane %v2735, 7
        %v2800 = vmul.f32 %v800, %v2736
        %v2801 = vmul.f32 %v800, %v2737
        %v2802 = vmul.f32 %v800, %v2738
        %v2803 = vmul.f32 %v800, %v2739
        %v2804 = vmul.f32 %v800, %v2740
        %v2805 = vmul.f32 %v800, %v2741
        %v2806 = vmul.f32 %v800, %v2742
        %v2807 = vmul.f32 %v800, %v2743
        %v2808 = vmul.f32 %v800, %v2744
        %v2809 = vmul.f32 %v800, %v2745
        %v2810 = vmul.f32 %v800, %v2746
        %v2811 = vmul.f32 %v800, %v2747
        %v2812 = vmul.f32 %v800, %v2748
        %v2813 = vmul.f32 %v800, %v2749
        %v2814 = vmul.f32 %v800, %v2750
        %v2815 = vmul.f32 %v800, %v2751
        %v2816 = vmul.f32 %v800, %v2752
        %v2817 = vmul.f32 %v800, %v2753
        %v2818 = vmul.f32 %v800, %v2754
        %v2819 = vmul.f32 %v800, %v2755
        %v2820 = vmul.f32 %v800, %v2756
        %v2821 = vmul.f32 %v800, %v2757
        %v2822 = vmul.f32 %v800, %v2758
        %v2823 = vmul.f32 %v800, %v2759
        %v2824 = vmul.f32 %v800, %v2760
        %v2825 = vmul.f32 %v800, %v2761
        %v2826 = vmul.f32 %v800, %v2762
        %v2827 = vmul.f32 %v800, %v2763
        %v2828 = vmul.f32 %v800, %v2764
        %v2829 = vmul.f32 %v800, %v2765
        %v2830 = vmul.f32 %v800, %v2766
        %v2831 = vmul.f32 %v800, %v2767
        %v2832 = vadd.f32 %v901, %v2800
        %v2833 = vadd.f32 %v901, %v2801
        %v2834 = vadd.f32 %v901, %v2802
        %v2835 = vadd.f32 %v901, %v2803
        %v2836 = vadd.f32 %v901, %v2804
        %v2837 = vadd.f32 %v901, %v2805
        %v2838 = vadd.f32 %v901, %v2806
        %v2839 = vadd.f32 %v901, %v2807
        %v2840 = vadd.f32 %v901, %v2808
        %v2841 = vadd.f32 %v901, %v2809
        %v2842 = vadd.f32 %v901, %v2810
        %v2843 = vadd.f32 %v901, %v2811
        %v2844 = vadd.f32 %v901, %v2812
        %v2845 = vadd.f32 %v901, %v2813
        %v2846 = vadd.f32 %v901, %v2814
        %v2847 = vadd.f32 %v901, %v2815
        %v2848 = vadd.f32 %v901, %v2816
        %v2849 = vadd.f32 %v901, %v2817
        %v2850 = vadd.f32 %v901, %v2818
        %v2851 = vadd.f32 %v901, %v2819
        %v2852 = vadd.f32 %v901, %v2820
        %v2853 = vadd.f32 %v901, %v2821
        %v2854 = vadd.f32 %v901, %v2822
        %v2855 = vadd.f32 %v901, %v2823
        %v2856 = vadd.f32 %v901, %v2824
        %v2857 = vadd.f32 %v901, %v2825
        %v2858 = vadd.f32 %v901, %v2826
        %v2859 = vadd.f32 %v901, %v2827
        %v2860 = vadd.f32 %v901, %v2828
        %v2861 = vadd.f32 %v901, %v2829
        %v2862 = vadd.f32 %v901, %v2830
        %v2863 = vadd.f32 %v901, %v2831
        %v2864 = vmul.f32 %v2204, %v2832
        %v2865 = vmul.f32 %v2205, %v2833
        %v2866 = vmul.f32 %v2206, %v2834
        %v2867 = vmul.f32 %v2207, %v2835
        %v2868 = vmul.f32 %v2208, %v2836
        %v2869 = vmul.f32 %v2209, %v2837
        %v2870 = vmul.f32 %v2210, %v2838
        %v2871 = vmul.f32 %v2211, %v2839
        %v2872 = vmul.f32 %v2212, %v2840
        %v2873 = vmul.f32 %v2213, %v2841
        %v2874 = vmul.f32 %v2214, %v2842
        %v2875 = vmul.f32 %v2215, %v2843
        %v2876 = vmul.f32 %v2216, %v2844
        %v2877 = vmul.f32 %v2217, %v2845
        %v2878 = vmul.f32 %v2218, %v2846
        %v2879 = vmul.f32 %v2219, %v2847
        %v2880 = vmul.f32 %v2220, %v2848
        %v2881 = vmul.f32 %v2221, %v2849
        %v2882 = vmul.f32 %v2222, %v2850
        %v2883 = vmul.f32 %v2223, %v2851
        %v2884 = vmul.f32 %v2224, %v2852
        %v2885 = vmul.f32 %v2225, %v2853
        %v2886 = vmul.f32 %v2226, %v2854
        %v2887 = vmul.f32 %v2227, %v2855
        %v2888 = vmul.f32 %v2228, %v2856
        %v2889 = vmul.f32 %v2229, %v2857
        %v2890 = vmul.f32 %v2230, %v2858
        %v2891 = vmul.f32 %v2231, %v2859
        %v2892 = vmul.f32 %v2232, %v2860
        %v2893 = vmul.f32 %v2233, %v2861
        %v2894 = vmul.f32 %v2234, %v2862
        %v2895 = vmul.f32 %v2235, %v2863
        %s2896 = scalar_lea.vmem %s7, 4
        %v2897 = vld [vmem:[%s2896] sm:$0xf]
        %s2898 = scalar_lea.vmem %s8, 4
        %v2899 = vld [vmem:[%s2898] sm:$0xf]
        %v2901 = vsel %vm2262, %v2899, 0
        %2903 = vmatpush.msra.mxu0 0.0
        %2904 = vmatpush.msra.mxu0 0.0
        %2905 = vmatpush.msra.mxu0 0.0
        %2906 = vmatpush.msra.mxu0 0.0
        %2907 = vmatpush.msra.mxu0 0.0
        %2908 = vmatpush.msra.mxu0 0.0
        %2909 = vmatpush.msra.mxu0 0.0
        %2910 = vmatpush.msra.mxu0 0.0
        %2911 = vmatpush.msra.mxu0 0.0
        %2912 = vmatpush.msra.mxu0 0.0
        %2913 = vmatpush.msra.mxu0 0.0
        %2914 = vmatpush.msra.mxu0 0.0
        %2915 = vmatpush.msra.mxu0 0.0
        %2916 = vmatpush.msra.mxu0 0.0
        %2917 = vmatpush.msra.mxu0 0.0
        %2918 = vmatpush.msra.mxu0 %v2266
        %2919 = vmatmul.f32.gmra.mxu0 %v2901
        %v2920 = vpop.f32.mrf.mxu0
        %v2921 = vadd.f32 0.0, %v2920
        %2922 = vdwg.mxu0
        %2923 = vmatpush.msra.mxu0 0.0
        %2924 = vmatpush.msra.mxu0 0.0
        %2925 = vmatpush.msra.mxu0 0.0
        %2926 = vmatpush.msra.mxu0 0.0
        %2927 = vmatpush.msra.mxu0 0.0
        %2928 = vmatpush.msra.mxu0 0.0
        %2929 = vmatpush.msra.mxu0 0.0
        %2930 = vmatpush.msra.mxu0 0.0
        %2931 = vmatpush.msra.mxu0 0.0
        %2932 = vmatpush.msra.mxu0 0.0
        %2933 = vmatpush.msra.mxu0 0.0
        %2934 = vmatpush.msra.mxu0 0.0
        %2935 = vmatpush.msra.mxu0 0.0
        %2936 = vmatpush.msra.mxu0 0.0
        %2937 = vmatpush.msra.mxu0 0.0
        %2938 = vmatpush.msra.mxu0 %v2268
        %2939 = vmatmul.f32.gmra.mxu0 %v2901
        %v2940 = vpop.f32.mrf.mxu0
        %v2941 = vadd.f32 0.0, %v2940
        %2942 = vdwg.mxu0
        %2943 = vmatpush.msra.mxu0 0.0
        %2944 = vmatpush.msra.mxu0 0.0
        %2945 = vmatpush.msra.mxu0 0.0
        %2946 = vmatpush.msra.mxu0 0.0
        %2947 = vmatpush.msra.mxu0 0.0
        %2948 = vmatpush.msra.mxu0 0.0
        %2949 = vmatpush.msra.mxu0 0.0
        %2950 = vmatpush.msra.mxu0 0.0
        %2951 = vmatpush.msra.mxu0 0.0
        %2952 = vmatpush.msra.mxu0 0.0
        %2953 = vmatpush.msra.mxu0 0.0
        %2954 = vmatpush.msra.mxu0 0.0
        %2955 = vmatpush.msra.mxu0 0.0
        %2956 = vmatpush.msra.mxu0 0.0
        %2957 = vmatpush.msra.mxu0 0.0
        %2958 = vmatpush.msra.mxu0 %v2270
        %2959 = vmatmul.f32.gmra.mxu0 %v2901
        %v2960 = vpop.f32.mrf.mxu0
        %v2961 = vadd.f32 0.0, %v2960
        %2962 = vdwg.mxu0
        %2963 = vmatpush.msra.mxu0 0.0
        %2964 = vmatpush.msra.mxu0 0.0
        %2965 = vmatpush.msra.mxu0 0.0
        %2966 = vmatpush.msra.mxu0 0.0
        %2967 = vmatpush.msra.mxu0 0.0
        %2968 = vmatpush.msra.mxu0 0.0
        %2969 = vmatpush.msra.mxu0 0.0
        %2970 = vmatpush.msra.mxu0 0.0
        %2971 = vmatpush.msra.mxu0 0.0
        %2972 = vmatpush.msra.mxu0 0.0
        %2973 = vmatpush.msra.mxu0 0.0
        %2974 = vmatpush.msra.mxu0 0.0
        %2975 = vmatpush.msra.mxu0 0.0
        %2976 = vmatpush.msra.mxu0 0.0
        %2977 = vmatpush.msra.mxu0 0.0
        %2978 = vmatpush.msra.mxu0 %v2272
        %2979 = vmatmul.f32.gmra.mxu0 %v2901
        %v2980 = vpop.f32.mrf.mxu0
        %v2981 = vadd.f32 0.0, %v2980
        %2982 = vdwg.mxu0
        %2983 = vmatpush.msra.mxu0 0.0
        %2984 = vmatpush.msra.mxu0 0.0
        %2985 = vmatpush.msra.mxu0 0.0
        %2986 = vmatpush.msra.mxu0 0.0
        %2987 = vmatpush.msra.mxu0 0.0
        %2988 = vmatpush.msra.mxu0 0.0
        %2989 = vmatpush.msra.mxu0 0.0
        %2990 = vmatpush.msra.mxu0 0.0
        %2991 = vmatpush.msra.mxu0 0.0
        %2992 = vmatpush.msra.mxu0 0.0
        %2993 = vmatpush.msra.mxu0 0.0
        %2994 = vmatpush.msra.mxu0 0.0
        %2995 = vmatpush.msra.mxu0 0.0
        %2996 = vmatpush.msra.mxu0 0.0
        %2997 = vmatpush.msra.mxu0 0.0
        %2998 = vmatpush.msra.mxu0 %v2274
        %2999 = vmatmul.f32.gmra.mxu0 %v2901
        %v3000 = vpop.f32.mrf.mxu0
        %v3001 = vadd.f32 0.0, %v3000
        %3002 = vdwg.mxu0
        %3003 = vmatpush.msra.mxu0 0.0
        %3004 = vmatpush.msra.mxu0 0.0
        %3005 = vmatpush.msra.mxu0 0.0
        %3006 = vmatpush.msra.mxu0 0.0
        %3007 = vmatpush.msra.mxu0 0.0
        %3008 = vmatpush.msra.mxu0 0.0
        %3009 = vmatpush.msra.mxu0 0.0
        %3010 = vmatpush.msra.mxu0 0.0
        %3011 = vmatpush.msra.mxu0 0.0
        %3012 = vmatpush.msra.mxu0 0.0
        %3013 = vmatpush.msra.mxu0 0.0
        %3014 = vmatpush.msra.mxu0 0.0
        %3015 = vmatpush.msra.mxu0 0.0
        %3016 = vmatpush.msra.mxu0 0.0
        %3017 = vmatpush.msra.mxu0 0.0
        %3018 = vmatpush.msra.mxu0 %v2276
        %3019 = vmatmul.f32.gmra.mxu0 %v2901
        %v3020 = vpop.f32.mrf.mxu0
        %v3021 = vadd.f32 0.0, %v3020
        %3022 = vdwg.mxu0
        %3023 = vmatpush.msra.mxu0 0.0
        %3024 = vmatpush.msra.mxu0 0.0
        %3025 = vmatpush.msra.mxu0 0.0
        %3026 = vmatpush.msra.mxu0 0.0
        %3027 = vmatpush.msra.mxu0 0.0
        %3028 = vmatpush.msra.mxu0 0.0
        %3029 = vmatpush.msra.mxu0 0.0
        %3030 = vmatpush.msra.mxu0 0.0
        %3031 = vmatpush.msra.mxu0 0.0
        %3032 = vmatpush.msra.mxu0 0.0
        %3033 = vmatpush.msra.mxu0 0.0
        %3034 = vmatpush.msra.mxu0 0.0
        %3035 = vmatpush.msra.mxu0 0.0
        %3036 = vmatpush.msra.mxu0 0.0
        %3037 = vmatpush.msra.mxu0 0.0
        %3038 = vmatpush.msra.mxu0 %v2278
        %3039 = vmatmul.f32.gmra.mxu0 %v2901
        %v3040 = vpop.f32.mrf.mxu0
        %v3041 = vadd.f32 0.0, %v3040
        %3042 = vdwg.mxu0
        %3043 = vmatpush.msra.mxu0 0.0
        %3044 = vmatpush.msra.mxu0 0.0
        %3045 = vmatpush.msra.mxu0 0.0
        %3046 = vmatpush.msra.mxu0 0.0
        %3047 = vmatpush.msra.mxu0 0.0
        %3048 = vmatpush.msra.mxu0 0.0
        %3049 = vmatpush.msra.mxu0 0.0
        %3050 = vmatpush.msra.mxu0 0.0
        %3051 = vmatpush.msra.mxu0 0.0
        %3052 = vmatpush.msra.mxu0 0.0
        %3053 = vmatpush.msra.mxu0 0.0
        %3054 = vmatpush.msra.mxu0 0.0
        %3055 = vmatpush.msra.mxu0 0.0
        %3056 = vmatpush.msra.mxu0 0.0
        %3057 = vmatpush.msra.mxu0 0.0
        %3058 = vmatpush.msra.mxu0 %v2280
        %3059 = vmatmul.f32.gmra.mxu0 %v2901
        %v3060 = vpop.f32.mrf.mxu0
        %v3061 = vadd.f32 0.0, %v3060
        %3062 = vdwg.mxu0
        %v3064 = vsel %vm458, %v2897, 0
        %3066 = vmatpush.msra.mxu0 0.0
        %3067 = vmatpush.msra.mxu0 0.0
        %3068 = vmatpush.msra.mxu0 0.0
        %3069 = vmatpush.msra.mxu0 0.0
        %3070 = vmatpush.msra.mxu0 0.0
        %3071 = vmatpush.msra.mxu0 0.0
        %3072 = vmatpush.msra.mxu0 0.0
        %3073 = vmatpush.msra.mxu0 0.0
        %3074 = vmatpush.msra.mxu0 0.0
        %3075 = vmatpush.msra.mxu0 0.0
        %3076 = vmatpush.msra.mxu0 0.0
        %3077 = vmatpush.msra.mxu0 0.0
        %3078 = vmatpush.msra.mxu0 0.0
        %3079 = vmatpush.msra.mxu0 0.0
        %3080 = vmatpush.msra.mxu0 0.0
        %3081 = vmatpush.msra.mxu0 %v464
        %3082 = vmatmul.f32.gmra.mxu0 %v3064
        %v3083 = vpop.f32.mrf.mxu0
        %v3084 = vadd.f32 %v2921, %v3083
        %3085 = vdwg.mxu0
        %3086 = vmatpush.msra.mxu0 0.0
        %3087 = vmatpush.msra.mxu0 0.0
        %3088 = vmatpush.msra.mxu0 0.0
        %3089 = vmatpush.msra.mxu0 0.0
        %3090 = vmatpush.msra.mxu0 0.0
        %3091 = vmatpush.msra.mxu0 0.0
        %3092 = vmatpush.msra.mxu0 0.0
        %3093 = vmatpush.msra.mxu0 0.0
        %3094 = vmatpush.msra.mxu0 0.0
        %3095 = vmatpush.msra.mxu0 0.0
        %3096 = vmatpush.msra.mxu0 0.0
        %3097 = vmatpush.msra.mxu0 0.0
        %3098 = vmatpush.msra.mxu0 0.0
        %3099 = vmatpush.msra.mxu0 0.0
        %3100 = vmatpush.msra.mxu0 0.0
        %3101 = vmatpush.msra.mxu0 %v467
        %3102 = vmatmul.f32.gmra.mxu0 %v3064
        %v3103 = vpop.f32.mrf.mxu0
        %v3104 = vadd.f32 %v2941, %v3103
        %3105 = vdwg.mxu0
        %3106 = vmatpush.msra.mxu0 0.0
        %3107 = vmatpush.msra.mxu0 0.0
        %3108 = vmatpush.msra.mxu0 0.0
        %3109 = vmatpush.msra.mxu0 0.0
        %3110 = vmatpush.msra.mxu0 0.0
        %3111 = vmatpush.msra.mxu0 0.0
        %3112 = vmatpush.msra.mxu0 0.0
        %3113 = vmatpush.msra.mxu0 0.0
        %3114 = vmatpush.msra.mxu0 0.0
        %3115 = vmatpush.msra.mxu0 0.0
        %3116 = vmatpush.msra.mxu0 0.0
        %3117 = vmatpush.msra.mxu0 0.0
        %3118 = vmatpush.msra.mxu0 0.0
        %3119 = vmatpush.msra.mxu0 0.0
        %3120 = vmatpush.msra.mxu0 0.0
        %3121 = vmatpush.msra.mxu0 %v470
        %3122 = vmatmul.f32.gmra.mxu0 %v3064
        %v3123 = vpop.f32.mrf.mxu0
        %v3124 = vadd.f32 %v2961, %v3123
        %3125 = vdwg.mxu0
        %3126 = vmatpush.msra.mxu0 0.0
        %3127 = vmatpush.msra.mxu0 0.0
        %3128 = vmatpush.msra.mxu0 0.0
        %3129 = vmatpush.msra.mxu0 0.0
        %3130 = vmatpush.msra.mxu0 0.0
        %3131 = vmatpush.msra.mxu0 0.0
        %3132 = vmatpush.msra.mxu0 0.0
        %3133 = vmatpush.msra.mxu0 0.0
        %3134 = vmatpush.msra.mxu0 0.0
        %3135 = vmatpush.msra.mxu0 0.0
        %3136 = vmatpush.msra.mxu0 0.0
        %3137 = vmatpush.msra.mxu0 0.0
        %3138 = vmatpush.msra.mxu0 0.0
        %3139 = vmatpush.msra.mxu0 0.0
        %3140 = vmatpush.msra.mxu0 0.0
        %3141 = vmatpush.msra.mxu0 %v473
        %3142 = vmatmul.f32.gmra.mxu0 %v3064
        %v3143 = vpop.f32.mrf.mxu0
        %v3144 = vadd.f32 %v2981, %v3143
        %3145 = vdwg.mxu0
        %3146 = vmatpush.msra.mxu0 0.0
        %3147 = vmatpush.msra.mxu0 0.0
        %3148 = vmatpush.msra.mxu0 0.0
        %3149 = vmatpush.msra.mxu0 0.0
        %3150 = vmatpush.msra.mxu0 0.0
        %3151 = vmatpush.msra.mxu0 0.0
        %3152 = vmatpush.msra.mxu0 0.0
        %3153 = vmatpush.msra.mxu0 0.0
        %3154 = vmatpush.msra.mxu0 0.0
        %3155 = vmatpush.msra.mxu0 0.0
        %3156 = vmatpush.msra.mxu0 0.0
        %3157 = vmatpush.msra.mxu0 0.0
        %3158 = vmatpush.msra.mxu0 0.0
        %3159 = vmatpush.msra.mxu0 0.0
        %3160 = vmatpush.msra.mxu0 0.0
        %3161 = vmatpush.msra.mxu0 %v476
        %3162 = vmatmul.f32.gmra.mxu0 %v3064
        %v3163 = vpop.f32.mrf.mxu0
        %v3164 = vadd.f32 %v3001, %v3163
        %3165 = vdwg.mxu0
        %3166 = vmatpush.msra.mxu0 0.0
        %3167 = vmatpush.msra.mxu0 0.0
        %3168 = vmatpush.msra.mxu0 0.0
        %3169 = vmatpush.msra.mxu0 0.0
        %3170 = vmatpush.msra.mxu0 0.0
        %3171 = vmatpush.msra.mxu0 0.0
        %3172 = vmatpush.msra.mxu0 0.0
        %3173 = vmatpush.msra.mxu0 0.0
        %3174 = vmatpush.msra.mxu0 0.0
        %3175 = vmatpush.msra.mxu0 0.0
        %3176 = vmatpush.msra.mxu0 0.0
        %3177 = vmatpush.msra.mxu0 0.0
        %3178 = vmatpush.msra.mxu0 0.0
        %3179 = vmatpush.msra.mxu0 0.0
        %3180 = vmatpush.msra.mxu0 0.0
        %3181 = vmatpush.msra.mxu0 %v479
        %3182 = vmatmul.f32.gmra.mxu0 %v3064
        %v3183 = vpop.f32.mrf.mxu0
        %v3184 = vadd.f32 %v3021, %v3183
        %3185 = vdwg.mxu0
        %3186 = vmatpush.msra.mxu0 0.0
        %3187 = vmatpush.msra.mxu0 0.0
        %3188 = vmatpush.msra.mxu0 0.0
        %3189 = vmatpush.msra.mxu0 0.0
        %3190 = vmatpush.msra.mxu0 0.0
        %3191 = vmatpush.msra.mxu0 0.0
        %3192 = vmatpush.msra.mxu0 0.0
        %3193 = vmatpush.msra.mxu0 0.0
        %3194 = vmatpush.msra.mxu0 0.0
        %3195 = vmatpush.msra.mxu0 0.0
        %3196 = vmatpush.msra.mxu0 0.0
        %3197 = vmatpush.msra.mxu0 0.0
        %3198 = vmatpush.msra.mxu0 0.0
        %3199 = vmatpush.msra.mxu0 0.0
        %3200 = vmatpush.msra.mxu0 0.0
        %3201 = vmatpush.msra.mxu0 %v482
        %3202 = vmatmul.f32.gmra.mxu0 %v3064
        %v3203 = vpop.f32.mrf.mxu0
        %v3204 = vadd.f32 %v3041, %v3203
        %3205 = vdwg.mxu0
        %3206 = vmatpush.msra.mxu0 0.0
        %3207 = vmatpush.msra.mxu0 0.0
        %3208 = vmatpush.msra.mxu0 0.0
        %3209 = vmatpush.msra.mxu0 0.0
        %3210 = vmatpush.msra.mxu0 0.0
        %3211 = vmatpush.msra.mxu0 0.0
        %3212 = vmatpush.msra.mxu0 0.0
        %3213 = vmatpush.msra.mxu0 0.0
        %3214 = vmatpush.msra.mxu0 0.0
        %3215 = vmatpush.msra.mxu0 0.0
        %3216 = vmatpush.msra.mxu0 0.0
        %3217 = vmatpush.msra.mxu0 0.0
        %3218 = vmatpush.msra.mxu0 0.0
        %3219 = vmatpush.msra.mxu0 0.0
        %3220 = vmatpush.msra.mxu0 0.0
        %3221 = vmatpush.msra.mxu0 %v485
        %3222 = vmatmul.f32.gmra.mxu0 %v3064
        %v3223 = vpop.f32.mrf.mxu0
        %v3224 = vadd.f32 %v3061, %v3223
        %3225 = vdwg.mxu0
        %s3226 = scalar_lea.vmem %s9, 32
        %v3227 = vld [vmem:[%s3226] sm:$0xff]
        %v3228 = vld [vmem:[%s3226 + $0x8] sm:$0xff]
        %v3229 = vld [vmem:[%s3226 + $0x10] sm:$0xff]
        %v3230 = vld [vmem:[%s3226 + $0x18] sm:$0xff]
        %3235 = vst [vmem:[#allocation1] ss:$2 sm:$0xff] %v3227
        %s3236 = scalar_lea.vmem [#allocation1], 16
        %3237 = vst [vmem:[%s3236] ss:$2 sm:$0xff] %v3228
        %s3238 = scalar_lea.vmem [#allocation1], 32
        %3239 = vst [vmem:[%s3238] ss:$2 sm:$0xff] %v3229
        %s3240 = scalar_lea.vmem [#allocation1], 48
        %3241 = vst [vmem:[%s3240] ss:$2 sm:$0xff] %v3230
        %v3242 = vld.sshfl [vmem:[#allocation1] sm:$0xff pattern:$0x75316420]
        %v3243 = vld.sshfl [vmem:[#allocation1 + $0x8] sm:$0xff pattern:$0x75316420]
        %v3244 = vld.sshfl [vmem:[#allocation1 + $0x10] sm:$0xff pattern:$0x75316420]
        %v3245 = vld.sshfl [vmem:[#allocation1 + $0x18] sm:$0xff pattern:$0x75316420]
        %v3246 = vld.sshfl [vmem:[#allocation1 + $0x20] sm:$0xff pattern:$0x75316420]
        %v3247 = vld.sshfl [vmem:[#allocation1 + $0x28] sm:$0xff pattern:$0x75316420]
        %v3248 = vld.sshfl [vmem:[#allocation1 + $0x30] sm:$0xff pattern:$0x75316420]
        %v3249 = vld.sshfl [vmem:[#allocation1 + $0x38] sm:$0xff pattern:$0x75316420]
        %v3258 = vmul.f32 %v3084, %v3242
        %v3259 = vmul.f32 %v3104, %v3243
        %v3260 = vmul.f32 %v3124, %v3244
        %v3261 = vmul.f32 %v3144, %v3245
        %v3262 = vmul.f32 %v3164, %v3246
        %v3263 = vmul.f32 %v3184, %v3247
        %v3264 = vmul.f32 %v3204, %v3248
        %v3265 = vmul.f32 %v3224, %v3249
        %s3266 = scalar_lea.vmem %s10, 4
        %v3267 = vld [vmem:[%s3266] sm:$0xf]
        %3269 = vset.pattern.permute.xlu0 0
        %3270 = vperm.xlu0 %3269, %v3267
        %v3271 = vpop.permute.xlu0 %3270
        %v3273 = vsub.f32 %v3258, %v3271
        %v3274 = vsub.f32 %v3259, %v3271
        %v3275 = vsub.f32 %v3260, %v3271
        %v3276 = vsub.f32 %v3261, %v3271
        %v3277 = vsub.f32 %v3262, %v3271
        %v3278 = vsub.f32 %v3263, %v3271
        %v3279 = vsub.f32 %v3264, %v3271
        %v3280 = vsub.f32 %v3265, %v3271
        %v3281 = vmul.f32 %v3273, 0.5
        %v3282 = vmul.f32 %v3274, 0.5
        %v3283 = vmul.f32 %v3275, 0.5
        %v3284 = vmul.f32 %v3276, 0.5
        %v3285 = vmul.f32 %v3277, 0.5
        %v3286 = vmul.f32 %v3278, 0.5
        %v3287 = vmul.f32 %v3279, 0.5
        %v3288 = vmul.f32 %v3280, 0.5
        %v3289 = vadd.f32 %v3281, 0.5
        %v3290 = vadd.f32 %v3282, 0.5
        %v3291 = vadd.f32 %v3283, 0.5
        %v3292 = vadd.f32 %v3284, 0.5
        %v3293 = vadd.f32 %v3285, 0.5
        %v3294 = vadd.f32 %v3286, 0.5
        %v3295 = vadd.f32 %v3287, 0.5
        %v3296 = vadd.f32 %v3288, 0.5
        %v3297 = vmax.f32 %v3289, 0.0
        %v3298 = vmax.f32 %v3290, 0.0
        %v3299 = vmax.f32 %v3291, 0.0
        %v3300 = vmax.f32 %v3292, 0.0
        %v3301 = vmax.f32 %v3293, 0.0
        %v3302 = vmax.f32 %v3294, 0.0
        %v3303 = vmax.f32 %v3295, 0.0
        %v3304 = vmax.f32 %v3296, 0.0
        %v3305 = vmin.f32 %v3297, 1.0
        %v3306 = vmin.f32 %v3298, 1.0
        %v3307 = vmin.f32 %v3299, 1.0
        %v3308 = vmin.f32 %v3300, 1.0
        %v3309 = vmin.f32 %v3301, 1.0
        %v3310 = vmin.f32 %v3302, 1.0
        %v3311 = vmin.f32 %v3303, 1.0
        %v3312 = vmin.f32 %v3304, 1.0
        %v3321 = vrot.slane %v3306, 7
        %v3322 = vrot.slane %v3307, 6
        %v3323 = vrot.slane %v3308, 5
        %v3324 = vrot.slane %v3309, 4
        %v3325 = vrot.slane %v3310, 3
        %v3326 = vrot.slane %v3311, 2
        %v3327 = vrot.slane %v3312, 1
        %v3328 = vsel %vm747, %v3305, %v3321
        %v3329 = vsel %vm749, %v3322, %v3323
        %v3330 = vsel %vm751, %v3328, %v3329
        %v3331 = vsel %vm753, %v3324, %v3325
        %v3332 = vsel %vm755, %v3326, %v3327
        %v3333 = vsel %vm757, %v3331, %v3332
        %v3334 = vsel %vm759, %v3330, %v3333
        %v3335 = vsel %vm761, %v3305, %v3321
        %v3336 = vsel %vm763, %v3322, %v3323
        %v3337 = vsel %vm765, %v3335, %v3336
        %v3338 = vsel %vm767, %v3324, %v3325
        %v3339 = vsel %vm769, %v3327, %v3326
        %v3340 = vsel %vm771, %v3338, %v3339
        %v3341 = vsel %vm773, %v3337, %v3340
        %v3342 = vrot.slane %v3341, 1
        %v3343 = vsel %vm749, %v3305, %v3321
        %v3344 = vsel %vm753, %v3322, %v3323
        %v3345 = vsel %vm778, %v3343, %v3344
        %v3346 = vsel %vm755, %v3324, %v3325
        %v3347 = vsel %vm747, %v3326, %v3327
        %v3348 = vsel %vm462, %v3347, %v3346
        %v3349 = vsel %vm783, %v3345, %v3348
        %v3350 = vrot.slane %v3349, 2
        %v3351 = vsel %vm763, %v3305, %v3321
        %v3352 = vsel %vm767, %v3322, %v3323
        %v3353 = vsel %vm788, %v3351, %v3352
        %v3354 = vsel %vm769, %v3325, %v3324
        %v3355 = vsel %vm761, %v3326, %v3327
        %v3356 = vsel %vm792, %v3355, %v3354
        %v3357 = vsel %vm794, %v3353, %v3356
        %v3358 = vrot.slane %v3357, 3
        %v3359 = vperm.slane %v3334, 0
        %v3360 = vperm.slane %v3334, 1
        %v3361 = vperm.slane %v3334, 2
        %v3362 = vperm.slane %v3334, 3
        %v3363 = vperm.slane %v3334, 4
        %v3364 = vperm.slane %v3334, 5
        %v3365 = vperm.slane %v3334, 6
        %v3366 = vperm.slane %v3334, 7
        %v3367 = vperm.slane %v3342, 0
        %v3368 = vperm.slane %v3342, 1
        %v3369 = vperm.slane %v3342, 2
        %v3370 = vperm.slane %v3342, 3
        %v3371 = vperm.slane %v3342, 4
        %v3372 = vperm.slane %v3342, 5
        %v3373 = vperm.slane %v3342, 6
        %v3374 = vperm.slane %v3342, 7
        %v3375 = vperm.slane %v3350, 0
        %v3376 = vperm.slane %v3350, 1
        %v3377 = vperm.slane %v3350, 2
        %v3378 = vperm.slane %v3350, 3
        %v3379 = vperm.slane %v3350, 4
        %v3380 = vperm.slane %v3350, 5
        %v3381 = vperm.slane %v3350, 6
        %v3382 = vperm.slane %v3350, 7
        %v3383 = vperm.slane %v3358, 0
        %v3384 = vperm.slane %v3358, 1
        %v3385 = vperm.slane %v3358, 2
        %v3386 = vperm.slane %v3358, 3
        %v3387 = vperm.slane %v3358, 4
        %v3388 = vperm.slane %v3358, 5
        %v3389 = vperm.slane %v3358, 6
        %v3390 = vperm.slane %v3358, 7
        %v3423 = vmul.f32 %v1268, %v3359
        %v3424 = vmul.f32 %v1268, %v3360
        %v3425 = vmul.f32 %v1268, %v3361
        %v3426 = vmul.f32 %v1268, %v3362
        %v3427 = vmul.f32 %v1268, %v3363
        %v3428 = vmul.f32 %v1268, %v3364
        %v3429 = vmul.f32 %v1268, %v3365
        %v3430 = vmul.f32 %v1268, %v3366
        %v3431 = vmul.f32 %v1268, %v3367
        %v3432 = vmul.f32 %v1268, %v3368
        %v3433 = vmul.f32 %v1268, %v3369
        %v3434 = vmul.f32 %v1268, %v3370
        %v3435 = vmul.f32 %v1268, %v3371
        %v3436 = vmul.f32 %v1268, %v3372
        %v3437 = vmul.f32 %v1268, %v3373
        %v3438 = vmul.f32 %v1268, %v3374
        %v3439 = vmul.f32 %v1268, %v3375
        %v3440 = vmul.f32 %v1268, %v3376
        %v3441 = vmul.f32 %v1268, %v3377
        %v3442 = vmul.f32 %v1268, %v3378
        %v3443 = vmul.f32 %v1268, %v3379
        %v3444 = vmul.f32 %v1268, %v3380
        %v3445 = vmul.f32 %v1268, %v3381
        %v3446 = vmul.f32 %v1268, %v3382
        %v3447 = vmul.f32 %v1268, %v3383
        %v3448 = vmul.f32 %v1268, %v3384
        %v3449 = vmul.f32 %v1268, %v3385
        %v3450 = vmul.f32 %v1268, %v3386
        %v3451 = vmul.f32 %v1268, %v3387
        %v3452 = vmul.f32 %v1268, %v3388
        %v3453 = vmul.f32 %v1268, %v3389
        %v3454 = vmul.f32 %v1268, %v3390
        %v3455 = vadd.f32 %v1369, %v3423
        %v3456 = vadd.f32 %v1369, %v3424
        %v3457 = vadd.f32 %v1369, %v3425
        %v3458 = vadd.f32 %v1369, %v3426
        %v3459 = vadd.f32 %v1369, %v3427
        %v3460 = vadd.f32 %v1369, %v3428
        %v3461 = vadd.f32 %v1369, %v3429
        %v3462 = vadd.f32 %v1369, %v3430
        %v3463 = vadd.f32 %v1369, %v3431
        %v3464 = vadd.f32 %v1369, %v3432
        %v3465 = vadd.f32 %v1369, %v3433
        %v3466 = vadd.f32 %v1369, %v3434
        %v3467 = vadd.f32 %v1369, %v3435
        %v3468 = vadd.f32 %v1369, %v3436
        %v3469 = vadd.f32 %v1369, %v3437
        %v3470 = vadd.f32 %v1369, %v3438
        %v3471 = vadd.f32 %v1369, %v3439
        %v3472 = vadd.f32 %v1369, %v3440
        %v3473 = vadd.f32 %v1369, %v3441
        %v3474 = vadd.f32 %v1369, %v3442
        %v3475 = vadd.f32 %v1369, %v3443
        %v3476 = vadd.f32 %v1369, %v3444
        %v3477 = vadd.f32 %v1369, %v3445
        %v3478 = vadd.f32 %v1369, %v3446
        %v3479 = vadd.f32 %v1369, %v3447
        %v3480 = vadd.f32 %v1369, %v3448
        %v3481 = vadd.f32 %v1369, %v3449
        %v3482 = vadd.f32 %v1369, %v3450
        %v3483 = vadd.f32 %v1369, %v3451
        %v3484 = vadd.f32 %v1369, %v3452
        %v3485 = vadd.f32 %v1369, %v3453
        %v3486 = vadd.f32 %v1369, %v3454
        %v3487 = vmul.f32 %v2864, %v3455
        %v3488 = vmul.f32 %v2865, %v3456
        %v3489 = vmul.f32 %v2866, %v3457
        %v3490 = vmul.f32 %v2867, %v3458
        %v3491 = vmul.f32 %v2868, %v3459
        %v3492 = vmul.f32 %v2869, %v3460
        %v3493 = vmul.f32 %v2870, %v3461
        %v3494 = vmul.f32 %v2871, %v3462
        %v3495 = vmul.f32 %v2872, %v3463
        %v3496 = vmul.f32 %v2873, %v3464
        %v3497 = vmul.f32 %v2874, %v3465
        %v3498 = vmul.f32 %v2875, %v3466
        %v3499 = vmul.f32 %v2876, %v3467
        %v3500 = vmul.f32 %v2877, %v3468
        %v3501 = vmul.f32 %v2878, %v3469
        %v3502 = vmul.f32 %v2879, %v3470
        %v3503 = vmul.f32 %v2880, %v3471
        %v3504 = vmul.f32 %v2881, %v3472
        %v3505 = vmul.f32 %v2882, %v3473
        %v3506 = vmul.f32 %v2883, %v3474
        %v3507 = vmul.f32 %v2884, %v3475
        %v3508 = vmul.f32 %v2885, %v3476
        %v3509 = vmul.f32 %v2886, %v3477
        %v3510 = vmul.f32 %v2887, %v3478
        %v3511 = vmul.f32 %v2888, %v3479
        %v3512 = vmul.f32 %v2889, %v3480
        %v3513 = vmul.f32 %v2890, %v3481
        %v3514 = vmul.f32 %v2891, %v3482
        %v3515 = vmul.f32 %v2892, %v3483
        %v3516 = vmul.f32 %v2893, %v3484
        %v3517 = vmul.f32 %v2894, %v3485
        %v3518 = vmul.f32 %v2895, %v3486
        %s3519 = scalar_lea.vmem %s7, 8
        %v3520 = vld [vmem:[%s3519] sm:$0xf]
        %s3521 = scalar_lea.vmem %s8, 8
        %v3522 = vld [vmem:[%s3521] sm:$0xf]
        %v3524 = vsel %vm2262, %v3522, 0
        %3526 = vmatpush.msra.mxu0 0.0
        %3527 = vmatpush.msra.mxu0 0.0
        %3528 = vmatpush.msra.mxu0 0.0
        %3529 = vmatpush.msra.mxu0 0.0
        %3530 = vmatpush.msra.mxu0 0.0
        %3531 = vmatpush.msra.mxu0 0.0
        %3532 = vmatpush.msra.mxu0 0.0
        %3533 = vmatpush.msra.mxu0 0.0
        %3534 = vmatpush.msra.mxu0 0.0
        %3535 = vmatpush.msra.mxu0 0.0
        %3536 = vmatpush.msra.mxu0 0.0
        %3537 = vmatpush.msra.mxu0 0.0
        %3538 = vmatpush.msra.mxu0 0.0
        %3539 = vmatpush.msra.mxu0 0.0
        %3540 = vmatpush.msra.mxu0 0.0
        %3541 = vmatpush.msra.mxu0 %v2266
        %3542 = vmatmul.f32.gmra.mxu0 %v3524
        %v3543 = vpop.f32.mrf.mxu0
        %v3544 = vadd.f32 0.0, %v3543
        %3545 = vdwg.mxu0
        %3546 = vmatpush.msra.mxu0 0.0
        %3547 = vmatpush.msra.mxu0 0.0
        %3548 = vmatpush.msra.mxu0 0.0
        %3549 = vmatpush.msra.mxu0 0.0
        %3550 = vmatpush.msra.mxu0 0.0
        %3551 = vmatpush.msra.mxu0 0.0
        %3552 = vmatpush.msra.mxu0 0.0
        %3553 = vmatpush.msra.mxu0 0.0
        %3554 = vmatpush.msra.mxu0 0.0
        %3555 = vmatpush.msra.mxu0 0.0
        %3556 = vmatpush.msra.mxu0 0.0
        %3557 = vmatpush.msra.mxu0 0.0
        %3558 = vmatpush.msra.mxu0 0.0
        %3559 = vmatpush.msra.mxu0 0.0
        %3560 = vmatpush.msra.mxu0 0.0
        %3561 = vmatpush.msra.mxu0 %v2268
        %3562 = vmatmul.f32.gmra.mxu0 %v3524
        %v3563 = vpop.f32.mrf.mxu0
        %v3564 = vadd.f32 0.0, %v3563
        %3565 = vdwg.mxu0
        %3566 = vmatpush.msra.mxu0 0.0
        %3567 = vmatpush.msra.mxu0 0.0
        %3568 = vmatpush.msra.mxu0 0.0
        %3569 = vmatpush.msra.mxu0 0.0
        %3570 = vmatpush.msra.mxu0 0.0
        %3571 = vmatpush.msra.mxu0 0.0
        %3572 = vmatpush.msra.mxu0 0.0
        %3573 = vmatpush.msra.mxu0 0.0
        %3574 = vmatpush.msra.mxu0 0.0
        %3575 = vmatpush.msra.mxu0 0.0
        %3576 = vmatpush.msra.mxu0 0.0
        %3577 = vmatpush.msra.mxu0 0.0
        %3578 = vmatpush.msra.mxu0 0.0
        %3579 = vmatpush.msra.mxu0 0.0
        %3580 = vmatpush.msra.mxu0 0.0
        %3581 = vmatpush.msra.mxu0 %v2270
        %3582 = vmatmul.f32.gmra.mxu0 %v3524
        %v3583 = vpop.f32.mrf.mxu0
        %v3584 = vadd.f32 0.0, %v3583
        %3585 = vdwg.mxu0
        %3586 = vmatpush.msra.mxu0 0.0
        %3587 = vmatpush.msra.mxu0 0.0
        %3588 = vmatpush.msra.mxu0 0.0
        %3589 = vmatpush.msra.mxu0 0.0
        %3590 = vmatpush.msra.mxu0 0.0
        %3591 = vmatpush.msra.mxu0 0.0
        %3592 = vmatpush.msra.mxu0 0.0
        %3593 = vmatpush.msra.mxu0 0.0
        %3594 = vmatpush.msra.mxu0 0.0
        %3595 = vmatpush.msra.mxu0 0.0
        %3596 = vmatpush.msra.mxu0 0.0
        %3597 = vmatpush.msra.mxu0 0.0
        %3598 = vmatpush.msra.mxu0 0.0
        %3599 = vmatpush.msra.mxu0 0.0
        %3600 = vmatpush.msra.mxu0 0.0
        %3601 = vmatpush.msra.mxu0 %v2272
        %3602 = vmatmul.f32.gmra.mxu0 %v3524
        %v3603 = vpop.f32.mrf.mxu0
        %v3604 = vadd.f32 0.0, %v3603
        %3605 = vdwg.mxu0
        %3606 = vmatpush.msra.mxu0 0.0
        %3607 = vmatpush.msra.mxu0 0.0
        %3608 = vmatpush.msra.mxu0 0.0
        %3609 = vmatpush.msra.mxu0 0.0
        %3610 = vmatpush.msra.mxu0 0.0
        %3611 = vmatpush.msra.mxu0 0.0
        %3612 = vmatpush.msra.mxu0 0.0
        %3613 = vmatpush.msra.mxu0 0.0
        %3614 = vmatpush.msra.mxu0 0.0
        %3615 = vmatpush.msra.mxu0 0.0
        %3616 = vmatpush.msra.mxu0 0.0
        %3617 = vmatpush.msra.mxu0 0.0
        %3618 = vmatpush.msra.mxu0 0.0
        %3619 = vmatpush.msra.mxu0 0.0
        %3620 = vmatpush.msra.mxu0 0.0
        %3621 = vmatpush.msra.mxu0 %v2274
        %3622 = vmatmul.f32.gmra.mxu0 %v3524
        %v3623 = vpop.f32.mrf.mxu0
        %v3624 = vadd.f32 0.0, %v3623
        %3625 = vdwg.mxu0
        %3626 = vmatpush.msra.mxu0 0.0
        %3627 = vmatpush.msra.mxu0 0.0
        %3628 = vmatpush.msra.mxu0 0.0
        %3629 = vmatpush.msra.mxu0 0.0
        %3630 = vmatpush.msra.mxu0 0.0
        %3631 = vmatpush.msra.mxu0 0.0
        %3632 = vmatpush.msra.mxu0 0.0
        %3633 = vmatpush.msra.mxu0 0.0
        %3634 = vmatpush.msra.mxu0 0.0
        %3635 = vmatpush.msra.mxu0 0.0
        %3636 = vmatpush.msra.mxu0 0.0
        %3637 = vmatpush.msra.mxu0 0.0
        %3638 = vmatpush.msra.mxu0 0.0
        %3639 = vmatpush.msra.mxu0 0.0
        %3640 = vmatpush.msra.mxu0 0.0
        %3641 = vmatpush.msra.mxu0 %v2276
        %3642 = vmatmul.f32.gmra.mxu0 %v3524
        %v3643 = vpop.f32.mrf.mxu0
        %v3644 = vadd.f32 0.0, %v3643
        %3645 = vdwg.mxu0
        %3646 = vmatpush.msra.mxu0 0.0
        %3647 = vmatpush.msra.mxu0 0.0
        %3648 = vmatpush.msra.mxu0 0.0
        %3649 = vmatpush.msra.mxu0 0.0
        %3650 = vmatpush.msra.mxu0 0.0
        %3651 = vmatpush.msra.mxu0 0.0
        %3652 = vmatpush.msra.mxu0 0.0
        %3653 = vmatpush.msra.mxu0 0.0
        %3654 = vmatpush.msra.mxu0 0.0
        %3655 = vmatpush.msra.mxu0 0.0
        %3656 = vmatpush.msra.mxu0 0.0
        %3657 = vmatpush.msra.mxu0 0.0
        %3658 = vmatpush.msra.mxu0 0.0
        %3659 = vmatpush.msra.mxu0 0.0
        %3660 = vmatpush.msra.mxu0 0.0
        %3661 = vmatpush.msra.mxu0 %v2278
        %3662 = vmatmul.f32.gmra.mxu0 %v3524
        %v3663 = vpop.f32.mrf.mxu0
        %v3664 = vadd.f32 0.0, %v3663
        %3665 = vdwg.mxu0
        %3666 = vmatpush.msra.mxu0 0.0
        %3667 = vmatpush.msra.mxu0 0.0
        %3668 = vmatpush.msra.mxu0 0.0
        %3669 = vmatpush.msra.mxu0 0.0
        %3670 = vmatpush.msra.mxu0 0.0
        %3671 = vmatpush.msra.mxu0 0.0
        %3672 = vmatpush.msra.mxu0 0.0
        %3673 = vmatpush.msra.mxu0 0.0
        %3674 = vmatpush.msra.mxu0 0.0
        %3675 = vmatpush.msra.mxu0 0.0
        %3676 = vmatpush.msra.mxu0 0.0
        %3677 = vmatpush.msra.mxu0 0.0
        %3678 = vmatpush.msra.mxu0 0.0
        %3679 = vmatpush.msra.mxu0 0.0
        %3680 = vmatpush.msra.mxu0 0.0
        %3681 = vmatpush.msra.mxu0 %v2280
        %3682 = vmatmul.f32.gmra.mxu0 %v3524
        %v3683 = vpop.f32.mrf.mxu0
        %v3684 = vadd.f32 0.0, %v3683
        %3685 = vdwg.mxu0
        %v3687 = vsel %vm458, %v3520, 0
        %3689 = vmatpush.msra.mxu0 0.0
        %3690 = vmatpush.msra.mxu0 0.0
        %3691 = vmatpush.msra.mxu0 0.0
        %3692 = vmatpush.msra.mxu0 0.0
        %3693 = vmatpush.msra.mxu0 0.0
        %3694 = vmatpush.msra.mxu0 0.0
        %3695 = vmatpush.msra.mxu0 0.0
        %3696 = vmatpush.msra.mxu0 0.0
        %3697 = vmatpush.msra.mxu0 0.0
        %3698 = vmatpush.msra.mxu0 0.0
        %3699 = vmatpush.msra.mxu0 0.0
        %3700 = vmatpush.msra.mxu0 0.0
        %3701 = vmatpush.msra.mxu0 0.0
        %3702 = vmatpush.msra.mxu0 0.0
        %3703 = vmatpush.msra.mxu0 0.0
        %3704 = vmatpush.msra.mxu0 %v464
        %3705 = vmatmul.f32.gmra.mxu0 %v3687
        %v3706 = vpop.f32.mrf.mxu0
        %v3707 = vadd.f32 %v3544, %v3706
        %3708 = vdwg.mxu0
        %3709 = vmatpush.msra.mxu0 0.0
        %3710 = vmatpush.msra.mxu0 0.0
        %3711 = vmatpush.msra.mxu0 0.0
        %3712 = vmatpush.msra.mxu0 0.0
        %3713 = vmatpush.msra.mxu0 0.0
        %3714 = vmatpush.msra.mxu0 0.0
        %3715 = vmatpush.msra.mxu0 0.0
        %3716 = vmatpush.msra.mxu0 0.0
        %3717 = vmatpush.msra.mxu0 0.0
        %3718 = vmatpush.msra.mxu0 0.0
        %3719 = vmatpush.msra.mxu0 0.0
        %3720 = vmatpush.msra.mxu0 0.0
        %3721 = vmatpush.msra.mxu0 0.0
        %3722 = vmatpush.msra.mxu0 0.0
        %3723 = vmatpush.msra.mxu0 0.0
        %3724 = vmatpush.msra.mxu0 %v467
        %3725 = vmatmul.f32.gmra.mxu0 %v3687
        %v3726 = vpop.f32.mrf.mxu0
        %v3727 = vadd.f32 %v3564, %v3726
        %3728 = vdwg.mxu0
        %3729 = vmatpush.msra.mxu0 0.0
        %3730 = vmatpush.msra.mxu0 0.0
        %3731 = vmatpush.msra.mxu0 0.0
        %3732 = vmatpush.msra.mxu0 0.0
        %3733 = vmatpush.msra.mxu0 0.0
        %3734 = vmatpush.msra.mxu0 0.0
        %3735 = vmatpush.msra.mxu0 0.0
        %3736 = vmatpush.msra.mxu0 0.0
        %3737 = vmatpush.msra.mxu0 0.0
        %3738 = vmatpush.msra.mxu0 0.0
        %3739 = vmatpush.msra.mxu0 0.0
        %3740 = vmatpush.msra.mxu0 0.0
        %3741 = vmatpush.msra.mxu0 0.0
        %3742 = vmatpush.msra.mxu0 0.0
        %3743 = vmatpush.msra.mxu0 0.0
        %3744 = vmatpush.msra.mxu0 %v470
        %3745 = vmatmul.f32.gmra.mxu0 %v3687
        %v3746 = vpop.f32.mrf.mxu0
        %v3747 = vadd.f32 %v3584, %v3746
        %3748 = vdwg.mxu0
        %3749 = vmatpush.msra.mxu0 0.0
        %3750 = vmatpush.msra.mxu0 0.0
        %3751 = vmatpush.msra.mxu0 0.0
        %3752 = vmatpush.msra.mxu0 0.0
        %3753 = vmatpush.msra.mxu0 0.0
        %3754 = vmatpush.msra.mxu0 0.0
        %3755 = vmatpush.msra.mxu0 0.0
        %3756 = vmatpush.msra.mxu0 0.0
        %3757 = vmatpush.msra.mxu0 0.0
        %3758 = vmatpush.msra.mxu0 0.0
        %3759 = vmatpush.msra.mxu0 0.0
        %3760 = vmatpush.msra.mxu0 0.0
        %3761 = vmatpush.msra.mxu0 0.0
        %3762 = vmatpush.msra.mxu0 0.0
        %3763 = vmatpush.msra.mxu0 0.0
        %3764 = vmatpush.msra.mxu0 %v473
        %3765 = vmatmul.f32.gmra.mxu0 %v3687
        %v3766 = vpop.f32.mrf.mxu0
        %v3767 = vadd.f32 %v3604, %v3766
        %3768 = vdwg.mxu0
        %3769 = vmatpush.msra.mxu0 0.0
        %3770 = vmatpush.msra.mxu0 0.0
        %3771 = vmatpush.msra.mxu0 0.0
        %3772 = vmatpush.msra.mxu0 0.0
        %3773 = vmatpush.msra.mxu0 0.0
        %3774 = vmatpush.msra.mxu0 0.0
        %3775 = vmatpush.msra.mxu0 0.0
        %3776 = vmatpush.msra.mxu0 0.0
        %3777 = vmatpush.msra.mxu0 0.0
        %3778 = vmatpush.msra.mxu0 0.0
        %3779 = vmatpush.msra.mxu0 0.0
        %3780 = vmatpush.msra.mxu0 0.0
        %3781 = vmatpush.msra.mxu0 0.0
        %3782 = vmatpush.msra.mxu0 0.0
        %3783 = vmatpush.msra.mxu0 0.0
        %3784 = vmatpush.msra.mxu0 %v476
        %3785 = vmatmul.f32.gmra.mxu0 %v3687
        %v3786 = vpop.f32.mrf.mxu0
        %v3787 = vadd.f32 %v3624, %v3786
        %3788 = vdwg.mxu0
        %3789 = vmatpush.msra.mxu0 0.0
        %3790 = vmatpush.msra.mxu0 0.0
        %3791 = vmatpush.msra.mxu0 0.0
        %3792 = vmatpush.msra.mxu0 0.0
        %3793 = vmatpush.msra.mxu0 0.0
        %3794 = vmatpush.msra.mxu0 0.0
        %3795 = vmatpush.msra.mxu0 0.0
        %3796 = vmatpush.msra.mxu0 0.0
        %3797 = vmatpush.msra.mxu0 0.0
        %3798 = vmatpush.msra.mxu0 0.0
        %3799 = vmatpush.msra.mxu0 0.0
        %3800 = vmatpush.msra.mxu0 0.0
        %3801 = vmatpush.msra.mxu0 0.0
        %3802 = vmatpush.msra.mxu0 0.0
        %3803 = vmatpush.msra.mxu0 0.0
        %3804 = vmatpush.msra.mxu0 %v479
        %3805 = vmatmul.f32.gmra.mxu0 %v3687
        %v3806 = vpop.f32.mrf.mxu0
        %v3807 = vadd.f32 %v3644, %v3806
        %3808 = vdwg.mxu0
        %3809 = vmatpush.msra.mxu0 0.0
        %3810 = vmatpush.msra.mxu0 0.0
        %3811 = vmatpush.msra.mxu0 0.0
        %3812 = vmatpush.msra.mxu0 0.0
        %3813 = vmatpush.msra.mxu0 0.0
        %3814 = vmatpush.msra.mxu0 0.0
        %3815 = vmatpush.msra.mxu0 0.0
        %3816 = vmatpush.msra.mxu0 0.0
        %3817 = vmatpush.msra.mxu0 0.0
        %3818 = vmatpush.msra.mxu0 0.0
        %3819 = vmatpush.msra.mxu0 0.0
        %3820 = vmatpush.msra.mxu0 0.0
        %3821 = vmatpush.msra.mxu0 0.0
        %3822 = vmatpush.msra.mxu0 0.0
        %3823 = vmatpush.msra.mxu0 0.0
        %3824 = vmatpush.msra.mxu0 %v482
        %3825 = vmatmul.f32.gmra.mxu0 %v3687
        %v3826 = vpop.f32.mrf.mxu0
        %v3827 = vadd.f32 %v3664, %v3826
        %3828 = vdwg.mxu0
        %3829 = vmatpush.msra.mxu0 0.0
        %3830 = vmatpush.msra.mxu0 0.0
        %3831 = vmatpush.msra.mxu0 0.0
        %3832 = vmatpush.msra.mxu0 0.0
        %3833 = vmatpush.msra.mxu0 0.0
        %3834 = vmatpush.msra.mxu0 0.0
        %3835 = vmatpush.msra.mxu0 0.0
        %3836 = vmatpush.msra.mxu0 0.0
        %3837 = vmatpush.msra.mxu0 0.0
        %3838 = vmatpush.msra.mxu0 0.0
        %3839 = vmatpush.msra.mxu0 0.0
        %3840 = vmatpush.msra.mxu0 0.0
        %3841 = vmatpush.msra.mxu0 0.0
        %3842 = vmatpush.msra.mxu0 0.0
        %3843 = vmatpush.msra.mxu0 0.0
        %3844 = vmatpush.msra.mxu0 %v485
        %3845 = vmatmul.f32.gmra.mxu0 %v3687
        %v3846 = vpop.f32.mrf.mxu0
        %v3847 = vadd.f32 %v3684, %v3846
        %3848 = vdwg.mxu0
        %s3849 = scalar_lea.vmem %s9, 64
        %v3850 = vld [vmem:[%s3849] sm:$0xff]
        %v3851 = vld [vmem:[%s3849 + $0x8] sm:$0xff]
        %v3852 = vld [vmem:[%s3849 + $0x10] sm:$0xff]
        %v3853 = vld [vmem:[%s3849 + $0x18] sm:$0xff]
        %3858 = vst [vmem:[#allocation1] ss:$2 sm:$0xff] %v3850
        %s3859 = scalar_lea.vmem [#allocation1], 16
        %3860 = vst [vmem:[%s3859] ss:$2 sm:$0xff] %v3851
        %s3861 = scalar_lea.vmem [#allocation1], 32
        %3862 = vst [vmem:[%s3861] ss:$2 sm:$0xff] %v3852
        %s3863 = scalar_lea.vmem [#allocation1], 48
        %3864 = vst [vmem:[%s3863] ss:$2 sm:$0xff] %v3853
        %v3865 = vld.sshfl [vmem:[#allocation1] sm:$0xff pattern:$0x75316420]
        %v3866 = vld.sshfl [vmem:[#allocation1 + $0x8] sm:$0xff pattern:$0x75316420]
        %v3867 = vld.sshfl [vmem:[#allocation1 + $0x10] sm:$0xff pattern:$0x75316420]
        %v3868 = vld.sshfl [vmem:[#allocation1 + $0x18] sm:$0xff pattern:$0x75316420]
        %v3869 = vld.sshfl [vmem:[#allocation1 + $0x20] sm:$0xff pattern:$0x75316420]
        %v3870 = vld.sshfl [vmem:[#allocation1 + $0x28] sm:$0xff pattern:$0x75316420]
        %v3871 = vld.sshfl [vmem:[#allocation1 + $0x30] sm:$0xff pattern:$0x75316420]
        %v3872 = vld.sshfl [vmem:[#allocation1 + $0x38] sm:$0xff pattern:$0x75316420]
        %v3881 = vmul.f32 %v3707, %v3865
        %v3882 = vmul.f32 %v3727, %v3866
        %v3883 = vmul.f32 %v3747, %v3867
        %v3884 = vmul.f32 %v3767, %v3868
        %v3885 = vmul.f32 %v3787, %v3869
        %v3886 = vmul.f32 %v3807, %v3870
        %v3887 = vmul.f32 %v3827, %v3871
        %v3888 = vmul.f32 %v3847, %v3872
        %s3889 = scalar_lea.vmem %s10, 8
        %v3890 = vld [vmem:[%s3889] sm:$0xf]
        %3892 = vset.pattern.permute.xlu0 0
        %3893 = vperm.xlu0 %3892, %v3890
        %v3894 = vpop.permute.xlu0 %3893
        %v3896 = vsub.f32 %v3881, %v3894
        %v3897 = vsub.f32 %v3882, %v3894
        %v3898 = vsub.f32 %v3883, %v3894
        %v3899 = vsub.f32 %v3884, %v3894
        %v3900 = vsub.f32 %v3885, %v3894
        %v3901 = vsub.f32 %v3886, %v3894
        %v3902 = vsub.f32 %v3887, %v3894
        %v3903 = vsub.f32 %v3888, %v3894
        %v3904 = vmul.f32 %v3896, 0.5
        %v3905 = vmul.f32 %v3897, 0.5
        %v3906 = vmul.f32 %v3898, 0.5
        %v3907 = vmul.f32 %v3899, 0.5
        %v3908 = vmul.f32 %v3900, 0.5
        %v3909 = vmul.f32 %v3901, 0.5
        %v3910 = vmul.f32 %v3902, 0.5
        %v3911 = vmul.f32 %v3903, 0.5
        %v3912 = vadd.f32 %v3904, 0.5
        %v3913 = vadd.f32 %v3905, 0.5
        %v3914 = vadd.f32 %v3906, 0.5
        %v3915 = vadd.f32 %v3907, 0.5
        %v3916 = vadd.f32 %v3908, 0.5
        %v3917 = vadd.f32 %v3909, 0.5
        %v3918 = vadd.f32 %v3910, 0.5
        %v3919 = vadd.f32 %v3911, 0.5
        %v3920 = vmax.f32 %v3912, 0.0
        %v3921 = vmax.f32 %v3913, 0.0
        %v3922 = vmax.f32 %v3914, 0.0
        %v3923 = vmax.f32 %v3915, 0.0
        %v3924 = vmax.f32 %v3916, 0.0
        %v3925 = vmax.f32 %v3917, 0.0
        %v3926 = vmax.f32 %v3918, 0.0
        %v3927 = vmax.f32 %v3919, 0.0
        %v3928 = vmin.f32 %v3920, 1.0
        %v3929 = vmin.f32 %v3921, 1.0
        %v3930 = vmin.f32 %v3922, 1.0
        %v3931 = vmin.f32 %v3923, 1.0
        %v3932 = vmin.f32 %v3924, 1.0
        %v3933 = vmin.f32 %v3925, 1.0
        %v3934 = vmin.f32 %v3926, 1.0
        %v3935 = vmin.f32 %v3927, 1.0
        %v3944 = vrot.slane %v3929, 7
        %v3945 = vrot.slane %v3930, 6
        %v3946 = vrot.slane %v3931, 5
        %v3947 = vrot.slane %v3932, 4
        %v3948 = vrot.slane %v3933, 3
        %v3949 = vrot.slane %v3934, 2
        %v3950 = vrot.slane %v3935, 1
        %v3951 = vsel %vm747, %v3928, %v3944
        %v3952 = vsel %vm749, %v3945, %v3946
        %v3953 = vsel %vm751, %v3951, %v3952
        %v3954 = vsel %vm753, %v3947, %v3948
        %v3955 = vsel %vm755, %v3949, %v3950
        %v3956 = vsel %vm757, %v3954, %v3955
        %v3957 = vsel %vm759, %v3953, %v3956
        %v3958 = vsel %vm761, %v3928, %v3944
        %v3959 = vsel %vm763, %v3945, %v3946
        %v3960 = vsel %vm765, %v3958, %v3959
        %v3961 = vsel %vm767, %v3947, %v3948
        %v3962 = vsel %vm769, %v3950, %v3949
        %v3963 = vsel %vm771, %v3961, %v3962
        %v3964 = vsel %vm773, %v3960, %v3963
        %v3965 = vrot.slane %v3964, 1
        %v3966 = vsel %vm749, %v3928, %v3944
        %v3967 = vsel %vm753, %v3945, %v3946
        %v3968 = vsel %vm778, %v3966, %v3967
        %v3969 = vsel %vm755, %v3947, %v3948
        %v3970 = vsel %vm747, %v3949, %v3950
        %v3971 = vsel %vm462, %v3970, %v3969
        %v3972 = vsel %vm783, %v3968, %v3971
        %v3973 = vrot.slane %v3972, 2
        %v3974 = vsel %vm763, %v3928, %v3944
        %v3975 = vsel %vm767, %v3945, %v3946
        %v3976 = vsel %vm788, %v3974, %v3975
        %v3977 = vsel %vm769, %v3948, %v3947
        %v3978 = vsel %vm761, %v3949, %v3950
        %v3979 = vsel %vm792, %v3978, %v3977
        %v3980 = vsel %vm794, %v3976, %v3979
        %v3981 = vrot.slane %v3980, 3
        %v3982 = vperm.slane %v3957, 0
        %v3983 = vperm.slane %v3957, 1
        %v3984 = vperm.slane %v3957, 2
        %v3985 = vperm.slane %v3957, 3
        %v3986 = vperm.slane %v3957, 4
        %v3987 = vperm.slane %v3957, 5
        %v3988 = vperm.slane %v3957, 6
        %v3989 = vperm.slane %v3957, 7
        %v3990 = vperm.slane %v3965, 0
        %v3991 = vperm.slane %v3965, 1
        %v3992 = vperm.slane %v3965, 2
        %v3993 = vperm.slane %v3965, 3
        %v3994 = vperm.slane %v3965, 4
        %v3995 = vperm.slane %v3965, 5
        %v3996 = vperm.slane %v3965, 6
        %v3997 = vperm.slane %v3965, 7
        %v3998 = vperm.slane %v3973, 0
        %v3999 = vperm.slane %v3973, 1
        %v4000 = vperm.slane %v3973, 2
        %v4001 = vperm.slane %v3973, 3
        %v4002 = vperm.slane %v3973, 4
        %v4003 = vperm.slane %v3973, 5
        %v4004 = vperm.slane %v3973, 6
        %v4005 = vperm.slane %v3973, 7
        %v4006 = vperm.slane %v3981, 0
        %v4007 = vperm.slane %v3981, 1
        %v4008 = vperm.slane %v3981, 2
        %v4009 = vperm.slane %v3981, 3
        %v4010 = vperm.slane %v3981, 4
        %v4011 = vperm.slane %v3981, 5
        %v4012 = vperm.slane %v3981, 6
        %v4013 = vperm.slane %v3981, 7
        %v4046 = vmul.f32 %v1736, %v3982
        %v4047 = vmul.f32 %v1736, %v3983
        %v4048 = vmul.f32 %v1736, %v3984
        %v4049 = vmul.f32 %v1736, %v3985
        %v4050 = vmul.f32 %v1736, %v3986
        %v4051 = vmul.f32 %v1736, %v3987
        %v4052 = vmul.f32 %v1736, %v3988
        %v4053 = vmul.f32 %v1736, %v3989
        %v4054 = vmul.f32 %v1736, %v3990
        %v4055 = vmul.f32 %v1736, %v3991
        %v4056 = vmul.f32 %v1736, %v3992
        %v4057 = vmul.f32 %v1736, %v3993
        %v4058 = vmul.f32 %v1736, %v3994
        %v4059 = vmul.f32 %v1736, %v3995
        %v4060 = vmul.f32 %v1736, %v3996
        %v4061 = vmul.f32 %v1736, %v3997
        %v4062 = vmul.f32 %v1736, %v3998
        %v4063 = vmul.f32 %v1736, %v3999
        %v4064 = vmul.f32 %v1736, %v4000
        %v4065 = vmul.f32 %v1736, %v4001
        %v4066 = vmul.f32 %v1736, %v4002
        %v4067 = vmul.f32 %v1736, %v4003
        %v4068 = vmul.f32 %v1736, %v4004
        %v4069 = vmul.f32 %v1736, %v4005
        %v4070 = vmul.f32 %v1736, %v4006
        %v4071 = vmul.f32 %v1736, %v4007
        %v4072 = vmul.f32 %v1736, %v4008
        %v4073 = vmul.f32 %v1736, %v4009
        %v4074 = vmul.f32 %v1736, %v4010
        %v4075 = vmul.f32 %v1736, %v4011
        %v4076 = vmul.f32 %v1736, %v4012
        %v4077 = vmul.f32 %v1736, %v4013
        %v4078 = vadd.f32 %v1837, %v4046
        %v4079 = vadd.f32 %v1837, %v4047
        %v4080 = vadd.f32 %v1837, %v4048
        %v4081 = vadd.f32 %v1837, %v4049
        %v4082 = vadd.f32 %v1837, %v4050
        %v4083 = vadd.f32 %v1837, %v4051
        %v4084 = vadd.f32 %v1837, %v4052
        %v4085 = vadd.f32 %v1837, %v4053
        %v4086 = vadd.f32 %v1837, %v4054
        %v4087 = vadd.f32 %v1837, %v4055
        %v4088 = vadd.f32 %v1837, %v4056
        %v4089 = vadd.f32 %v1837, %v4057
        %v4090 = vadd.f32 %v1837, %v4058
        %v4091 = vadd.f32 %v1837, %v4059
        %v4092 = vadd.f32 %v1837, %v4060
        %v4093 = vadd.f32 %v1837, %v4061
        %v4094 = vadd.f32 %v1837, %v4062
        %v4095 = vadd.f32 %v1837, %v4063
        %v4096 = vadd.f32 %v1837, %v4064
        %v4097 = vadd.f32 %v1837, %v4065
        %v4098 = vadd.f32 %v1837, %v4066
        %v4099 = vadd.f32 %v1837, %v4067
        %v4100 = vadd.f32 %v1837, %v4068
        %v4101 = vadd.f32 %v1837, %v4069
        %v4102 = vadd.f32 %v1837, %v4070
        %v4103 = vadd.f32 %v1837, %v4071
        %v4104 = vadd.f32 %v1837, %v4072
        %v4105 = vadd.f32 %v1837, %v4073
        %v4106 = vadd.f32 %v1837, %v4074
        %v4107 = vadd.f32 %v1837, %v4075
        %v4108 = vadd.f32 %v1837, %v4076
        %v4109 = vadd.f32 %v1837, %v4077
        %v4110 = vmul.f32 %v3487, %v4078
        %v4111 = vmul.f32 %v3488, %v4079
        %v4112 = vmul.f32 %v3489, %v4080
        %v4113 = vmul.f32 %v3490, %v4081
        %v4114 = vmul.f32 %v3491, %v4082
        %v4115 = vmul.f32 %v3492, %v4083
        %v4116 = vmul.f32 %v3493, %v4084
        %v4117 = vmul.f32 %v3494, %v4085
        %v4118 = vmul.f32 %v3495, %v4086
        %v4119 = vmul.f32 %v3496, %v4087
        %v4120 = vmul.f32 %v3497, %v4088
        %v4121 = vmul.f32 %v3498, %v4089
        %v4122 = vmul.f32 %v3499, %v4090
        %v4123 = vmul.f32 %v3500, %v4091
        %v4124 = vmul.f32 %v3501, %v4092
        %v4125 = vmul.f32 %v3502, %v4093
        %v4126 = vmul.f32 %v3503, %v4094
        %v4127 = vmul.f32 %v3504, %v4095
        %v4128 = vmul.f32 %v3505, %v4096
        %v4129 = vmul.f32 %v3506, %v4097
        %v4130 = vmul.f32 %v3507, %v4098
        %v4131 = vmul.f32 %v3508, %v4099
        %v4132 = vmul.f32 %v3509, %v4100
        %v4133 = vmul.f32 %v3510, %v4101
        %v4134 = vmul.f32 %v3511, %v4102
        %v4135 = vmul.f32 %v3512, %v4103
        %v4136 = vmul.f32 %v3513, %v4104
        %v4137 = vmul.f32 %v3514, %v4105
        %v4138 = vmul.f32 %v3515, %v4106
        %v4139 = vmul.f32 %v3516, %v4107
        %v4140 = vmul.f32 %v3517, %v4108
        %v4141 = vmul.f32 %v3518, %v4109
        %v4142 = vrot.slane %v4110, 4
        %v4143 = vadd.f32 %v4110, %v4142
        %v4144 = vrot.slane %v4143, 2
        %v4145 = vadd.f32 %v4143, %v4144
        %v4146 = vrot.slane %v4145, 1
        %v4147 = vadd.f32 %v4145, %v4146
        %v4148 = vrot.slane %v4111, 4
        %v4149 = vadd.f32 %v4111, %v4148
        %v4150 = vrot.slane %v4149, 2
        %v4151 = vadd.f32 %v4149, %v4150
        %v4152 = vrot.slane %v4151, 1
        %v4153 = vadd.f32 %v4151, %v4152
        %v4154 = vrot.slane %v4112, 4
        %v4155 = vadd.f32 %v4112, %v4154
        %v4156 = vrot.slane %v4155, 2
        %v4157 = vadd.f32 %v4155, %v4156
        %v4158 = vrot.slane %v4157, 1
        %v4159 = vadd.f32 %v4157, %v4158
        %v4160 = vrot.slane %v4113, 4
        %v4161 = vadd.f32 %v4113, %v4160
        %v4162 = vrot.slane %v4161, 2
        %v4163 = vadd.f32 %v4161, %v4162
        %v4164 = vrot.slane %v4163, 1
        %v4165 = vadd.f32 %v4163, %v4164
        %v4166 = vrot.slane %v4114, 4
        %v4167 = vadd.f32 %v4114, %v4166
        %v4168 = vrot.slane %v4167, 2
        %v4169 = vadd.f32 %v4167, %v4168
        %v4170 = vrot.slane %v4169, 1
        %v4171 = vadd.f32 %v4169, %v4170
        %v4172 = vrot.slane %v4115, 4
        %v4173 = vadd.f32 %v4115, %v4172
        %v4174 = vrot.slane %v4173, 2
        %v4175 = vadd.f32 %v4173, %v4174
        %v4176 = vrot.slane %v4175, 1
        %v4177 = vadd.f32 %v4175, %v4176
        %v4178 = vrot.slane %v4116, 4
        %v4179 = vadd.f32 %v4116, %v4178
        %v4180 = vrot.slane %v4179, 2
        %v4181 = vadd.f32 %v4179, %v4180
        %v4182 = vrot.slane %v4181, 1
        %v4183 = vadd.f32 %v4181, %v4182
        %v4184 = vrot.slane %v4117, 4
        %v4185 = vadd.f32 %v4117, %v4184
        %v4186 = vrot.slane %v4185, 2
        %v4187 = vadd.f32 %v4185, %v4186
        %v4188 = vrot.slane %v4187, 1
        %v4189 = vadd.f32 %v4187, %v4188
        %v4190 = vrot.slane %v4118, 4
        %v4191 = vadd.f32 %v4118, %v4190
        %v4192 = vrot.slane %v4191, 2
        %v4193 = vadd.f32 %v4191, %v4192
        %v4194 = vrot.slane %v4193, 1
        %v4195 = vadd.f32 %v4193, %v4194
        %v4196 = vrot.slane %v4119, 4
        %v4197 = vadd.f32 %v4119, %v4196
        %v4198 = vrot.slane %v4197, 2
        %v4199 = vadd.f32 %v4197, %v4198
        %v4200 = vrot.slane %v4199, 1
        %v4201 = vadd.f32 %v4199, %v4200
        %v4202 = vrot.slane %v4120, 4
        %v4203 = vadd.f32 %v4120, %v4202
        %v4204 = vrot.slane %v4203, 2
        %v4205 = vadd.f32 %v4203, %v4204
        %v4206 = vrot.slane %v4205, 1
        %v4207 = vadd.f32 %v4205, %v4206
        %v4208 = vrot.slane %v4121, 4
        %v4209 = vadd.f32 %v4121, %v4208
        %v4210 = vrot.slane %v4209, 2
        %v4211 = vadd.f32 %v4209, %v4210
        %v4212 = vrot.slane %v4211, 1
        %v4213 = vadd.f32 %v4211, %v4212
        %v4214 = vrot.slane %v4122, 4
        %v4215 = vadd.f32 %v4122, %v4214
        %v4216 = vrot.slane %v4215, 2
        %v4217 = vadd.f32 %v4215, %v4216
        %v4218 = vrot.slane %v4217, 1
        %v4219 = vadd.f32 %v4217, %v4218
        %v4220 = vrot.slane %v4123, 4
        %v4221 = vadd.f32 %v4123, %v4220
        %v4222 = vrot.slane %v4221, 2
        %v4223 = vadd.f32 %v4221, %v4222
        %v4224 = vrot.slane %v4223, 1
        %v4225 = vadd.f32 %v4223, %v4224
        %v4226 = vrot.slane %v4124, 4
        %v4227 = vadd.f32 %v4124, %v4226
        %v4228 = vrot.slane %v4227, 2
        %v4229 = vadd.f32 %v4227, %v4228
        %v4230 = vrot.slane %v4229, 1
        %v4231 = vadd.f32 %v4229, %v4230
        %v4232 = vrot.slane %v4125, 4
        %v4233 = vadd.f32 %v4125, %v4232
        %v4234 = vrot.slane %v4233, 2
        %v4235 = vadd.f32 %v4233, %v4234
        %v4236 = vrot.slane %v4235, 1
        %v4237 = vadd.f32 %v4235, %v4236
        %v4238 = vrot.slane %v4126, 4
        %v4239 = vadd.f32 %v4126, %v4238
        %v4240 = vrot.slane %v4239, 2
        %v4241 = vadd.f32 %v4239, %v4240
        %v4242 = vrot.slane %v4241, 1
        %v4243 = vadd.f32 %v4241, %v4242
        %v4244 = vrot.slane %v4127, 4
        %v4245 = vadd.f32 %v4127, %v4244
        %v4246 = vrot.slane %v4245, 2
        %v4247 = vadd.f32 %v4245, %v4246
        %v4248 = vrot.slane %v4247, 1
        %v4249 = vadd.f32 %v4247, %v4248
        %v4250 = vrot.slane %v4128, 4
        %v4251 = vadd.f32 %v4128, %v4250
        %v4252 = vrot.slane %v4251, 2
        %v4253 = vadd.f32 %v4251, %v4252
        %v4254 = vrot.slane %v4253, 1
        %v4255 = vadd.f32 %v4253, %v4254
        %v4256 = vrot.slane %v4129, 4
        %v4257 = vadd.f32 %v4129, %v4256
        %v4258 = vrot.slane %v4257, 2
        %v4259 = vadd.f32 %v4257, %v4258
        %v4260 = vrot.slane %v4259, 1
        %v4261 = vadd.f32 %v4259, %v4260
        %v4262 = vrot.slane %v4130, 4
        %v4263 = vadd.f32 %v4130, %v4262
        %v4264 = vrot.slane %v4263, 2
        %v4265 = vadd.f32 %v4263, %v4264
        %v4266 = vrot.slane %v4265, 1
        %v4267 = vadd.f32 %v4265, %v4266
        %v4268 = vrot.slane %v4131, 4
        %v4269 = vadd.f32 %v4131, %v4268
        %v4270 = vrot.slane %v4269, 2
        %v4271 = vadd.f32 %v4269, %v4270
        %v4272 = vrot.slane %v4271, 1
        %v4273 = vadd.f32 %v4271, %v4272
        %v4274 = vrot.slane %v4132, 4
        %v4275 = vadd.f32 %v4132, %v4274
        %v4276 = vrot.slane %v4275, 2
        %v4277 = vadd.f32 %v4275, %v4276
        %v4278 = vrot.slane %v4277, 1
        %v4279 = vadd.f32 %v4277, %v4278
        %v4280 = vrot.slane %v4133, 4
        %v4281 = vadd.f32 %v4133, %v4280
        %v4282 = vrot.slane %v4281, 2
        %v4283 = vadd.f32 %v4281, %v4282
        %v4284 = vrot.slane %v4283, 1
        %v4285 = vadd.f32 %v4283, %v4284
        %v4286 = vrot.slane %v4134, 4
        %v4287 = vadd.f32 %v4134, %v4286
        %v4288 = vrot.slane %v4287, 2
        %v4289 = vadd.f32 %v4287, %v4288
        %v4290 = vrot.slane %v4289, 1
        %v4291 = vadd.f32 %v4289, %v4290
        %v4292 = vrot.slane %v4135, 4
        %v4293 = vadd.f32 %v4135, %v4292
        %v4294 = vrot.slane %v4293, 2
        %v4295 = vadd.f32 %v4293, %v4294
        %v4296 = vrot.slane %v4295, 1
        %v4297 = vadd.f32 %v4295, %v4296
        %v4298 = vrot.slane %v4136, 4
        %v4299 = vadd.f32 %v4136, %v4298
        %v4300 = vrot.slane %v4299, 2
        %v4301 = vadd.f32 %v4299, %v4300
        %v4302 = vrot.slane %v4301, 1
        %v4303 = vadd.f32 %v4301, %v4302
        %v4304 = vrot.slane %v4137, 4
        %v4305 = vadd.f32 %v4137, %v4304
        %v4306 = vrot.slane %v4305, 2
        %v4307 = vadd.f32 %v4305, %v4306
        %v4308 = vrot.slane %v4307, 1
        %v4309 = vadd.f32 %v4307, %v4308
        %v4310 = vrot.slane %v4138, 4
        %v4311 = vadd.f32 %v4138, %v4310
        %v4312 = vrot.slane %v4311, 2
        %v4313 = vadd.f32 %v4311, %v4312
        %v4314 = vrot.slane %v4313, 1
        %v4315 = vadd.f32 %v4313, %v4314
        %v4316 = vrot.slane %v4139, 4
        %v4317 = vadd.f32 %v4139, %v4316
        %v4318 = vrot.slane %v4317, 2
        %v4319 = vadd.f32 %v4317, %v4318
        %v4320 = vrot.slane %v4319, 1
        %v4321 = vadd.f32 %v4319, %v4320
        %v4322 = vrot.slane %v4140, 4
        %v4323 = vadd.f32 %v4140, %v4322
        %v4324 = vrot.slane %v4323, 2
        %v4325 = vadd.f32 %v4323, %v4324
        %v4326 = vrot.slane %v4325, 1
        %v4327 = vadd.f32 %v4325, %v4326
        %v4328 = vrot.slane %v4141, 4
        %v4329 = vadd.f32 %v4141, %v4328
        %v4330 = vrot.slane %v4329, 2
        %v4331 = vadd.f32 %v4329, %v4330
        %v4332 = vrot.slane %v4331, 1
        %v4333 = vadd.f32 %v4331, %v4332
        %v4366 = vrot.slane %v4153, 4
        %v4367 = vrot.slane %v4165, 4
        %v4368 = vrot.slane %v4177, 4
        %v4369 = vrot.slane %v4189, 4
        %v4370 = vrot.slane %v4201, 4
        %v4371 = vrot.slane %v4213, 4
        %v4372 = vrot.slane %v4225, 4
        %v4373 = vrot.slane %v4237, 4
        %v4374 = vrot.slane %v4249, 4
        %v4375 = vrot.slane %v4261, 4
        %v4376 = vrot.slane %v4273, 4
        %v4377 = vrot.slane %v4285, 4
        %v4378 = vrot.slane %v4297, 4
        %v4379 = vrot.slane %v4309, 4
        %v4380 = vrot.slane %v4321, 4
        %v4381 = vrot.slane %v4333, 4
        %v4382 = vsel %vm759, %v4147, %v4366
        %v4383 = vsel %vm759, %v4159, %v4367
        %v4384 = vsel %vm759, %v4171, %v4368
        %v4385 = vsel %vm759, %v4183, %v4369
        %v4386 = vsel %vm759, %v4195, %v4370
        %v4387 = vsel %vm759, %v4207, %v4371
        %v4388 = vsel %vm759, %v4219, %v4372
        %v4389 = vsel %vm759, %v4231, %v4373
        %v4390 = vsel %vm759, %v4243, %v4374
        %v4391 = vsel %vm759, %v4255, %v4375
        %v4392 = vsel %vm759, %v4267, %v4376
        %v4393 = vsel %vm759, %v4279, %v4377
        %v4394 = vsel %vm759, %v4291, %v4378
        %v4395 = vsel %vm759, %v4303, %v4379
        %v4396 = vsel %vm759, %v4315, %v4380
        %v4397 = vsel %vm759, %v4327, %v4381
        %v4398 = vrot.slane %v4386, 7
        %v4399 = vsel %vm761, %v4398, %v4382
        %v4400 = vsel %vm767, %v4398, %v4399
        %v4401 = vrot.slane %v4390, 6
        %v4402 = vsel %vm749, %v4401, %v4400
        %v4403 = vsel %vm755, %v4401, %v4402
        %v4404 = vrot.slane %v4394, 5
        %v4405 = vsel %vm763, %v4404, %v4403
        %v4406 = vsel %vm2167, %v4404, %v4405
        %v4407 = vrot.slane %v4387, 7
        %v4408 = vsel %vm761, %v4407, %v4383
        %v4409 = vsel %vm767, %v4407, %v4408
        %v4410 = vrot.slane %v4391, 6
        %v4411 = vsel %vm749, %v4410, %v4409
        %v4412 = vsel %vm755, %v4410, %v4411
        %v4413 = vrot.slane %v4395, 5
        %v4414 = vsel %vm763, %v4413, %v4412
        %v4415 = vsel %vm2167, %v4413, %v4414
        %v4416 = vrot.slane %v4388, 7
        %v4417 = vsel %vm761, %v4416, %v4384
        %v4418 = vsel %vm767, %v4416, %v4417
        %v4419 = vrot.slane %v4392, 6
        %v4420 = vsel %vm749, %v4419, %v4418
        %v4421 = vsel %vm755, %v4419, %v4420
        %v4422 = vrot.slane %v4396, 5
        %v4423 = vsel %vm763, %v4422, %v4421
        %v4424 = vsel %vm2167, %v4422, %v4423
        %v4425 = vrot.slane %v4389, 7
        %v4426 = vsel %vm761, %v4425, %v4385
        %v4427 = vsel %vm767, %v4425, %v4426
        %v4428 = vrot.slane %v4393, 6
        %v4429 = vsel %vm749, %v4428, %v4427
        %v4430 = vsel %vm755, %v4428, %v4429
        %v4431 = vrot.slane %v4397, 5
        %v4432 = vsel %vm763, %v4431, %v4430
        %v4433 = vsel %vm2167, %v4431, %v4432
        %s4438 = scalar_lea.vmem %s403, 32 [#allocation2]
        %4439 = vst [vmem:[%s4438] sm:$0xff] %v4406
        %4440 = vst [vmem:[%s4438 + $0x8] sm:$0xff] %v4415
        %4441 = vst [vmem:[%s4438 + $0x10] sm:$0xff] %v4424
        %4442 = vst [vmem:[%s4438 + $0x18] sm:$0xff] %v4433
        %s4443 = sand.u32 %s288, 1
        %s4444 = sand.u32 %s288, 1
        %s4445 = smul.addr %s4444, 64
        %s4446 = scalar_lea.vmem [#allocation2], %s4445
        // Predicated region
        $region69: #{forward.1} parent=67 // pred_check
          %p4447 = pneg %p298
        $region70: #{forward.1} parent=67 // pred_check_branch
          %4449 = sbr.rel (%p4447) target = $region72
        $region71: #{forward.1} parent=67 // pred_region
          %s4450 = smul.u32 8, %s23
          %s4451 = smul.addr %s4450, 4
          %s4452 = scalar_lea.vmem %s12, %s4451
          // Predicated region
          $region73: #{forward.1} parent=71 // pred_check
            _
          $region74: #{forward.1} parent=71 // pred_check_branch
            %4454 = sbr.rel (0) target = $region76
          $region75: #{forward.1} parent=71 // pred_region
            // Predicated region
            $region77: #{forward.1} parent=75 // pred_check
              _
            $region78: #{forward.1} parent=75 // pred_check_branch
              %4456 = sbr.rel (0) target = $region80
            $region79: #{forward.1} parent=75 // pred_region
              loop: start=0, step=1, limit=1
              $region81: #{forward.1} parent=79 // loop_pre_header
                _
              $region82: #{forward.1} parent=79 // loop_header
                %s4458 = sphi 0, %s4462
                %p4459 = scmp.ge.s32.totalorder %s4458, 1
                %s4463 = sphi %s4446, %s4446
                %s4464 = sphi %s4452, %s4452
              $region83: #{forward.1} parent=79 // loop_header_branch
                %4461 = sbr.rel (%p4459) target = $region87
              $region84: #{forward.1} parent=79 // loop_body
                %v4465 = vld [vmem:[%s4463] sm:$0xff]
                %4466 = vst [vmem:[%s4464] sm:$0xff] %v4465
                %v4467 = vld [vmem:[%s4463 + $0x8] sm:$0xff]
                %4468 = vst [vmem:[%s4464 + $0x8] sm:$0xff] %v4467
                %v4469 = vld [vmem:[%s4463 + $0x10] sm:$0xff]
                %4470 = vst [vmem:[%s4464 + $0x10] sm:$0xff] %v4469
                %v4471 = vld [vmem:[%s4463 + $0x18] sm:$0xff]
                %4472 = vst [vmem:[%s4464 + $0x18] sm:$0xff] %v4471
                %v4473 = vld [vmem:[%s4463 + $0x20] sm:$0xff]
                %4474 = vst [vmem:[%s4464 + $0x40] sm:$0xff] %v4473
                %v4475 = vld [vmem:[%s4463 + $0x28] sm:$0xff]
                %4476 = vst [vmem:[%s4464 + $0x48] sm:$0xff] %v4475
                %v4477 = vld [vmem:[%s4463 + $0x30] sm:$0xff]
                %4478 = vst [vmem:[%s4464 + $0x50] sm:$0xff] %v4477
                %v4479 = vld [vmem:[%s4463 + $0x38] sm:$0xff]
                %4480 = vst [vmem:[%s4464 + $0x58] sm:$0xff] %v4479
              $region85: #{forward.1} parent=79 // loop_footer
                %s4462 = sadd.s32 1, %s4458
              $region86: #{forward.1} parent=79 // loop_footer_branch
                %4457 = sbr.rel target = $region82
              $region87: #{forward.1} parent=79 // loop_exit
                _
            $region80: #{forward.1} parent=75 // pred_fallthru
              _
            // Predicated region
            $region88: #{forward.1} parent=75 // pred_check
              _
            $region89: #{forward.1} parent=75 // pred_check_branch
              %4482 = sbr.rel target = $region91
            $region90: #{forward.1} parent=75 // pred_region
              _
            $region91: #{forward.1} parent=75 // pred_fallthru
              _
          $region76: #{forward.1} parent=71 // pred_fallthru
            _
          %4483 = vnop
        $region72: #{forward.1} parent=67 // pred_fallthru
          _
      $region68: #{forward.1} parent=5 // pred_fallthru
        _
      %p4484 = scmp.le.s32.totalorder 2, %s18
      // Predicated region
      $region92: #{forward.1} parent=5 // pred_check
        %p4485 = pneg %p4484
      $region93: #{forward.1} parent=5 // pred_check_branch
        %4487 = sbr.rel (%p4485) target = $region95
      $region94: #{forward.1} parent=5 // pred_region
        %s4488 = ssub.s32 %s18, 2
        // Predicated region
        $region96: #{forward.1} parent=94 // pred_check
          %p4489 = pneg %p304
        $region97: #{forward.1} parent=94 // pred_check_branch
          %4491 = sbr.rel (%p4489) target = $region99
        $region98: #{forward.1} parent=94 // pred_region
          %s4492 = sand.u32 %s289, 1
          %s4493 = sand.u32 %s289, 1
          %s4494 = smul.addr %s4493, 64
          %s4495 = scalar_lea.vmem [#allocation2], %s4494
        $region99: #{forward.1} parent=94 // pred_fallthru
          _
      $region95: #{forward.1} parent=5 // pred_fallthru
        _
    $region6: #{forward.1} parent=1 // loop_footer
      %s22 = sadd.s32 1, %s18
    $region7: #{forward.1} parent=1 // loop_footer_branch
      %17 = sbr.rel target = $region3
    $region8: #{forward.1} parent=1 // loop_exit
      _

</llo_original>
